<compile_context>
chip_gen: v6e
topology: v6e:2x2x1
jax: 0.10.0
libtpu: 0.0.40
codegen_flags: <defaults>
</compile_context>

<pallas_src>
import jax
import jax.numpy as jnp
from jax import lax
from jax.experimental import pallas as pl
from jax.experimental.pallas import tpu as pltpu


def _round_up(x, m):
    return (x + m - 1) // m * m


def gru_predict_kernel(x_ref,      # [TBN, S*D]   natural row-major input tile
                       wbig_ref,   # [S*3H, S*D]  block-diag fused input weights (r|z|n per step)
                       bxs_ref,    # [S*3H, 1]    per-step [b_ir+b_hr | b_iz+b_hz | b_in]
                       whh_ref,    # [3H, H]      fused hidden weights (r|z|n)
                       bhn_ref,    # [H, 1]       b_hn (stays inside r*(...))
                       wc_ref,     # [P_pad, S*H] fused predictor_1 ∘ predictor_2
                       bc_ref,     # [P_pad, 1]
                       out_ref,    # [P_pad, TBN] lane-dense output tile
                       xproj_ref,  # VMEM scratch [S*3H, TBN]
                       hs_ref):    # VMEM scratch [S*H, TBN]
    TBN = x_ref.shape[0]
    H = whh_ref.shape[1]
    G = whh_ref.shape[0]          # 3H
    S = hs_ref.shape[0] // H

    # ---- hoisted input projection for all steps: one matmul, K = S*D ------
    # Contract on the last dim of both operands so the batch tile lands on
    # lanes of the result; the [TBN, S*D] -> lanes re-orientation is absorbed
    # here (no wrapper-side HBM transpose).  Result + biases goes to an
    # explicit VMEM scratch so nothing large stays live across the loop.
    x32 = x_ref[...].astype(jnp.float32)                         # [TBN, S*D]
    xproj_ref[...] = lax.dot_general(
        wbig_ref[...], x32,
        dimension_numbers=(((1,), (1,)), ((), ())),
        preferred_element_type=jnp.float32) + bxs_ref[...]       # [S*3H, TBN]

    # hoist the lane-broadcast of b_hn out of the loop (broadcasts aren't CSE'd)
    bhn_b = jnp.broadcast_to(bhn_ref[...], (H, TBN))

    # ---- serial GRU recurrence: one fused hidden matmul per step ----------
    # Kept unrolled: per-step critical path is the EUP (2 sigmoid + tanh);
    # the W_hh matmul of step t+1 overlaps under step t's transcendentals.
    h = jnp.zeros((H, TBN), jnp.float32)
    for t in range(S):
        xp = xproj_ref[t * G:(t + 1) * G, :]                     # [3H, TBN], 8-aligned rows
        hp = jnp.dot(whh_ref[...], h,
                     preferred_element_type=jnp.float32)         # [3H, TBN]
        r = jax.nn.sigmoid(xp[0:H] + hp[0:H])
        z = jax.nn.sigmoid(xp[H:2 * H] + hp[H:2 * H])
        n = jnp.tanh(xp[2 * H:3 * H] + r * (hp[2 * H:3 * H] + bhn_b))
        h = (1.0 - z) * n + z * h
        hs_ref[t * H:(t + 1) * H, :] = h                         # full-lane, unmasked store

    # ---- deferred predictors: single K = S*H matmul, lane-dense store -----
    out_ref[...] = jnp.dot(wc_ref[...], hs_ref[...],
                           preferred_element_type=jnp.float32) + bc_ref[...]


def gru_model_forward(x, A_wave, params):
    """x: [B, N, S, D] (f32 or bf16); returns ([B, N, pred_num], A_wave), matching torch forward."""
    B, N, S, D = x.shape
    BN = B * N
    H = params['w_hh'].shape[1]
    G = 3 * H
    O = params['w1'].shape[0]
    P = params['w2'].shape[0]
    assert O == 1, "squeeze(-1) then Linear(his_num, pred_num) implies output_dim == 1"

    f32 = jnp.float32

    # PyTorch GRU gate order (r, z, n); [3H, D] / [3H, H] layouts are used as-is
    # (batch-on-lanes orientation wants weights on the LHS, so no transposes).
    w_ih = params['w_ih'].astype(f32)                             # [3H, D]
    w_hh = params['w_hh'].astype(f32)                             # [3H, H]
    b_ir, b_iz, b_in = jnp.split(params['b_ih'].astype(f32), 3)
    b_hr, b_hz, b_hn = jnp.split(params['b_hh'].astype(f32), 3)
    bx = jnp.concatenate([b_ir + b_hr, b_iz + b_hz, b_in])        # [3H]

    # Block-diagonal fused input weight: one hoisted matmul covers all S steps.
    wbig = jnp.zeros((S * G, S * D), f32)
    for t in range(S):
        wbig = wbig.at[t * G:(t + 1) * G, t * D:(t + 1) * D].set(w_ih)
    bxs = jnp.tile(bx, (S,))[:, None]                             # [S*3H, 1]
    bhn = b_hn[:, None]                                           # [H, 1]

    # Fuse predictor_1 (h . w1 + b1, squeeze) with predictor_2 (S -> P):
    #   out[p, b] = sum_{t,j} w2[p,t]*w1[j] * h_t[j,b] + b1*sum_t w2[p,t] + b2[p]
    w1 = params['w1'].astype(f32)          # [1, H]
    b1 = params['b1'].astype(f32)          # [1]
    w2 = params['w2'].astype(f32)          # [P, S]
    b2 = params['b2'].astype(f32)          # [P]
    wc = (w2[:, :, None] * w1[0][None, None, :]).reshape(P, S * H)   # [P, S*H]
    bc = b1[0] * jnp.sum(w2, axis=1) + b2                            # [P]

    # Output only needs 8-sublane alignment now (batch is on lanes) — was a
    # 128-lane pad before (32x write amplification).
    P_pad = _round_up(max(P, 8), 8)
    wc_p = jnp.zeros((P_pad, S * H), f32).at[:P].set(wc)
    bc_p = jnp.zeros((P_pad, 1), f32).at[:P, 0].set(bc)

    # Lane tile over batch*node rows: grow with BN to amortize per-grid-step
    # overhead, but keep >= 2 grid steps when BN allows (v7x has 2 TensorCores).
    TBN = 128
    for cand in (256, 512):
        if BN >= 2 * cand:
            TBN = cand
    BN_pad = _round_up(BN, TBN)
    grid = (BN_pad // TBN,)

    # Natural row-major layout: [BN, S*D] is a free reshape of [B,N,S,D] —
    # no wrapper-side HBM transpose pass.  We keep the caller's dtype (pass
    # bf16 x to halve the streamed read; the kernel upcasts to f32 internally).
    x2d = x.reshape(BN, S * D)
    if BN_pad != BN:
        x2d = jnp.pad(x2d, ((0, BN_pad - BN), (0, 0)))

    def _rep(a):
        nd = a.ndim
        return pl.BlockSpec(a.shape, lambda i, _nd=nd: (0,) * _nd)

    in_specs = [pl.BlockSpec((TBN, S * D), lambda i: (i, 0)),
                _rep(wbig), _rep(bxs), _rep(w_hh), _rep(bhn),
                _rep(wc_p), _rep(bc_p)]
    out_spec = pl.BlockSpec((P_pad, TBN), lambda i: (0, i))

    out = pl.pallas_call(
        gru_predict_kernel,
        grid=grid,
        in_specs=in_specs,
        out_specs=out_spec,
        out_shape=jax.ShapeDtypeStruct((P_pad, BN_pad), f32),
        scratch_shapes=[pltpu.VMEM((S * G, TBN), f32),   # xproj (explicit, not a live value)
                        pltpu.VMEM((S * H, TBN), f32)],  # hidden-state stash
        compiler_params=pltpu.CompilerParams(
            dimension_semantics=("parallel",)),
    )(x2d, wbig, bxs, w_hh, bhn, wc_p, bc_p)

    # TODO(synk): gru_layer.flatten_parameters() is a cuDNN-only layout hint; no TPU equivalent.
    return out[:P, :BN].T.reshape(B, N, P), A_wave


def ref_forward(x, params):
    """Pure-JAX reference matching torch semantics (for verification)."""
    B, N, S, D = x.shape
    BN = B * N
    xs = x.astype(jnp.float32).reshape(BN, S, D)
    w_ir, w_iz, w_in = jnp.split(params['w_ih'], 3, axis=0)
    w_hr, w_hz, w_hn = jnp.split(params['w_hh'], 3, axis=0)
    b_ir, b_iz, b_in = jnp.split(params['b_ih'], 3)
    b_hr, b_hz, b_hn = jnp.split(params['b_hh'], 3)
    H = params['w_hh'].shape[1]

    h = jnp.zeros((BN, H), jnp.float32)
    outs = []
    for t in range(S):
        xt = xs[:, t, :]
        r = jax.nn.sigmoid(xt @ w_ir.T + b_ir + h @ w_hr.T + b_hr)
        z = jax.nn.sigmoid(xt @ w_iz.T + b_iz + h @ w_hz.T + b_hz)
        n = jnp.tanh(xt @ w_in.T + b_in + r * (h @ w_hn.T + b_hn))
        h = (1.0 - z) * n + z * h
        outs.append(h)
    gru_out = jnp.stack(outs, axis=1)                        # [BN, S, H]
    p1 = (gru_out @ params['w1'].T + params['b1'])[..., 0]   # [BN, S]
    p2 = p1 @ params['w2'].T + params['b2']                  # [BN, P]
    return p2.reshape(B, N, -1)


if __name__ == "__main__":
    # model_args: message_dim=4, hidden_dim=32, output_dim=1
    # task_args:  his_num=8 (= seq_len), pred_num=4
    B, N, S, D = 2, 4, 8, 4
    H, O, P = 32, 1, 4

    key = jax.random.PRNGKey(0)
    ks = jax.random.split(key, 10)

    def u(k, shape, bound):
        return jax.random.uniform(k, shape, jnp.float32, -bound, bound)

    gru_bound = 1.0 / (H ** 0.5)
    lin1_bound = 1.0 / (H ** 0.5)
    lin2_bound = 1.0 / (S ** 0.5)

    params = {
        'w_ih': u(ks[0], (3 * H, D), gru_bound),   # nn.GRU weight_ih_l0
        'w_hh': u(ks[1], (3 * H, H), gru_bound),   # nn.GRU weight_hh_l0
        'b_ih': u(ks[2], (3 * H,), gru_bound),
        'b_hh': u(ks[3], (3 * H,), gru_bound),
        'w1':   u(ks[4], (O, H), lin1_bound),      # predictor_1
        'b1':   u(ks[5], (O,), lin1_bound),
        'w2':   u(ks[6], (P, S), lin2_bound),      # predictor_2
        'b2':   u(ks[7], (P,), lin2_bound),
    }

    x = jax.random.normal(ks[8], (B, N, S, D), jnp.float32)   # data.x
    A_wave = jax.random.normal(ks[9], (N, N), jnp.float32)    # passed through

    # f32-streamed path
    out, A_out = gru_model_forward(x, A_wave, params)
    out = jax.block_until_ready(out)
    ref = ref_forward(x, params)
    assert out.shape == (B, N, P), out.shape
    assert A_out.shape == A_wave.shape
    assert jnp.allclose(out, ref, atol=1e-3, rtol=1e-3), float(jnp.max(jnp.abs(out - ref)))

    # bf16-streamed path (perf review item: halve HBM read when the producer
    # already emits bf16 activations); validated against a reference that sees
    # the same input quantization — all downstream math stays f32 in both.
    x_bf16 = x.astype(jnp.bfloat16)
    out_b, _ = gru_model_forward(x_bf16, A_wave, params)
    out_b = jax.block_until_ready(out_b)
    ref_b = ref_forward(x_bf16.astype(jnp.float32), params)
    assert jnp.allclose(out_b, ref_b, atol=1e-3, rtol=1e-3), float(jnp.max(jnp.abs(out_b - ref_b)))

    print("KERNEL_OK")
</pallas_src>

<mosaic_0001>
module attributes {stable_mosaic.version = 11 : i64} {
  func.func @gru_predict_kernel(%arg0: i32, %arg1: memref<128x32xf32, #tpu.memory_space<vmem>>, %arg2: memref<768x32xf32, #tpu.memory_space<vmem>>, %arg3: memref<768x1xf32, #tpu.memory_space<vmem>>, %arg4: memref<96x32xf32, #tpu.memory_space<vmem>>, %arg5: memref<32x1xf32, #tpu.memory_space<vmem>>, %arg6: memref<8x256xf32, #tpu.memory_space<vmem>>, %arg7: memref<8x1xf32, #tpu.memory_space<vmem>>, %arg8: memref<8x128xf32, #tpu.memory_space<vmem>>, %arg9: memref<768x128xf32, #tpu.memory_space<vmem>>, %arg10: memref<256x128xf32, #tpu.memory_space<vmem>>) attributes {dimension_semantics = [#tpu.dimension_semantics<parallel>], iteration_bounds = array<i64: 1>, scalar_prefetch = 0 : i64, scratch_operands = 2 : i64, tpu.core_type = #tpu.core_type<tc>, window_params = [{transform_indices = @transform_0, window_bounds = array<i64: 128, 32>}, {pipeline_mode = #tpu.pipeline_mode<synchronous>, transform_indices = @transform_1, window_bounds = array<i64: 768, 32>}, {pipeline_mode = #tpu.pipeline_mode<synchronous>, transform_indices = @transform_2, window_bounds = array<i64: 768, 1>}, {pipeline_mode = #tpu.pipeline_mode<synchronous>, transform_indices = @transform_3, window_bounds = array<i64: 96, 32>}, {pipeline_mode = #tpu.pipeline_mode<synchronous>, transform_indices = @transform_4, window_bounds = array<i64: 32, 1>}, {pipeline_mode = #tpu.pipeline_mode<synchronous>, transform_indices = @transform_5, window_bounds = array<i64: 8, 256>}, {pipeline_mode = #tpu.pipeline_mode<synchronous>, transform_indices = @transform_6, window_bounds = array<i64: 8, 1>}, {transform_indices = @transform_7, window_bounds = array<i64: 8, 128>}]} {
    %c0 = arith.constant 0 : index
    %c0_0 = arith.constant 0 : index
    %0 = vector.load %arg1[%c0, %c0_0] : memref<128x32xf32, #tpu.memory_space<vmem>>, vector<128x32xf32>
    %c0_1 = arith.constant 0 : index
    %c0_2 = arith.constant 0 : index
    %1 = vector.load %arg2[%c0_1, %c0_2] : memref<768x32xf32, #tpu.memory_space<vmem>>, vector<768x32xf32>
    %cst = arith.constant dense<0.000000e+00> : vector<768x128xf32>
    %2 = tpu.matmul %1, %0, %cst {dimension_numbers = #tpu.dot_dimension_numbers<[1], [1], [0], [0], [0, 0, 1, 0], [], []>} : vector<768x32xf32>, vector<128x32xf32>, vector<768x128xf32> -> vector<768x128xf32>
    %c0_3 = arith.constant 0 : index
    %c0_4 = arith.constant 0 : index
    %3 = vector.load %arg3[%c0_3, %c0_4] : memref<768x1xf32, #tpu.memory_space<vmem>>, vector<768x1xf32>
    %4 = vector.broadcast %3 : vector<768x1xf32> to vector<768x128xf32>
    %5 = arith.addf %2, %4 : vector<768x128xf32>
    %c0_5 = arith.constant 0 : index
    %c0_6 = arith.constant 0 : index
    %6 = vector.load %arg9[%c0_5, %c0_6] : memref<768x128xf32, #tpu.memory_space<vmem>>, vector<768x128xf32>
    tpu.vector_store %arg9[%c0_5, %c0_6], %5 {strides = array<i32>} : memref<768x128xf32, #tpu.memory_space<vmem>>, vector<768x128xf32>,
    %c0_7 = arith.constant 0 : index
    %c0_8 = arith.constant 0 : index
    %7 = vector.load %arg5[%c0_7, %c0_8] : memref<32x1xf32, #tpu.memory_space<vmem>>, vector<32x1xf32>
    %8 = vector.shape_cast %7 : vector<32x1xf32> to vector<32x1xf32>
    %9 = vector.broadcast %8 : vector<32x1xf32> to vector<32x128xf32>
    %cst_9 = arith.constant 0.000000e+00 : f32
    %10 = vector.broadcast %cst_9 : f32 to vector<32x128xf32>
    %c0_10 = arith.constant 0 : index
    %c0_11 = arith.constant 0 : index
    %11 = vector.load %arg9[%c0_10, %c0_11] : memref<768x128xf32, #tpu.memory_space<vmem>>, vector<96x128xf32>
    %c0_12 = arith.constant 0 : index
    %c0_13 = arith.constant 0 : index
    %12 = vector.load %arg4[%c0_12, %c0_13] : memref<96x32xf32, #tpu.memory_space<vmem>>, vector<96x32xf32>
    %cst_14 = arith.constant dense<0.000000e+00> : vector<96x128xf32>
    %13 = tpu.matmul %12, %10, %cst_14 {dimension_numbers = #tpu.dot_dimension_numbers<[1], [0], [0], [1], [0, 0, 1, 1], [], []>} : vector<96x32xf32>, vector<32x128xf32>, vector<96x128xf32> -> vector<96x128xf32>
    %14 = vector.extract_strided_slice %11 {offsets = [0, 0], sizes = [32, 128], strides = [1, 1]} : vector<96x128xf32> to vector<32x128xf32>
    %15 = vector.extract_strided_slice %13 {offsets = [0, 0], sizes = [32, 128], strides = [1, 1]} : vector<96x128xf32> to vector<32x128xf32>
    %16 = arith.addf %14, %15 : vector<32x128xf32>
    %17 = arith.negf %16 : vector<32x128xf32>
    %18 = math.exp %17 : vector<32x128xf32>
    %cst_15 = arith.constant 1.000000e+00 : f32
    %19 = vector.broadcast %cst_15 : f32 to vector<32x128xf32>
    %20 = arith.addf %19, %18 : vector<32x128xf32>
    %21 = arith.divf %19, %20 : vector<32x128xf32>
    %22 = vector.extract_strided_slice %11 {offsets = [32, 0], sizes = [32, 128], strides = [1, 1]} : vector<96x128xf32> to vector<32x128xf32>
    %23 = vector.extract_strided_slice %13 {offsets = [32, 0], sizes = [32, 128], strides = [1, 1]} : vector<96x128xf32> to vector<32x128xf32>
    %24 = arith.addf %22, %23 : vector<32x128xf32>
    %25 = arith.negf %24 : vector<32x128xf32>
    %26 = math.exp %25 : vector<32x128xf32>
    %cst_16 = arith.constant 1.000000e+00 : f32
    %27 = vector.broadcast %cst_16 : f32 to vector<32x128xf32>
    %28 = arith.addf %27, %26 : vector<32x128xf32>
    %29 = arith.divf %27, %28 : vector<32x128xf32>
    %30 = vector.extract_strided_slice %11 {offsets = [64, 0], sizes = [32, 128], strides = [1, 1]} : vector<96x128xf32> to vector<32x128xf32>
    %31 = vector.extract_strided_slice %13 {offsets = [64, 0], sizes = [32, 128], strides = [1, 1]} : vector<96x128xf32> to vector<32x128xf32>
    %32 = arith.addf %31, %9 : vector<32x128xf32>
    %33 = arith.mulf %21, %32 : vector<32x128xf32>
    %34 = arith.addf %30, %33 : vector<32x128xf32>
    %35 = math.tanh %34 : vector<32x128xf32>
    %cst_17 = arith.constant 1.000000e+00 : f32
    %36 = vector.broadcast %cst_17 : f32 to vector<32x128xf32>
    %37 = arith.subf %36, %29 : vector<32x128xf32>
    %38 = arith.mulf %37, %35 : vector<32x128xf32>
    %39 = arith.mulf %29, %10 : vector<32x128xf32>
    %40 = arith.addf %38, %39 : vector<32x128xf32>
    %c0_18 = arith.constant 0 : index
    %c0_19 = arith.constant 0 : index
    %41 = vector.load %arg10[%c0_18, %c0_19] : memref<256x128xf32, #tpu.memory_space<vmem>>, vector<32x128xf32>
    tpu.vector_store %arg10[%c0_18, %c0_19], %40 {strides = array<i32>} : memref<256x128xf32, #tpu.memory_space<vmem>>, vector<32x128xf32>,
    %c96 = arith.constant 96 : index
    %c0_20 = arith.constant 0 : index
    %42 = vector.load %arg9[%c96, %c0_20] : memref<768x128xf32, #tpu.memory_space<vmem>>, vector<96x128xf32>
    %c0_21 = arith.constant 0 : index
    %c0_22 = arith.constant 0 : index
    %43 = vector.load %arg4[%c0_21, %c0_22] : memref<96x32xf32, #tpu.memory_space<vmem>>, vector<96x32xf32>
    %cst_23 = arith.constant dense<0.000000e+00> : vector<96x128xf32>
    %44 = tpu.matmul %43, %40, %cst_23 {dimension_numbers = #tpu.dot_dimension_numbers<[1], [0], [0], [1], [0, 0, 1, 1], [], []>} : vector<96x32xf32>, vector<32x128xf32>, vector<96x128xf32> -> vector<96x128xf32>
    %45 = vector.extract_strided_slice %42 {offsets = [0, 0], sizes = [32, 128], strides = [1, 1]} : vector<96x128xf32> to vector<32x128xf32>
    %46 = vector.extract_strided_slice %44 {offsets = [0, 0], sizes = [32, 128], strides = [1, 1]} : vector<96x128xf32> to vector<32x128xf32>
    %47 = arith.addf %45, %46 : vector<32x128xf32>
    %48 = arith.negf %47 : vector<32x128xf32>
    %49 = math.exp %48 : vector<32x128xf32>
    %cst_24 = arith.constant 1.000000e+00 : f32
    %50 = vector.broadcast %cst_24 : f32 to vector<32x128xf32>
    %51 = arith.addf %50, %49 : vector<32x128xf32>
    %52 = arith.divf %50, %51 : vector<32x128xf32>
    %53 = vector.extract_strided_slice %42 {offsets = [32, 0], sizes = [32, 128], strides = [1, 1]} : vector<96x128xf32> to vector<32x128xf32>
    %54 = vector.extract_strided_slice %44 {offsets = [32, 0], sizes = [32, 128], strides = [1, 1]} : vector<96x128xf32> to vector<32x128xf32>
    %55 = arith.addf %53, %54 : vector<32x128xf32>
    %56 = arith.negf %55 : vector<32x128xf32>
    %57 = math.exp %56 : vector<32x128xf32>
    %cst_25 = arith.constant 1.000000e+00 : f32
    %58 = vector.broadcast %cst_25 : f32 to vector<32x128xf32>
    %59 = arith.addf %58, %57 : vector<32x128xf32>
    %60 = arith.divf %58, %59 : vector<32x128xf32>
    %61 = vector.extract_strided_slice %42 {offsets = [64, 0], sizes = [32, 128], strides = [1, 1]} : vector<96x128xf32> to vector<32x128xf32>
    %62 = vector.extract_strided_slice %44 {offsets = [64, 0], sizes = [32, 128], strides = [1, 1]} : vector<96x128xf32> to vector<32x128xf32>
    %63 = arith.addf %62, %9 : vector<32x128xf32>
    %64 = arith.mulf %52, %63 : vector<32x128xf32>
    %65 = arith.addf %61, %64 : vector<32x128xf32>
    %66 = math.tanh %65 : vector<32x128xf32>
    %cst_26 = arith.constant 1.000000e+00 : f32
    %67 = vector.broadcast %cst_26 : f32 to vector<32x128xf32>
    %68 = arith.subf %67, %60 : vector<32x128xf32>
    %69 = arith.mulf %68, %66 : vector<32x128xf32>
    %70 = arith.mulf %60, %40 : vector<32x128xf32>
    %71 = arith.addf %69, %70 : vector<32x128xf32>
    %c32 = arith.constant 32 : index
    %c0_27 = arith.constant 0 : index
    %72 = vector.load %arg10[%c32, %c0_27] : memref<256x128xf32, #tpu.memory_space<vmem>>, vector<32x128xf32>
    tpu.vector_store %arg10[%c32, %c0_27], %71 {strides = array<i32>} : memref<256x128xf32, #tpu.memory_space<vmem>>, vector<32x128xf32>,
    %c192 = arith.constant 192 : index
    %c0_28 = arith.constant 0 : index
    %73 = vector.load %arg9[%c192, %c0_28] : memref<768x128xf32, #tpu.memory_space<vmem>>, vector<96x128xf32>
    %c0_29 = arith.constant 0 : index
    %c0_30 = arith.constant 0 : index
    %74 = vector.load %arg4[%c0_29, %c0_30] : memref<96x32xf32, #tpu.memory_space<vmem>>, vector<96x32xf32>
    %cst_31 = arith.constant dense<0.000000e+00> : vector<96x128xf32>
    %75 = tpu.matmul %74, %71, %cst_31 {dimension_numbers = #tpu.dot_dimension_numbers<[1], [0], [0], [1], [0, 0, 1, 1], [], []>} : vector<96x32xf32>, vector<32x128xf32>, vector<96x128xf32> -> vector<96x128xf32>
    %76 = vector.extract_strided_slice %73 {offsets = [0, 0], sizes = [32, 128], strides = [1, 1]} : vector<96x128xf32> to vector<32x128xf32>
    %77 = vector.extract_strided_slice %75 {offsets = [0, 0], sizes = [32, 128], strides = [1, 1]} : vector<96x128xf32> to vector<32x128xf32>
    %78 = arith.addf %76, %77 : vector<32x128xf32>
    %79 = arith.negf %78 : vector<32x128xf32>
    %80 = math.exp %79 : vector<32x128xf32>
    %cst_32 = arith.constant 1.000000e+00 : f32
    %81 = vector.broadcast %cst_32 : f32 to vector<32x128xf32>
    %82 = arith.addf %81, %80 : vector<32x128xf32>
    %83 = arith.divf %81, %82 : vector<32x128xf32>
    %84 = vector.extract_strided_slice %73 {offsets = [32, 0], sizes = [32, 128], strides = [1, 1]} : vector<96x128xf32> to vector<32x128xf32>
    %85 = vector.extract_strided_slice %75 {offsets = [32, 0], sizes = [32, 128], strides = [1, 1]} : vector<96x128xf32> to vector<32x128xf32>
    %86 = arith.addf %84, %85 : vector<32x128xf32>
    %87 = arith.negf %86 : vector<32x128xf32>
    %88 = math.exp %87 : vector<32x128xf32>
    %cst_33 = arith.constant 1.000000e+00 : f32
    %89 = vector.broadcast %cst_33 : f32 to vector<32x128xf32>
    %90 = arith.addf %89, %88 : vector<32x128xf32>
    %91 = arith.divf %89, %90 : vector<32x128xf32>
    %92 = vector.extract_strided_slice %73 {offsets = [64, 0], sizes = [32, 128], strides = [1, 1]} : vector<96x128xf32> to vector<32x128xf32>
    %93 = vector.extract_strided_slice %75 {offsets = [64, 0], sizes = [32, 128], strides = [1, 1]} : vector<96x128xf32> to vector<32x128xf32>
    %94 = arith.addf %93, %9 : vector<32x128xf32>
    %95 = arith.mulf %83, %94 : vector<32x128xf32>
    %96 = arith.addf %92, %95 : vector<32x128xf32>
    %97 = math.tanh %96 : vector<32x128xf32>
    %cst_34 = arith.constant 1.000000e+00 : f32
    %98 = vector.broadcast %cst_34 : f32 to vector<32x128xf32>
    %99 = arith.subf %98, %91 : vector<32x128xf32>
    %100 = arith.mulf %99, %97 : vector<32x128xf32>
    %101 = arith.mulf %91, %71 : vector<32x128xf32>
    %102 = arith.addf %100, %101 : vector<32x128xf32>
    %c64 = arith.constant 64 : index
    %c0_35 = arith.constant 0 : index
    %103 = vector.load %arg10[%c64, %c0_35] : memref<256x128xf32, #tpu.memory_space<vmem>>, vector<32x128xf32>
    tpu.vector_store %arg10[%c64, %c0_35], %102 {strides = array<i32>} : memref<256x128xf32, #tpu.memory_space<vmem>>, vector<32x128xf32>,
    %c288 = arith.constant 288 : index
    %c0_36 = arith.constant 0 : index
    %104 = vector.load %arg9[%c288, %c0_36] : memref<768x128xf32, #tpu.memory_space<vmem>>, vector<96x128xf32>
    %c0_37 = arith.constant 0 : index
    %c0_38 = arith.constant 0 : index
    %105 = vector.load %arg4[%c0_37, %c0_38] : memref<96x32xf32, #tpu.memory_space<vmem>>, vector<96x32xf32>
    %cst_39 = arith.constant dense<0.000000e+00> : vector<96x128xf32>
    %106 = tpu.matmul %105, %102, %cst_39 {dimension_numbers = #tpu.dot_dimension_numbers<[1], [0], [0], [1], [0, 0, 1, 1], [], []>} : vector<96x32xf32>, vector<32x128xf32>, vector<96x128xf32> -> vector<96x128xf32>
    %107 = vector.extract_strided_slice %104 {offsets = [0, 0], sizes = [32, 128], strides = [1, 1]} : vector<96x128xf32> to vector<32x128xf32>
    %108 = vector.extract_strided_slice %106 {offsets = [0, 0], sizes = [32, 128], strides = [1, 1]} : vector<96x128xf32> to vector<32x128xf32>
    %109 = arith.addf %107, %108 : vector<32x128xf32>
    %110 = arith.negf %109 : vector<32x128xf32>
    %111 = math.exp %110 : vector<32x128xf32>
    %cst_40 = arith.constant 1.000000e+00 : f32
    %112 = vector.broadcast %cst_40 : f32 to vector<32x128xf32>
    %113 = arith.addf %112, %111 : vector<32x128xf32>
    %114 = arith.divf %112, %113 : vector<32x128xf32>
    %115 = vector.extract_strided_slice %104 {offsets = [32, 0], sizes = [32, 128], strides = [1, 1]} : vector<96x128xf32> to vector<32x128xf32>
    %116 = vector.extract_strided_slice %106 {offsets = [32, 0], sizes = [32, 128], strides = [1, 1]} : vector<96x128xf32> to vector<32x128xf32>
    %117 = arith.addf %115, %116 : vector<32x128xf32>
    %118 = arith.negf %117 : vector<32x128xf32>
    %119 = math.exp %118 : vector<32x128xf32>
    %cst_41 = arith.constant 1.000000e+00 : f32
    %120 = vector.broadcast %cst_41 : f32 to vector<32x128xf32>
    %121 = arith.addf %120, %119 : vector<32x128xf32>
    %122 = arith.divf %120, %121 : vector<32x128xf32>
    %123 = vector.extract_strided_slice %104 {offsets = [64, 0], sizes = [32, 128], strides = [1, 1]} : vector<96x128xf32> to vector<32x128xf32>
    %124 = vector.extract_strided_slice %106 {offsets = [64, 0], sizes = [32, 128], strides = [1, 1]} : vector<96x128xf32> to vector<32x128xf32>
    %125 = arith.addf %124, %9 : vector<32x128xf32>
    %126 = arith.mulf %114, %125 : vector<32x128xf32>
    %127 = arith.addf %123, %126 : vector<32x128xf32>
    %128 = math.tanh %127 : vector<32x128xf32>
    %cst_42 = arith.constant 1.000000e+00 : f32
    %129 = vector.broadcast %cst_42 : f32 to vector<32x128xf32>
    %130 = arith.subf %129, %122 : vector<32x128xf32>
    %131 = arith.mulf %130, %128 : vector<32x128xf32>
    %132 = arith.mulf %122, %102 : vector<32x128xf32>
    %133 = arith.addf %131, %132 : vector<32x128xf32>
    %c96_43 = arith.constant 96 : index
    %c0_44 = arith.constant 0 : index
    %134 = vector.load %arg10[%c96_43, %c0_44] : memref<256x128xf32, #tpu.memory_space<vmem>>, vector<32x128xf32>
    tpu.vector_store %arg10[%c96_43, %c0_44], %133 {strides = array<i32>} : memref<256x128xf32, #tpu.memory_space<vmem>>, vector<32x128xf32>,
    %c384 = arith.constant 384 : index
    %c0_45 = arith.constant 0 : index
    %135 = vector.load %arg9[%c384, %c0_45] : memref<768x128xf32, #tpu.memory_space<vmem>>, vector<96x128xf32>
    %c0_46 = arith.constant 0 : index
    %c0_47 = arith.constant 0 : index
    %136 = vector.load %arg4[%c0_46, %c0_47] : memref<96x32xf32, #tpu.memory_space<vmem>>, vector<96x32xf32>
    %cst_48 = arith.constant dense<0.000000e+00> : vector<96x128xf32>
    %137 = tpu.matmul %136, %133, %cst_48 {dimension_numbers = #tpu.dot_dimension_numbers<[1], [0], [0], [1], [0, 0, 1, 1], [], []>} : vector<96x32xf32>, vector<32x128xf32>, vector<96x128xf32> -> vector<96x128xf32>
    %138 = vector.extract_strided_slice %135 {offsets = [0, 0], sizes = [32, 128], strides = [1, 1]} : vector<96x128xf32> to vector<32x128xf32>
    %139 = vector.extract_strided_slice %137 {offsets = [0, 0], sizes = [32, 128], strides = [1, 1]} : vector<96x128xf32> to vector<32x128xf32>
    %140 = arith.addf %138, %139 : vector<32x128xf32>
    %141 = arith.negf %140 : vector<32x128xf32>
    %142 = math.exp %141 : vector<32x128xf32>
    %cst_49 = arith.constant 1.000000e+00 : f32
    %143 = vector.broadcast %cst_49 : f32 to vector<32x128xf32>
    %144 = arith.addf %143, %142 : vector<32x128xf32>
    %145 = arith.divf %143, %144 : vector<32x128xf32>
    %146 = vector.extract_strided_slice %135 {offsets = [32, 0], sizes = [32, 128], strides = [1, 1]} : vector<96x128xf32> to vector<32x128xf32>
    %147 = vector.extract_strided_slice %137 {offsets = [32, 0], sizes = [32, 128], strides = [1, 1]} : vector<96x128xf32> to vector<32x128xf32>
    %148 = arith.addf %146, %147 : vector<32x128xf32>
    %149 = arith.negf %148 : vector<32x128xf32>
    %150 = math.exp %149 : vector<32x128xf32>
    %cst_50 = arith.constant 1.000000e+00 : f32
    %151 = vector.broadcast %cst_50 : f32 to vector<32x128xf32>
    %152 = arith.addf %151, %150 : vector<32x128xf32>
    %153 = arith.divf %151, %152 : vector<32x128xf32>
    %154 = vector.extract_strided_slice %135 {offsets = [64, 0], sizes = [32, 128], strides = [1, 1]} : vector<96x128xf32> to vector<32x128xf32>
    %155 = vector.extract_strided_slice %137 {offsets = [64, 0], sizes = [32, 128], strides = [1, 1]} : vector<96x128xf32> to vector<32x128xf32>
    %156 = arith.addf %155, %9 : vector<32x128xf32>
    %157 = arith.mulf %145, %156 : vector<32x128xf32>
    %158 = arith.addf %154, %157 : vector<32x128xf32>
    %159 = math.tanh %158 : vector<32x128xf32>
    %cst_51 = arith.constant 1.000000e+00 : f32
    %160 = vector.broadcast %cst_51 : f32 to vector<32x128xf32>
    %161 = arith.subf %160, %153 : vector<32x128xf32>
    %162 = arith.mulf %161, %159 : vector<32x128xf32>
    %163 = arith.mulf %153, %133 : vector<32x128xf32>
    %164 = arith.addf %162, %163 : vector<32x128xf32>
    %c128 = arith.constant 128 : index
    %c0_52 = arith.constant 0 : index
    %165 = vector.load %arg10[%c128, %c0_52] : memref<256x128xf32, #tpu.memory_space<vmem>>, vector<32x128xf32>
    tpu.vector_store %arg10[%c128, %c0_52], %164 {strides = array<i32>} : memref<256x128xf32, #tpu.memory_space<vmem>>, vector<32x128xf32>,
    %c480 = arith.constant 480 : index
    %c0_53 = arith.constant 0 : index
    %166 = vector.load %arg9[%c480, %c0_53] : memref<768x128xf32, #tpu.memory_space<vmem>>, vector<96x128xf32>
    %c0_54 = arith.constant 0 : index
    %c0_55 = arith.constant 0 : index
    %167 = vector.load %arg4[%c0_54, %c0_55] : memref<96x32xf32, #tpu.memory_space<vmem>>, vector<96x32xf32>
    %cst_56 = arith.constant dense<0.000000e+00> : vector<96x128xf32>
    %168 = tpu.matmul %167, %164, %cst_56 {dimension_numbers = #tpu.dot_dimension_numbers<[1], [0], [0], [1], [0, 0, 1, 1], [], []>} : vector<96x32xf32>, vector<32x128xf32>, vector<96x128xf32> -> vector<96x128xf32>
    %169 = vector.extract_strided_slice %166 {offsets = [0, 0], sizes = [32, 128], strides = [1, 1]} : vector<96x128xf32> to vector<32x128xf32>
    %170 = vector.extract_strided_slice %168 {offsets = [0, 0], sizes = [32, 128], strides = [1, 1]} : vector<96x128xf32> to vector<32x128xf32>
    %171 = arith.addf %169, %170 : vector<32x128xf32>
    %172 = arith.negf %171 : vector<32x128xf32>
    %173 = math.exp %172 : vector<32x128xf32>
    %cst_57 = arith.constant 1.000000e+00 : f32
    %174 = vector.broadcast %cst_57 : f32 to vector<32x128xf32>
    %175 = arith.addf %174, %173 : vector<32x128xf32>
    %176 = arith.divf %174, %175 : vector<32x128xf32>
    %177 = vector.extract_strided_slice %166 {offsets = [32, 0], sizes = [32, 128], strides = [1, 1]} : vector<96x128xf32> to vector<32x128xf32>
    %178 = vector.extract_strided_slice %168 {offsets = [32, 0], sizes = [32, 128], strides = [1, 1]} : vector<96x128xf32> to vector<32x128xf32>
    %179 = arith.addf %177, %178 : vector<32x128xf32>
    %180 = arith.negf %179 : vector<32x128xf32>
    %181 = math.exp %180 : vector<32x128xf32>
    %cst_58 = arith.constant 1.000000e+00 : f32
    %182 = vector.broadcast %cst_58 : f32 to vector<32x128xf32>
    %183 = arith.addf %182, %181 : vector<32x128xf32>
    %184 = arith.divf %182, %183 : vector<32x128xf32>
    %185 = vector.extract_strided_slice %166 {offsets = [64, 0], sizes = [32, 128], strides = [1, 1]} : vector<96x128xf32> to vector<32x128xf32>
    %186 = vector.extract_strided_slice %168 {offsets = [64, 0], sizes = [32, 128], strides = [1, 1]} : vector<96x128xf32> to vector<32x128xf32>
    %187 = arith.addf %186, %9 : vector<32x128xf32>
    %188 = arith.mulf %176, %187 : vector<32x128xf32>
    %189 = arith.addf %185, %188 : vector<32x128xf32>
    %190 = math.tanh %189 : vector<32x128xf32>
    %cst_59 = arith.constant 1.000000e+00 : f32
    %191 = vector.broadcast %cst_59 : f32 to vector<32x128xf32>
    %192 = arith.subf %191, %184 : vector<32x128xf32>
    %193 = arith.mulf %192, %190 : vector<32x128xf32>
    %194 = arith.mulf %184, %164 : vector<32x128xf32>
    %195 = arith.addf %193, %194 : vector<32x128xf32>
    %c160 = arith.constant 160 : index
    %c0_60 = arith.constant 0 : index
    %196 = vector.load %arg10[%c160, %c0_60] : memref<256x128xf32, #tpu.memory_space<vmem>>, vector<32x128xf32>
    tpu.vector_store %arg10[%c160, %c0_60], %195 {strides = array<i32>} : memref<256x128xf32, #tpu.memory_space<vmem>>, vector<32x128xf32>,
    %c576 = arith.constant 576 : index
    %c0_61 = arith.constant 0 : index
    %197 = vector.load %arg9[%c576, %c0_61] : memref<768x128xf32, #tpu.memory_space<vmem>>, vector<96x128xf32>
    %c0_62 = arith.constant 0 : index
    %c0_63 = arith.constant 0 : index
    %198 = vector.load %arg4[%c0_62, %c0_63] : memref<96x32xf32, #tpu.memory_space<vmem>>, vector<96x32xf32>
    %cst_64 = arith.constant dense<0.000000e+00> : vector<96x128xf32>
    %199 = tpu.matmul %198, %195, %cst_64 {dimension_numbers = #tpu.dot_dimension_numbers<[1], [0], [0], [1], [0, 0, 1, 1], [], []>} : vector<96x32xf32>, vector<32x128xf32>, vector<96x128xf32> -> vector<96x128xf32>
    %200 = vector.extract_strided_slice %197 {offsets = [0, 0], sizes = [32, 128], strides = [1, 1]} : vector<96x128xf32> to vector<32x128xf32>
    %201 = vector.extract_strided_slice %199 {offsets = [0, 0], sizes = [32, 128], strides = [1, 1]} : vector<96x128xf32> to vector<32x128xf32>
    %202 = arith.addf %200, %201 : vector<32x128xf32>
    %203 = arith.negf %202 : vector<32x128xf32>
    %204 = math.exp %203 : vector<32x128xf32>
    %cst_65 = arith.constant 1.000000e+00 : f32
    %205 = vector.broadcast %cst_65 : f32 to vector<32x128xf32>
    %206 = arith.addf %205, %204 : vector<32x128xf32>
    %207 = arith.divf %205, %206 : vector<32x128xf32>
    %208 = vector.extract_strided_slice %197 {offsets = [32, 0], sizes = [32, 128], strides = [1, 1]} : vector<96x128xf32> to vector<32x128xf32>
    %209 = vector.extract_strided_slice %199 {offsets = [32, 0], sizes = [32, 128], strides = [1, 1]} : vector<96x128xf32> to vector<32x128xf32>
    %210 = arith.addf %208, %209 : vector<32x128xf32>
    %211 = arith.negf %210 : vector<32x128xf32>
    %212 = math.exp %211 : vector<32x128xf32>
    %cst_66 = arith.constant 1.000000e+00 : f32
    %213 = vector.broadcast %cst_66 : f32 to vector<32x128xf32>
    %214 = arith.addf %213, %212 : vector<32x128xf32>
    %215 = arith.divf %213, %214 : vector<32x128xf32>
    %216 = vector.extract_strided_slice %197 {offsets = [64, 0], sizes = [32, 128], strides = [1, 1]} : vector<96x128xf32> to vector<32x128xf32>
    %217 = vector.extract_strided_slice %199 {offsets = [64, 0], sizes = [32, 128], strides = [1, 1]} : vector<96x128xf32> to vector<32x128xf32>
    %218 = arith.addf %217, %9 : vector<32x128xf32>
    %219 = arith.mulf %207, %218 : vector<32x128xf32>
    %220 = arith.addf %216, %219 : vector<32x128xf32>
    %221 = math.tanh %220 : vector<32x128xf32>
    %cst_67 = arith.constant 1.000000e+00 : f32
    %222 = vector.broadcast %cst_67 : f32 to vector<32x128xf32>
    %223 = arith.subf %222, %215 : vector<32x128xf32>
    %224 = arith.mulf %223, %221 : vector<32x128xf32>
    %225 = arith.mulf %215, %195 : vector<32x128xf32>
    %226 = arith.addf %224, %225 : vector<32x128xf32>
    %c192_68 = arith.constant 192 : index
    %c0_69 = arith.constant 0 : index
    %227 = vector.load %arg10[%c192_68, %c0_69] : memref<256x128xf32, #tpu.memory_space<vmem>>, vector<32x128xf32>
    tpu.vector_store %arg10[%c192_68, %c0_69], %226 {strides = array<i32>} : memref<256x128xf32, #tpu.memory_space<vmem>>, vector<32x128xf32>,
    %c672 = arith.constant 672 : index
    %c0_70 = arith.constant 0 : index
    %228 = vector.load %arg9[%c672, %c0_70] : memref<768x128xf32, #tpu.memory_space<vmem>>, vector<96x128xf32>
    %c0_71 = arith.constant 0 : index
    %c0_72 = arith.constant 0 : index
    %229 = vector.load %arg4[%c0_71, %c0_72] : memref<96x32xf32, #tpu.memory_space<vmem>>, vector<96x32xf32>
    %cst_73 = arith.constant dense<0.000000e+00> : vector<96x128xf32>
    %230 = tpu.matmul %229, %226, %cst_73 {dimension_numbers = #tpu.dot_dimension_numbers<[1], [0], [0], [1], [0, 0, 1, 1], [], []>} : vector<96x32xf32>, vector<32x128xf32>, vector<96x128xf32> -> vector<96x128xf32>
    %231 = vector.extract_strided_slice %228 {offsets = [0, 0], sizes = [32, 128], strides = [1, 1]} : vector<96x128xf32> to vector<32x128xf32>
    %232 = vector.extract_strided_slice %230 {offsets = [0, 0], sizes = [32, 128], strides = [1, 1]} : vector<96x128xf32> to vector<32x128xf32>
    %233 = arith.addf %231, %232 : vector<32x128xf32>
    %234 = arith.negf %233 : vector<32x128xf32>
    %235 = math.exp %234 : vector<32x128xf32>
    %cst_74 = arith.constant 1.000000e+00 : f32
    %236 = vector.broadcast %cst_74 : f32 to vector<32x128xf32>
    %237 = arith.addf %236, %235 : vector<32x128xf32>
    %238 = arith.divf %236, %237 : vector<32x128xf32>
    %239 = vector.extract_strided_slice %228 {offsets = [32, 0], sizes = [32, 128], strides = [1, 1]} : vector<96x128xf32> to vector<32x128xf32>
    %240 = vector.extract_strided_slice %230 {offsets = [32, 0], sizes = [32, 128], strides = [1, 1]} : vector<96x128xf32> to vector<32x128xf32>
    %241 = arith.addf %239, %240 : vector<32x128xf32>
    %242 = arith.negf %241 : vector<32x128xf32>
    %243 = math.exp %242 : vector<32x128xf32>
    %cst_75 = arith.constant 1.000000e+00 : f32
    %244 = vector.broadcast %cst_75 : f32 to vector<32x128xf32>
    %245 = arith.addf %244, %243 : vector<32x128xf32>
    %246 = arith.divf %244, %245 : vector<32x128xf32>
    %247 = vector.extract_strided_slice %228 {offsets = [64, 0], sizes = [32, 128], strides = [1, 1]} : vector<96x128xf32> to vector<32x128xf32>
    %248 = vector.extract_strided_slice %230 {offsets = [64, 0], sizes = [32, 128], strides = [1, 1]} : vector<96x128xf32> to vector<32x128xf32>
    %249 = arith.addf %248, %9 : vector<32x128xf32>
    %250 = arith.mulf %238, %249 : vector<32x128xf32>
    %251 = arith.addf %247, %250 : vector<32x128xf32>
    %252 = math.tanh %251 : vector<32x128xf32>
    %cst_76 = arith.constant 1.000000e+00 : f32
    %253 = vector.broadcast %cst_76 : f32 to vector<32x128xf32>
    %254 = arith.subf %253, %246 : vector<32x128xf32>
    %255 = arith.mulf %254, %252 : vector<32x128xf32>
    %256 = arith.mulf %246, %226 : vector<32x128xf32>
    %257 = arith.addf %255, %256 : vector<32x128xf32>
    %c224 = arith.constant 224 : index
    %c0_77 = arith.constant 0 : index
    %258 = vector.load %arg10[%c224, %c0_77] : memref<256x128xf32, #tpu.memory_space<vmem>>, vector<32x128xf32>
    tpu.vector_store %arg10[%c224, %c0_77], %257 {strides = array<i32>} : memref<256x128xf32, #tpu.memory_space<vmem>>, vector<32x128xf32>,
    %c0_78 = arith.constant 0 : index
    %c0_79 = arith.constant 0 : index
    %259 = vector.load %arg6[%c0_78, %c0_79] : memref<8x256xf32, #tpu.memory_space<vmem>>, vector<8x256xf32>
    %c0_80 = arith.constant 0 : index
    %c0_81 = arith.constant 0 : index
    %260 = vector.load %arg10[%c0_80, %c0_81] : memref<256x128xf32, #tpu.memory_space<vmem>>, vector<256x128xf32>
    %cst_82 = arith.constant dense<0.000000e+00> : vector<8x128xf32>
    %261 = tpu.matmul %259, %260, %cst_82 {dimension_numbers = #tpu.dot_dimension_numbers<[1], [0], [0], [1], [0, 0, 1, 1], [], []>} : vector<8x256xf32>, vector<256x128xf32>, vector<8x128xf32> -> vector<8x128xf32>
    %c0_83 = arith.constant 0 : index
    %c0_84 = arith.constant 0 : index
    %262 = vector.load %arg7[%c0_83, %c0_84] : memref<8x1xf32, #tpu.memory_space<vmem>>, vector<8x1xf32>
    %263 = vector.broadcast %262 : vector<8x1xf32> to vector<8x128xf32>
    %264 = arith.addf %261, %263 : vector<8x128xf32>
    %c0_85 = arith.constant 0 : index
    %c0_86 = arith.constant 0 : index
    %265 = vector.load %arg8[%c0_85, %c0_86] : memref<8x128xf32, #tpu.memory_space<vmem>>, vector<8x128xf32>
    tpu.vector_store %arg8[%c0_85, %c0_86], %264 {strides = array<i32>} : memref<8x128xf32, #tpu.memory_space<vmem>>, vector<8x128xf32>,
    return
  }
  func.func @transform_0(%arg0: i32) -> (i32, i32) {
    %c0_i32 = arith.constant 0 : i32
    %c0_i32_0 = arith.constant 0 : i32
    return %arg0, %c0_i32 : i32, i32
  }
  func.func @transform_1(%arg0: i32) -> (i32, i32) {
    %c0_i32 = arith.constant 0 : i32
    %c0_i32_0 = arith.constant 0 : i32
    %c0_i32_1 = arith.constant 0 : i32
    return %c0_i32, %c0_i32_0 : i32, i32
  }
  func.func @transform_2(%arg0: i32) -> (i32, i32) {
    %c0_i32 = arith.constant 0 : i32
    %c0_i32_0 = arith.constant 0 : i32
    %c0_i32_1 = arith.constant 0 : i32
    return %c0_i32, %c0_i32_0 : i32, i32
  }
  func.func @transform_3(%arg0: i32) -> (i32, i32) {
    %c0_i32 = arith.constant 0 : i32
    %c0_i32_0 = arith.constant 0 : i32
    %c0_i32_1 = arith.constant 0 : i32
    return %c0_i32, %c0_i32_0 : i32, i32
  }
  func.func @transform_4(%arg0: i32) -> (i32, i32) {
    %c0_i32 = arith.constant 0 : i32
    %c0_i32_0 = arith.constant 0 : i32
    %c0_i32_1 = arith.constant 0 : i32
    return %c0_i32, %c0_i32_0 : i32, i32
  }
  func.func @transform_5(%arg0: i32) -> (i32, i32) {
    %c0_i32 = arith.constant 0 : i32
    %c0_i32_0 = arith.constant 0 : i32
    %c0_i32_1 = arith.constant 0 : i32
    return %c0_i32, %c0_i32_0 : i32, i32
  }
  func.func @transform_6(%arg0: i32) -> (i32, i32) {
    %c0_i32 = arith.constant 0 : i32
    %c0_i32_0 = arith.constant 0 : i32
    %c0_i32_1 = arith.constant 0 : i32
    return %c0_i32, %c0_i32_0 : i32, i32
  }
  func.func @transform_7(%arg0: i32) -> (i32, i32) {
    %c0_i32 = arith.constant 0 : i32
    %c0_i32_0 = arith.constant 0 : i32
    return %c0_i32, %arg0 : i32, i32
  }
}

</mosaic_0001>

<llo_original>
// kernel: tpu_custom_call.1
$region0: #{tpu_custom_call.1}
  #allocation0 [shape = 'u32[]', space=smem, size = 0x4, offset = 0x4, fixed_abs, tag = 'smem constant byte address 0x4 - core index']
  #allocation1 [shape = 'u32[144,128]{1,0:T(1,128)}', space=vmem, size = 0x12000, scoped, tag = 'internal scratch']
  #allocation2 [shape = 'f32[768,128]{1,0:T(8,128)}', space=vmem, size = 0x60000, scoped, tag = 'scratch operand']
  #allocation3 [shape = 'f32[256,128]{1,0:T(8,128)}', space=vmem, size = 0x20000, scoped, tag = 'scratch operand']
  %s0 = inlined_call_operand.vmem [shape: f32[128,32], index: 0, kind: input, shape index: {}]
  %s1 = inlined_call_operand.vmem [shape: f32[768,32], index: 1, kind: input, shape index: {}]
  %s2 = inlined_call_operand.vmem [shape: f32[768,1], index: 2, kind: input, shape index: {}]
  %s3 = inlined_call_operand.vmem [shape: f32[96,32], index: 3, kind: input, shape index: {}]
  %s4 = inlined_call_operand.vmem [shape: f32[32,1], index: 4, kind: input, shape index: {}]
  %s5 = inlined_call_operand.vmem [shape: f32[8,256], index: 5, kind: input, shape index: {}]
  %s6 = inlined_call_operand.vmem [shape: f32[8,1], index: 6, kind: input, shape index: {}]
  %s7 = inlined_call_operand.hbm [shape: f32[8,128], index: 7, kind: output, shape index: {}]
  %s8 = sld [smem:[#allocation0]]
  $region38: #{tpu_custom_call.1} parent=0
    _
  %s10 = ssub.s32 1, %s8
  %s11 = scalar_select 0, %s10, %s8
  $region1: #{tpu_custom_call.1} parent=0
    #allocation4 [shape = 'u8[4096]{0}', space=vmem, size = 0x1000, scoped, tag = 'output window, operand 0, single buffered']
    #allocation5 [shape = 's32[1]{0}', space=sflag, size = 0x4, scoped, tag = 'scoped memory for tpu_custom_call.1']
    %12 = vsyncpa [#allocation5], 0
    // Predicated region
    $region2: #{tpu_custom_call.1} parent=1 // pred_check
      _
    $region3: #{tpu_custom_call.1} parent=1 // pred_check_branch
      %14 = sbr.rel (0) target = $region5
    $region4: #{tpu_custom_call.1} parent=1 // pred_region
      _
    $region5: #{tpu_custom_call.1} parent=1 // pred_fallthru
      _
    // Predicated region
    $region6: #{tpu_custom_call.1} parent=1 // pred_check
      _
    $region7: #{tpu_custom_call.1} parent=1 // pred_check_branch
      %16 = sbr.rel (0) target = $region9
    $region8: #{tpu_custom_call.1} parent=1 // pred_region
      _
    $region9: #{tpu_custom_call.1} parent=1 // pred_fallthru
      _
    // Predicated region
    $region10: #{tpu_custom_call.1} parent=1 // pred_check
      _
    $region11: #{tpu_custom_call.1} parent=1 // pred_check_branch
      %18 = sbr.rel (0) target = $region13
    $region12: #{tpu_custom_call.1} parent=1 // pred_region
      _
    $region13: #{tpu_custom_call.1} parent=1 // pred_fallthru
      _
    // Predicated region
    $region14: #{tpu_custom_call.1} parent=1 // pred_check
      _
    $region15: #{tpu_custom_call.1} parent=1 // pred_check_branch
      %20 = sbr.rel (0) target = $region17
    $region16: #{tpu_custom_call.1} parent=1 // pred_region
      _
    $region17: #{tpu_custom_call.1} parent=1 // pred_fallthru
      _
    // Predicated region
    $region18: #{tpu_custom_call.1} parent=1 // pred_check
      _
    $region19: #{tpu_custom_call.1} parent=1 // pred_check_branch
      %22 = sbr.rel (0) target = $region21
    $region20: #{tpu_custom_call.1} parent=1 // pred_region
      _
    $region21: #{tpu_custom_call.1} parent=1 // pred_fallthru
      _
    // Predicated region
    $region22: #{tpu_custom_call.1} parent=1 // pred_check
      _
    $region23: #{tpu_custom_call.1} parent=1 // pred_check_branch
      %24 = sbr.rel (0) target = $region25
    $region24: #{tpu_custom_call.1} parent=1 // pred_region
      _
    $region25: #{tpu_custom_call.1} parent=1 // pred_fallthru
      _
    // Predicated region
    $region26: #{tpu_custom_call.1} parent=1 // pred_check
      _
    $region27: #{tpu_custom_call.1} parent=1 // pred_check_branch
      %26 = sbr.rel (0) target = $region29
    $region28: #{tpu_custom_call.1} parent=1 // pred_region
      _
    $region29: #{tpu_custom_call.1} parent=1 // pred_fallthru
      _
    %v27 = vld [vmem:[%s0] sm:$0xff]
    %v28 = vld [vmem:[%s0 + $0x8] sm:$0xff]
    %v29 = vld [vmem:[%s0 + $0x10] sm:$0xff]
    %v30 = vld [vmem:[%s0 + $0x18] sm:$0xff]
    %v31 = vld [vmem:[%s0 + $0x20] sm:$0xff]
    %v32 = vld [vmem:[%s0 + $0x28] sm:$0xff]
    %v33 = vld [vmem:[%s0 + $0x30] sm:$0xff]
    %v34 = vld [vmem:[%s0 + $0x38] sm:$0xff]
    %v35 = vld [vmem:[%s0 + $0x40] sm:$0xff]
    %v36 = vld [vmem:[%s0 + $0x48] sm:$0xff]
    %v37 = vld [vmem:[%s0 + $0x50] sm:$0xff]
    %v38 = vld [vmem:[%s0 + $0x58] sm:$0xff]
    %v39 = vld [vmem:[%s0 + $0x60] sm:$0xff]
    %v40 = vld [vmem:[%s0 + $0x68] sm:$0xff]
    %v41 = vld [vmem:[%s0 + $0x70] sm:$0xff]
    %v42 = vld [vmem:[%s0 + $0x78] sm:$0xff]
    %v43 = vld [vmem:[%s1] sm:$0xff]
    %v44 = vld [vmem:[%s1 + $0x8] sm:$0xff]
    %v45 = vld [vmem:[%s1 + $0x10] sm:$0xff]
    %v46 = vld [vmem:[%s1 + $0x18] sm:$0xff]
    %v47 = vld [vmem:[%s1 + $0x20] sm:$0xff]
    %v48 = vld [vmem:[%s1 + $0x28] sm:$0xff]
    %v49 = vld [vmem:[%s1 + $0x30] sm:$0xff]
    %v50 = vld [vmem:[%s1 + $0x38] sm:$0xff]
    %v51 = vld [vmem:[%s1 + $0x40] sm:$0xff]
    %v52 = vld [vmem:[%s1 + $0x48] sm:$0xff]
    %v53 = vld [vmem:[%s1 + $0x50] sm:$0xff]
    %v54 = vld [vmem:[%s1 + $0x58] sm:$0xff]
    %v55 = vld [vmem:[%s1 + $0x60] sm:$0xff]
    %v56 = vld [vmem:[%s1 + $0x68] sm:$0xff]
    %v57 = vld [vmem:[%s1 + $0x70] sm:$0xff]
    %v58 = vld [vmem:[%s1 + $0x78] sm:$0xff]
    %v59 = vld [vmem:[%s1 + $0x80] sm:$0xff]
    %v60 = vld [vmem:[%s1 + $0x88] sm:$0xff]
    %v61 = vld [vmem:[%s1 + $0x90] sm:$0xff]
    %v62 = vld [vmem:[%s1 + $0x98] sm:$0xff]
    %v63 = vld [vmem:[%s1 + $0xa0] sm:$0xff]
    %v64 = vld [vmem:[%s1 + $0xa8] sm:$0xff]
    %v65 = vld [vmem:[%s1 + $0xb0] sm:$0xff]
    %v66 = vld [vmem:[%s1 + $0xb8] sm:$0xff]
    %v67 = vld [vmem:[%s1 + $0xc0] sm:$0xff]
    %v68 = vld [vmem:[%s1 + $0xc8] sm:$0xff]
    %v69 = vld [vmem:[%s1 + $0xd0] sm:$0xff]
    %v70 = vld [vmem:[%s1 + $0xd8] sm:$0xff]
    %v71 = vld [vmem:[%s1 + $0xe0] sm:$0xff]
    %v72 = vld [vmem:[%s1 + $0xe8] sm:$0xff]
    %v73 = vld [vmem:[%s1 + $0xf0] sm:$0xff]
    %v74 = vld [vmem:[%s1 + $0xf8] sm:$0xff]
    %v75 = vld [vmem:[%s1 + $0x100] sm:$0xff]
    %v76 = vld [vmem:[%s1 + $0x108] sm:$0xff]
    %v77 = vld [vmem:[%s1 + $0x110] sm:$0xff]
    %v78 = vld [vmem:[%s1 + $0x118] sm:$0xff]
    %v79 = vld [vmem:[%s1 + $0x120] sm:$0xff]
    %v80 = vld [vmem:[%s1 + $0x128] sm:$0xff]
    %v81 = vld [vmem:[%s1 + $0x130] sm:$0xff]
    %v82 = vld [vmem:[%s1 + $0x138] sm:$0xff]
    %v83 = vld [vmem:[%s1 + $0x140] sm:$0xff]
    %v84 = vld [vmem:[%s1 + $0x148] sm:$0xff]
    %v85 = vld [vmem:[%s1 + $0x150] sm:$0xff]
    %v86 = vld [vmem:[%s1 + $0x158] sm:$0xff]
    %v87 = vld [vmem:[%s1 + $0x160] sm:$0xff]
    %v88 = vld [vmem:[%s1 + $0x168] sm:$0xff]
    %v89 = vld [vmem:[%s1 + $0x170] sm:$0xff]
    %v90 = vld [vmem:[%s1 + $0x178] sm:$0xff]
    %v91 = vld [vmem:[%s1 + $0x180] sm:$0xff]
    %v92 = vld [vmem:[%s1 + $0x188] sm:$0xff]
    %v93 = vld [vmem:[%s1 + $0x190] sm:$0xff]
    %v94 = vld [vmem:[%s1 + $0x198] sm:$0xff]
    %v95 = vld [vmem:[%s1 + $0x1a0] sm:$0xff]
    %v96 = vld [vmem:[%s1 + $0x1a8] sm:$0xff]
    %v97 = vld [vmem:[%s1 + $0x1b0] sm:$0xff]
    %v98 = vld [vmem:[%s1 + $0x1b8] sm:$0xff]
    %v99 = vld [vmem:[%s1 + $0x1c0] sm:$0xff]
    %v100 = vld [vmem:[%s1 + $0x1c8] sm:$0xff]
    %v101 = vld [vmem:[%s1 + $0x1d0] sm:$0xff]
    %v102 = vld [vmem:[%s1 + $0x1d8] sm:$0xff]
    %v103 = vld [vmem:[%s1 + $0x1e0] sm:$0xff]
    %v104 = vld [vmem:[%s1 + $0x1e8] sm:$0xff]
    %v105 = vld [vmem:[%s1 + $0x1f0] sm:$0xff]
    %v106 = vld [vmem:[%s1 + $0x1f8] sm:$0xff]
    %v107 = vld [vmem:[%s1 + $0x200] sm:$0xff]
    %v108 = vld [vmem:[%s1 + $0x208] sm:$0xff]
    %v109 = vld [vmem:[%s1 + $0x210] sm:$0xff]
    %v110 = vld [vmem:[%s1 + $0x218] sm:$0xff]
    %v111 = vld [vmem:[%s1 + $0x220] sm:$0xff]
    %v112 = vld [vmem:[%s1 + $0x228] sm:$0xff]
    %v113 = vld [vmem:[%s1 + $0x230] sm:$0xff]
    %v114 = vld [vmem:[%s1 + $0x238] sm:$0xff]
    %v115 = vld [vmem:[%s1 + $0x240] sm:$0xff]
    %v116 = vld [vmem:[%s1 + $0x248] sm:$0xff]
    %v117 = vld [vmem:[%s1 + $0x250] sm:$0xff]
    %v118 = vld [vmem:[%s1 + $0x258] sm:$0xff]
    %v119 = vld [vmem:[%s1 + $0x260] sm:$0xff]
    %v120 = vld [vmem:[%s1 + $0x268] sm:$0xff]
    %v121 = vld [vmem:[%s1 + $0x270] sm:$0xff]
    %v122 = vld [vmem:[%s1 + $0x278] sm:$0xff]
    %v123 = vld [vmem:[%s1 + $0x280] sm:$0xff]
    %v124 = vld [vmem:[%s1 + $0x288] sm:$0xff]
    %v125 = vld [vmem:[%s1 + $0x290] sm:$0xff]
    %v126 = vld [vmem:[%s1 + $0x298] sm:$0xff]
    %v127 = vld [vmem:[%s1 + $0x2a0] sm:$0xff]
    %v128 = vld [vmem:[%s1 + $0x2a8] sm:$0xff]
    %v129 = vld [vmem:[%s1 + $0x2b0] sm:$0xff]
    %v130 = vld [vmem:[%s1 + $0x2b8] sm:$0xff]
    %v131 = vld [vmem:[%s1 + $0x2c0] sm:$0xff]
    %v132 = vld [vmem:[%s1 + $0x2c8] sm:$0xff]
    %v133 = vld [vmem:[%s1 + $0x2d0] sm:$0xff]
    %v134 = vld [vmem:[%s1 + $0x2d8] sm:$0xff]
    %v135 = vld [vmem:[%s1 + $0x2e0] sm:$0xff]
    %v136 = vld [vmem:[%s1 + $0x2e8] sm:$0xff]
    %v137 = vld [vmem:[%s1 + $0x2f0] sm:$0xff]
    %v138 = vld [vmem:[%s1 + $0x2f8] sm:$0xff]
    %v139 = vld [vmem:[%s2] sm:$0xff]
    %v140 = vld [vmem:[%s2 + $0x8] sm:$0xff]
    %v141 = vld [vmem:[%s2 + $0x10] sm:$0xff]
    %v142 = vld [vmem:[%s2 + $0x18] sm:$0xff]
    %v143 = vld [vmem:[%s2 + $0x20] sm:$0xff]
    %v144 = vld [vmem:[%s2 + $0x28] sm:$0xff]
    %v145 = vld [vmem:[%s2 + $0x30] sm:$0xff]
    %v146 = vld [vmem:[%s2 + $0x38] sm:$0xff]
    %v147 = vld [vmem:[%s2 + $0x40] sm:$0xff]
    %v148 = vld [vmem:[%s2 + $0x48] sm:$0xff]
    %v149 = vld [vmem:[%s2 + $0x50] sm:$0xff]
    %v150 = vld [vmem:[%s2 + $0x58] sm:$0xff]
    %v151 = vld [vmem:[%s2 + $0x60] sm:$0xff]
    %v152 = vld [vmem:[%s2 + $0x68] sm:$0xff]
    %v153 = vld [vmem:[%s2 + $0x70] sm:$0xff]
    %v154 = vld [vmem:[%s2 + $0x78] sm:$0xff]
    %v155 = vld [vmem:[%s2 + $0x80] sm:$0xff]
    %v156 = vld [vmem:[%s2 + $0x88] sm:$0xff]
    %v157 = vld [vmem:[%s2 + $0x90] sm:$0xff]
    %v158 = vld [vmem:[%s2 + $0x98] sm:$0xff]
    %v159 = vld [vmem:[%s2 + $0xa0] sm:$0xff]
    %v160 = vld [vmem:[%s2 + $0xa8] sm:$0xff]
    %v161 = vld [vmem:[%s2 + $0xb0] sm:$0xff]
    %v162 = vld [vmem:[%s2 + $0xb8] sm:$0xff]
    %v163 = vld [vmem:[%s2 + $0xc0] sm:$0xff]
    %v164 = vld [vmem:[%s2 + $0xc8] sm:$0xff]
    %v165 = vld [vmem:[%s2 + $0xd0] sm:$0xff]
    %v166 = vld [vmem:[%s2 + $0xd8] sm:$0xff]
    %v167 = vld [vmem:[%s2 + $0xe0] sm:$0xff]
    %v168 = vld [vmem:[%s2 + $0xe8] sm:$0xff]
    %v169 = vld [vmem:[%s2 + $0xf0] sm:$0xff]
    %v170 = vld [vmem:[%s2 + $0xf8] sm:$0xff]
    %v171 = vld [vmem:[%s2 + $0x100] sm:$0xff]
    %v172 = vld [vmem:[%s2 + $0x108] sm:$0xff]
    %v173 = vld [vmem:[%s2 + $0x110] sm:$0xff]
    %v174 = vld [vmem:[%s2 + $0x118] sm:$0xff]
    %v175 = vld [vmem:[%s2 + $0x120] sm:$0xff]
    %v176 = vld [vmem:[%s2 + $0x128] sm:$0xff]
    %v177 = vld [vmem:[%s2 + $0x130] sm:$0xff]
    %v178 = vld [vmem:[%s2 + $0x138] sm:$0xff]
    %v179 = vld [vmem:[%s2 + $0x140] sm:$0xff]
    %v180 = vld [vmem:[%s2 + $0x148] sm:$0xff]
    %v181 = vld [vmem:[%s2 + $0x150] sm:$0xff]
    %v182 = vld [vmem:[%s2 + $0x158] sm:$0xff]
    %v183 = vld [vmem:[%s2 + $0x160] sm:$0xff]
    %v184 = vld [vmem:[%s2 + $0x168] sm:$0xff]
    %v185 = vld [vmem:[%s2 + $0x170] sm:$0xff]
    %v186 = vld [vmem:[%s2 + $0x178] sm:$0xff]
    %v187 = vld [vmem:[%s2 + $0x180] sm:$0xff]
    %v188 = vld [vmem:[%s2 + $0x188] sm:$0xff]
    %v189 = vld [vmem:[%s2 + $0x190] sm:$0xff]
    %v190 = vld [vmem:[%s2 + $0x198] sm:$0xff]
    %v191 = vld [vmem:[%s2 + $0x1a0] sm:$0xff]
    %v192 = vld [vmem:[%s2 + $0x1a8] sm:$0xff]
    %v193 = vld [vmem:[%s2 + $0x1b0] sm:$0xff]
    %v194 = vld [vmem:[%s2 + $0x1b8] sm:$0xff]
    %v195 = vld [vmem:[%s2 + $0x1c0] sm:$0xff]
    %v196 = vld [vmem:[%s2 + $0x1c8] sm:$0xff]
    %v197 = vld [vmem:[%s2 + $0x1d0] sm:$0xff]
    %v198 = vld [vmem:[%s2 + $0x1d8] sm:$0xff]
    %v199 = vld [vmem:[%s2 + $0x1e0] sm:$0xff]
    %v200 = vld [vmem:[%s2 + $0x1e8] sm:$0xff]
    %v201 = vld [vmem:[%s2 + $0x1f0] sm:$0xff]
    %v202 = vld [vmem:[%s2 + $0x1f8] sm:$0xff]
    %v203 = vld [vmem:[%s2 + $0x200] sm:$0xff]
    %v204 = vld [vmem:[%s2 + $0x208] sm:$0xff]
    %v205 = vld [vmem:[%s2 + $0x210] sm:$0xff]
    %v206 = vld [vmem:[%s2 + $0x218] sm:$0xff]
    %v207 = vld [vmem:[%s2 + $0x220] sm:$0xff]
    %v208 = vld [vmem:[%s2 + $0x228] sm:$0xff]
    %v209 = vld [vmem:[%s2 + $0x230] sm:$0xff]
    %v210 = vld [vmem:[%s2 + $0x238] sm:$0xff]
    %v211 = vld [vmem:[%s2 + $0x240] sm:$0xff]
    %v212 = vld [vmem:[%s2 + $0x248] sm:$0xff]
    %v213 = vld [vmem:[%s2 + $0x250] sm:$0xff]
    %v214 = vld [vmem:[%s2 + $0x258] sm:$0xff]
    %v215 = vld [vmem:[%s2 + $0x260] sm:$0xff]
    %v216 = vld [vmem:[%s2 + $0x268] sm:$0xff]
    %v217 = vld [vmem:[%s2 + $0x270] sm:$0xff]
    %v218 = vld [vmem:[%s2 + $0x278] sm:$0xff]
    %v219 = vld [vmem:[%s2 + $0x280] sm:$0xff]
    %v220 = vld [vmem:[%s2 + $0x288] sm:$0xff]
    %v221 = vld [vmem:[%s2 + $0x290] sm:$0xff]
    %v222 = vld [vmem:[%s2 + $0x298] sm:$0xff]
    %v223 = vld [vmem:[%s2 + $0x2a0] sm:$0xff]
    %v224 = vld [vmem:[%s2 + $0x2a8] sm:$0xff]
    %v225 = vld [vmem:[%s2 + $0x2b0] sm:$0xff]
    %v226 = vld [vmem:[%s2 + $0x2b8] sm:$0xff]
    %v227 = vld [vmem:[%s2 + $0x2c0] sm:$0xff]
    %v228 = vld [vmem:[%s2 + $0x2c8] sm:$0xff]
    %v229 = vld [vmem:[%s2 + $0x2d0] sm:$0xff]
    %v230 = vld [vmem:[%s2 + $0x2d8] sm:$0xff]
    %v231 = vld [vmem:[%s2 + $0x2e0] sm:$0xff]
    %v232 = vld [vmem:[%s2 + $0x2e8] sm:$0xff]
    %v233 = vld [vmem:[%s2 + $0x2f0] sm:$0xff]
    %v234 = vld [vmem:[%s2 + $0x2f8] sm:$0xff]
    %236 = vset.pattern.permute.xlu0 0
    %237 = vperm.xlu0 %236, %v139
    %v238 = vpop.permute.xlu0 %237
    %241 = vset.pattern.permute.xlu0 0
    %242 = vperm.xlu0 %241, %v140
    %v243 = vpop.permute.xlu0 %242
    %246 = vset.pattern.permute.xlu0 0
    %247 = vperm.xlu0 %246, %v141
    %v248 = vpop.permute.xlu0 %247
    %251 = vset.pattern.permute.xlu0 0
    %252 = vperm.xlu0 %251, %v142
    %v253 = vpop.permute.xlu0 %252
    %256 = vset.pattern.permute.xlu0 0
    %257 = vperm.xlu0 %256, %v143
    %v258 = vpop.permute.xlu0 %257
    %261 = vset.pattern.permute.xlu0 0
    %262 = vperm.xlu0 %261, %v144
    %v263 = vpop.permute.xlu0 %262
    %266 = vset.pattern.permute.xlu0 0
    %267 = vperm.xlu0 %266, %v145
    %v268 = vpop.permute.xlu0 %267
    %271 = vset.pattern.permute.xlu0 0
    %272 = vperm.xlu0 %271, %v146
    %v273 = vpop.permute.xlu0 %272
    %276 = vset.pattern.permute.xlu0 0
    %277 = vperm.xlu0 %276, %v147
    %v278 = vpop.permute.xlu0 %277
    %281 = vset.pattern.permute.xlu0 0
    %282 = vperm.xlu0 %281, %v148
    %v283 = vpop.permute.xlu0 %282
    %286 = vset.pattern.permute.xlu0 0
    %287 = vperm.xlu0 %286, %v149
    %v288 = vpop.permute.xlu0 %287
    %291 = vset.pattern.permute.xlu0 0
    %292 = vperm.xlu0 %291, %v150
    %v293 = vpop.permute.xlu0 %292
    %296 = vset.pattern.permute.xlu0 0
    %297 = vperm.xlu0 %296, %v151
    %v298 = vpop.permute.xlu0 %297
    %301 = vset.pattern.permute.xlu0 0
    %302 = vperm.xlu0 %301, %v152
    %v303 = vpop.permute.xlu0 %302
    %306 = vset.pattern.permute.xlu0 0
    %307 = vperm.xlu0 %306, %v153
    %v308 = vpop.permute.xlu0 %307
    %311 = vset.pattern.permute.xlu0 0
    %312 = vperm.xlu0 %311, %v154
    %v313 = vpop.permute.xlu0 %312
    %316 = vset.pattern.permute.xlu0 0
    %317 = vperm.xlu0 %316, %v155
    %v318 = vpop.permute.xlu0 %317
    %321 = vset.pattern.permute.xlu0 0
    %322 = vperm.xlu0 %321, %v156
    %v323 = vpop.permute.xlu0 %322
    %326 = vset.pattern.permute.xlu0 0
    %327 = vperm.xlu0 %326, %v157
    %v328 = vpop.permute.xlu0 %327
    %331 = vset.pattern.permute.xlu0 0
    %332 = vperm.xlu0 %331, %v158
    %v333 = vpop.permute.xlu0 %332
    %336 = vset.pattern.permute.xlu0 0
    %337 = vperm.xlu0 %336, %v159
    %v338 = vpop.permute.xlu0 %337
    %341 = vset.pattern.permute.xlu0 0
    %342 = vperm.xlu0 %341, %v160
    %v343 = vpop.permute.xlu0 %342
    %346 = vset.pattern.permute.xlu0 0
    %347 = vperm.xlu0 %346, %v161
    %v348 = vpop.permute.xlu0 %347
    %351 = vset.pattern.permute.xlu0 0
    %352 = vperm.xlu0 %351, %v162
    %v353 = vpop.permute.xlu0 %352
    %356 = vset.pattern.permute.xlu0 0
    %357 = vperm.xlu0 %356, %v163
    %v358 = vpop.permute.xlu0 %357
    %361 = vset.pattern.permute.xlu0 0
    %362 = vperm.xlu0 %361, %v164
    %v363 = vpop.permute.xlu0 %362
    %366 = vset.pattern.permute.xlu0 0
    %367 = vperm.xlu0 %366, %v165
    %v368 = vpop.permute.xlu0 %367
    %371 = vset.pattern.permute.xlu0 0
    %372 = vperm.xlu0 %371, %v166
    %v373 = vpop.permute.xlu0 %372
    %376 = vset.pattern.permute.xlu0 0
    %377 = vperm.xlu0 %376, %v167
    %v378 = vpop.permute.xlu0 %377
    %381 = vset.pattern.permute.xlu0 0
    %382 = vperm.xlu0 %381, %v168
    %v383 = vpop.permute.xlu0 %382
    %386 = vset.pattern.permute.xlu0 0
    %387 = vperm.xlu0 %386, %v169
    %v388 = vpop.permute.xlu0 %387
    %391 = vset.pattern.permute.xlu0 0
    %392 = vperm.xlu0 %391, %v170
    %v393 = vpop.permute.xlu0 %392
    %396 = vset.pattern.permute.xlu0 0
    %397 = vperm.xlu0 %396, %v171
    %v398 = vpop.permute.xlu0 %397
    %401 = vset.pattern.permute.xlu0 0
    %402 = vperm.xlu0 %401, %v172
    %v403 = vpop.permute.xlu0 %402
    %406 = vset.pattern.permute.xlu0 0
    %407 = vperm.xlu0 %406, %v173
    %v408 = vpop.permute.xlu0 %407
    %411 = vset.pattern.permute.xlu0 0
    %412 = vperm.xlu0 %411, %v174
    %v413 = vpop.permute.xlu0 %412
    %416 = vset.pattern.permute.xlu0 0
    %417 = vperm.xlu0 %416, %v175
    %v418 = vpop.permute.xlu0 %417
    %421 = vset.pattern.permute.xlu0 0
    %422 = vperm.xlu0 %421, %v176
    %v423 = vpop.permute.xlu0 %422
    %426 = vset.pattern.permute.xlu0 0
    %427 = vperm.xlu0 %426, %v177
    %v428 = vpop.permute.xlu0 %427
    %431 = vset.pattern.permute.xlu0 0
    %432 = vperm.xlu0 %431, %v178
    %v433 = vpop.permute.xlu0 %432
    %436 = vset.pattern.permute.xlu0 0
    %437 = vperm.xlu0 %436, %v179
    %v438 = vpop.permute.xlu0 %437
    %441 = vset.pattern.permute.xlu0 0
    %442 = vperm.xlu0 %441, %v180
    %v443 = vpop.permute.xlu0 %442
    %446 = vset.pattern.permute.xlu0 0
    %447 = vperm.xlu0 %446, %v181
    %v448 = vpop.permute.xlu0 %447
    %451 = vset.pattern.permute.xlu0 0
    %452 = vperm.xlu0 %451, %v182
    %v453 = vpop.permute.xlu0 %452
    %456 = vset.pattern.permute.xlu0 0
    %457 = vperm.xlu0 %456, %v183
    %v458 = vpop.permute.xlu0 %457
    %461 = vset.pattern.permute.xlu0 0
    %462 = vperm.xlu0 %461, %v184
    %v463 = vpop.permute.xlu0 %462
    %466 = vset.pattern.permute.xlu0 0
    %467 = vperm.xlu0 %466, %v185
    %v468 = vpop.permute.xlu0 %467
    %471 = vset.pattern.permute.xlu0 0
    %472 = vperm.xlu0 %471, %v186
    %v473 = vpop.permute.xlu0 %472
    %476 = vset.pattern.permute.xlu0 0
    %477 = vperm.xlu0 %476, %v187
    %v478 = vpop.permute.xlu0 %477
    %481 = vset.pattern.permute.xlu0 0
    %482 = vperm.xlu0 %481, %v188
    %v483 = vpop.permute.xlu0 %482
    %486 = vset.pattern.permute.xlu0 0
    %487 = vperm.xlu0 %486, %v189
    %v488 = vpop.permute.xlu0 %487
    %491 = vset.pattern.permute.xlu0 0
    %492 = vperm.xlu0 %491, %v190
    %v493 = vpop.permute.xlu0 %492
    %496 = vset.pattern.permute.xlu0 0
    %497 = vperm.xlu0 %496, %v191
    %v498 = vpop.permute.xlu0 %497
    %501 = vset.pattern.permute.xlu0 0
    %502 = vperm.xlu0 %501, %v192
    %v503 = vpop.permute.xlu0 %502
    %506 = vset.pattern.permute.xlu0 0
    %507 = vperm.xlu0 %506, %v193
    %v508 = vpop.permute.xlu0 %507
    %511 = vset.pattern.permute.xlu0 0
    %512 = vperm.xlu0 %511, %v194
    %v513 = vpop.permute.xlu0 %512
    %516 = vset.pattern.permute.xlu0 0
    %517 = vperm.xlu0 %516, %v195
    %v518 = vpop.permute.xlu0 %517
    %521 = vset.pattern.permute.xlu0 0
    %522 = vperm.xlu0 %521, %v196
    %v523 = vpop.permute.xlu0 %522
    %526 = vset.pattern.permute.xlu0 0
    %527 = vperm.xlu0 %526, %v197
    %v528 = vpop.permute.xlu0 %527
    %531 = vset.pattern.permute.xlu0 0
    %532 = vperm.xlu0 %531, %v198
    %v533 = vpop.permute.xlu0 %532
    %536 = vset.pattern.permute.xlu0 0
    %537 = vperm.xlu0 %536, %v199
    %v538 = vpop.permute.xlu0 %537
    %541 = vset.pattern.permute.xlu0 0
    %542 = vperm.xlu0 %541, %v200
    %v543 = vpop.permute.xlu0 %542
    %546 = vset.pattern.permute.xlu0 0
    %547 = vperm.xlu0 %546, %v201
    %v548 = vpop.permute.xlu0 %547
    %551 = vset.pattern.permute.xlu0 0
    %552 = vperm.xlu0 %551, %v202
    %v553 = vpop.permute.xlu0 %552
    %556 = vset.pattern.permute.xlu0 0
    %557 = vperm.xlu0 %556, %v203
    %v558 = vpop.permute.xlu0 %557
    %561 = vset.pattern.permute.xlu0 0
    %562 = vperm.xlu0 %561, %v204
    %v563 = vpop.permute.xlu0 %562
    %566 = vset.pattern.permute.xlu0 0
    %567 = vperm.xlu0 %566, %v205
    %v568 = vpop.permute.xlu0 %567
    %571 = vset.pattern.permute.xlu0 0
    %572 = vperm.xlu0 %571, %v206
    %v573 = vpop.permute.xlu0 %572
    %576 = vset.pattern.permute.xlu0 0
    %577 = vperm.xlu0 %576, %v207
    %v578 = vpop.permute.xlu0 %577
    %581 = vset.pattern.permute.xlu0 0
    %582 = vperm.xlu0 %581, %v208
    %v583 = vpop.permute.xlu0 %582
    %586 = vset.pattern.permute.xlu0 0
    %587 = vperm.xlu0 %586, %v209
    %v588 = vpop.permute.xlu0 %587
    %591 = vset.pattern.permute.xlu0 0
    %592 = vperm.xlu0 %591, %v210
    %v593 = vpop.permute.xlu0 %592
    %596 = vset.pattern.permute.xlu0 0
    %597 = vperm.xlu0 %596, %v211
    %v598 = vpop.permute.xlu0 %597
    %601 = vset.pattern.permute.xlu0 0
    %602 = vperm.xlu0 %601, %v212
    %v603 = vpop.permute.xlu0 %602
    %606 = vset.pattern.permute.xlu0 0
    %607 = vperm.xlu0 %606, %v213
    %v608 = vpop.permute.xlu0 %607
    %611 = vset.pattern.permute.xlu0 0
    %612 = vperm.xlu0 %611, %v214
    %v613 = vpop.permute.xlu0 %612
    %616 = vset.pattern.permute.xlu0 0
    %617 = vperm.xlu0 %616, %v215
    %v618 = vpop.permute.xlu0 %617
    %621 = vset.pattern.permute.xlu0 0
    %622 = vperm.xlu0 %621, %v216
    %v623 = vpop.permute.xlu0 %622
    %626 = vset.pattern.permute.xlu0 0
    %627 = vperm.xlu0 %626, %v217
    %v628 = vpop.permute.xlu0 %627
    %631 = vset.pattern.permute.xlu0 0
    %632 = vperm.xlu0 %631, %v218
    %v633 = vpop.permute.xlu0 %632
    %636 = vset.pattern.permute.xlu0 0
    %637 = vperm.xlu0 %636, %v219
    %v638 = vpop.permute.xlu0 %637
    %641 = vset.pattern.permute.xlu0 0
    %642 = vperm.xlu0 %641, %v220
    %v643 = vpop.permute.xlu0 %642
    %646 = vset.pattern.permute.xlu0 0
    %647 = vperm.xlu0 %646, %v221
    %v648 = vpop.permute.xlu0 %647
    %651 = vset.pattern.permute.xlu0 0
    %652 = vperm.xlu0 %651, %v222
    %v653 = vpop.permute.xlu0 %652
    %656 = vset.pattern.permute.xlu0 0
    %657 = vperm.xlu0 %656, %v223
    %v658 = vpop.permute.xlu0 %657
    %661 = vset.pattern.permute.xlu0 0
    %662 = vperm.xlu0 %661, %v224
    %v663 = vpop.permute.xlu0 %662
    %666 = vset.pattern.permute.xlu0 0
    %667 = vperm.xlu0 %666, %v225
    %v668 = vpop.permute.xlu0 %667
    %671 = vset.pattern.permute.xlu0 0
    %672 = vperm.xlu0 %671, %v226
    %v673 = vpop.permute.xlu0 %672
    %676 = vset.pattern.permute.xlu0 0
    %677 = vperm.xlu0 %676, %v227
    %v678 = vpop.permute.xlu0 %677
    %681 = vset.pattern.permute.xlu0 0
    %682 = vperm.xlu0 %681, %v228
    %v683 = vpop.permute.xlu0 %682
    %686 = vset.pattern.permute.xlu0 0
    %687 = vperm.xlu0 %686, %v229
    %v688 = vpop.permute.xlu0 %687
    %691 = vset.pattern.permute.xlu0 0
    %692 = vperm.xlu0 %691, %v230
    %v693 = vpop.permute.xlu0 %692
    %696 = vset.pattern.permute.xlu0 0
    %697 = vperm.xlu0 %696, %v231
    %v698 = vpop.permute.xlu0 %697
    %701 = vset.pattern.permute.xlu0 0
    %702 = vperm.xlu0 %701, %v232
    %v703 = vpop.permute.xlu0 %702
    %706 = vset.pattern.permute.xlu0 0
    %707 = vperm.xlu0 %706, %v233
    %v708 = vpop.permute.xlu0 %707
    %711 = vset.pattern.permute.xlu0 0
    %712 = vperm.xlu0 %711, %v234
    %v713 = vpop.permute.xlu0 %712
    %vm715 = vcmask 261120
    %v717 = vsel %vm715, %v43, 0
    %v720 = vsel %vm715, %v44, 0
    %v723 = vsel %vm715, %v45, 0
    %v726 = vsel %vm715, %v46, 0
    %v729 = vsel %vm715, %v47, 0
    %v732 = vsel %vm715, %v48, 0
    %v735 = vsel %vm715, %v49, 0
    %v738 = vsel %vm715, %v50, 0
    %v741 = vsel %vm715, %v51, 0
    %v744 = vsel %vm715, %v52, 0
    %v747 = vsel %vm715, %v53, 0
    %v750 = vsel %vm715, %v54, 0
    %v753 = vsel %vm715, %v55, 0
    %v756 = vsel %vm715, %v56, 0
    %v759 = vsel %vm715, %v57, 0
    %v762 = vsel %vm715, %v58, 0
    %v765 = vsel %vm715, %v59, 0
    %v768 = vsel %vm715, %v60, 0
    %v771 = vsel %vm715, %v61, 0
    %v774 = vsel %vm715, %v62, 0
    %v777 = vsel %vm715, %v63, 0
    %v780 = vsel %vm715, %v64, 0
    %v783 = vsel %vm715, %v65, 0
    %v786 = vsel %vm715, %v66, 0
    %v789 = vsel %vm715, %v67, 0
    %v792 = vsel %vm715, %v68, 0
    %v795 = vsel %vm715, %v69, 0
    %v798 = vsel %vm715, %v70, 0
    %v801 = vsel %vm715, %v71, 0
    %v804 = vsel %vm715, %v72, 0
    %v807 = vsel %vm715, %v73, 0
    %v810 = vsel %vm715, %v74, 0
    %v813 = vsel %vm715, %v75, 0
    %v816 = vsel %vm715, %v76, 0
    %v819 = vsel %vm715, %v77, 0
    %v822 = vsel %vm715, %v78, 0
    %v825 = vsel %vm715, %v79, 0
    %v828 = vsel %vm715, %v80, 0
    %v831 = vsel %vm715, %v81, 0
    %v834 = vsel %vm715, %v82, 0
    %v837 = vsel %vm715, %v83, 0
    %v840 = vsel %vm715, %v84, 0
    %v843 = vsel %vm715, %v85, 0
    %v846 = vsel %vm715, %v86, 0
    %v849 = vsel %vm715, %v87, 0
    %v852 = vsel %vm715, %v88, 0
    %v855 = vsel %vm715, %v89, 0
    %v858 = vsel %vm715, %v90, 0
    %v861 = vsel %vm715, %v91, 0
    %v864 = vsel %vm715, %v92, 0
    %v867 = vsel %vm715, %v93, 0
    %v870 = vsel %vm715, %v94, 0
    %v873 = vsel %vm715, %v95, 0
    %v876 = vsel %vm715, %v96, 0
    %v879 = vsel %vm715, %v97, 0
    %v882 = vsel %vm715, %v98, 0
    %v885 = vsel %vm715, %v99, 0
    %v888 = vsel %vm715, %v100, 0
    %v891 = vsel %vm715, %v101, 0
    %v894 = vsel %vm715, %v102, 0
    %v897 = vsel %vm715, %v103, 0
    %v900 = vsel %vm715, %v104, 0
    %v903 = vsel %vm715, %v105, 0
    %v906 = vsel %vm715, %v106, 0
    %v909 = vsel %vm715, %v107, 0
    %v912 = vsel %vm715, %v108, 0
    %v915 = vsel %vm715, %v109, 0
    %v918 = vsel %vm715, %v110, 0
    %v921 = vsel %vm715, %v111, 0
    %v924 = vsel %vm715, %v112, 0
    %v927 = vsel %vm715, %v113, 0
    %v930 = vsel %vm715, %v114, 0
    %v933 = vsel %vm715, %v115, 0
    %v936 = vsel %vm715, %v116, 0
    %v939 = vsel %vm715, %v117, 0
    %v942 = vsel %vm715, %v118, 0
    %v945 = vsel %vm715, %v119, 0
    %v948 = vsel %vm715, %v120, 0
    %v951 = vsel %vm715, %v121, 0
    %v954 = vsel %vm715, %v122, 0
    %v957 = vsel %vm715, %v123, 0
    %v960 = vsel %vm715, %v124, 0
    %v963 = vsel %vm715, %v125, 0
    %v966 = vsel %vm715, %v126, 0
    %v969 = vsel %vm715, %v127, 0
    %v972 = vsel %vm715, %v128, 0
    %v975 = vsel %vm715, %v129, 0
    %v978 = vsel %vm715, %v130, 0
    %v981 = vsel %vm715, %v131, 0
    %v984 = vsel %vm715, %v132, 0
    %v987 = vsel %vm715, %v133, 0
    %v990 = vsel %vm715, %v134, 0
    %v993 = vsel %vm715, %v135, 0
    %v996 = vsel %vm715, %v136, 0
    %v999 = vsel %vm715, %v137, 0
    %v1002 = vsel %vm715, %v138, 0
    %v1005 = vsel %vm715, %v27, 0
    %v1008 = vsel %vm715, %v28, 0
    %v1011 = vsel %vm715, %v29, 0
    %v1014 = vsel %vm715, %v30, 0
    %v1017 = vsel %vm715, %v31, 0
    %v1020 = vsel %vm715, %v32, 0
    %v1023 = vsel %vm715, %v33, 0
    %v1026 = vsel %vm715, %v34, 0
    %v1029 = vsel %vm715, %v35, 0
    %v1032 = vsel %vm715, %v36, 0
    %v1035 = vsel %vm715, %v37, 0
    %v1038 = vsel %vm715, %v38, 0
    %v1041 = vsel %vm715, %v39, 0
    %v1044 = vsel %vm715, %v40, 0
    %v1047 = vsel %vm715, %v41, 0
    %v1050 = vsel %vm715, %v42, 0
    %1052 = vmatprep.subr.mxu0 0.0
    %1053 = vmatpush1.xpose.msra.mxu0 %v1050
    %1054 = vmatprep.subr.mxu0 0.0
    %1055 = vmatpush1.xpose.msra.mxu0 %v1047
    %1056 = vmatprep.subr.mxu0 0.0
    %1057 = vmatpush1.xpose.msra.mxu0 %v1044
    %1058 = vmatprep.subr.mxu0 0.0
    %1059 = vmatpush1.xpose.msra.mxu0 %v1041
    %1060 = vmatprep.subr.mxu0 0.0
    %1061 = vmatpush1.xpose.msra.mxu0 %v1038
    %1062 = vmatprep.subr.mxu0 0.0
    %1063 = vmatpush1.xpose.msra.mxu0 %v1035
    %1064 = vmatprep.subr.mxu0 0.0
    %1065 = vmatpush1.xpose.msra.mxu0 %v1032
    %1066 = vmatprep.subr.mxu0 0.0
    %1067 = vmatpush1.xpose.msra.mxu0 %v1029
    %1068 = vmatprep.subr.mxu0 0.0
    %1069 = vmatpush1.xpose.msra.mxu0 %v1026
    %1070 = vmatprep.subr.mxu0 0.0
    %1071 = vmatpush1.xpose.msra.mxu0 %v1023
    %1072 = vmatprep.subr.mxu0 0.0
    %1073 = vmatpush1.xpose.msra.mxu0 %v1020
    %1074 = vmatprep.subr.mxu0 0.0
    %1075 = vmatpush1.xpose.msra.mxu0 %v1017
    %1076 = vmatprep.subr.mxu0 0.0
    %1077 = vmatpush1.xpose.msra.mxu0 %v1014
    %1078 = vmatprep.subr.mxu0 0.0
    %1079 = vmatpush1.xpose.msra.mxu0 %v1011
    %1080 = vmatprep.subr.mxu0 0.0
    %1081 = vmatpush1.xpose.msra.mxu0 %v1008
    %1082 = vmatprep.subr.mxu0 0.0
    %1083 = vmatpush1.xpose.msra.mxu0 %v1005
    %1084 = vmatprep.subr.mxu0 0.0
    %1085 = vmatpush2.xpose.msra.mxu0 0.0
    %1086 = vmatprep.subr.mxu0 0.0
    %1087 = vmatpush2.xpose.msra.mxu0 0.0
    %1088 = vmatprep.subr.mxu0 0.0
    %1089 = vmatpush2.xpose.msra.mxu0 0.0
    %1090 = vmatprep.subr.mxu0 0.0
    %1091 = vmatpush2.xpose.msra.mxu0 0.0
    %1092 = vmatprep.subr.mxu0 0.0
    %1093 = vmatpush2.xpose.msra.mxu0 0.0
    %1094 = vmatprep.subr.mxu0 0.0
    %1095 = vmatpush2.xpose.msra.mxu0 0.0
    %1096 = vmatprep.subr.mxu0 0.0
    %1097 = vmatpush2.xpose.msra.mxu0 0.0
    %1098 = vmatprep.subr.mxu0 0.0
    %1099 = vmatpush2.xpose.msra.mxu0 0.0
    %1100 = vmatprep.subr.mxu0 0.0
    %1101 = vmatpush2.xpose.msra.mxu0 0.0
    %1102 = vmatprep.subr.mxu0 0.0
    %1103 = vmatpush2.xpose.msra.mxu0 0.0
    %1104 = vmatprep.subr.mxu0 0.0
    %1105 = vmatpush2.xpose.msra.mxu0 0.0
    %1106 = vmatprep.subr.mxu0 0.0
    %1107 = vmatpush2.xpose.msra.mxu0 0.0
    %1108 = vmatprep.subr.mxu0 0.0
    %1109 = vmatpush2.xpose.msra.mxu0 0.0
    %1110 = vmatprep.subr.mxu0 0.0
    %1111 = vmatpush2.xpose.msra.mxu0 0.0
    %1112 = vmatprep.subr.mxu0 0.0
    %1113 = vmatpush2.xpose.msra.mxu0 0.0
    %1114 = vmatprep.subr.mxu0 0.0
    %1115 = vmatpush2.xpose.msra.mxu0 0.0
    %1116 = vmatprep.mubr.f32.mxu0 0.0
    %1117 = vmatmul.mubr.f32.gmra.mxu0 %v717
    %v1118 = vpop.f32.mrf.mxu0
    %v1119 = vadd.f32 %v238, %v1118
    %v1120 = vpop.f32.mrf.mxu0
    %1121 = vmatprep.mubr.f32.mxu0 0.0
    %1122 = vmatmul.mubr.f32.gmra.mxu0 %v720
    %v1123 = vpop.f32.mrf.mxu0
    %v1124 = vadd.f32 %v243, %v1123
    %v1125 = vpop.f32.mrf.mxu0
    %1126 = vmatprep.mubr.f32.mxu0 0.0
    %1127 = vmatmul.mubr.f32.gmra.mxu0 %v723
    %v1128 = vpop.f32.mrf.mxu0
    %v1129 = vadd.f32 %v248, %v1128
    %v1130 = vpop.f32.mrf.mxu0
    %1131 = vmatprep.mubr.f32.mxu0 0.0
    %1132 = vmatmul.mubr.f32.gmra.mxu0 %v726
    %v1133 = vpop.f32.mrf.mxu0
    %v1134 = vadd.f32 %v253, %v1133
    %v1135 = vpop.f32.mrf.mxu0
    %1136 = vmatprep.mubr.f32.mxu0 0.0
    %1137 = vmatmul.mubr.f32.gmra.mxu0 %v729
    %v1138 = vpop.f32.mrf.mxu0
    %v1139 = vadd.f32 %v258, %v1138
    %v1140 = vpop.f32.mrf.mxu0
    %1141 = vmatprep.mubr.f32.mxu0 0.0
    %1142 = vmatmul.mubr.f32.gmra.mxu0 %v732
    %v1143 = vpop.f32.mrf.mxu0
    %v1144 = vadd.f32 %v263, %v1143
    %v1145 = vpop.f32.mrf.mxu0
    %1146 = vmatprep.mubr.f32.mxu0 0.0
    %1147 = vmatmul.mubr.f32.gmra.mxu0 %v735
    %v1148 = vpop.f32.mrf.mxu0
    %v1149 = vadd.f32 %v268, %v1148
    %v1150 = vpop.f32.mrf.mxu0
    %1151 = vmatprep.mubr.f32.mxu0 0.0
    %1152 = vmatmul.mubr.f32.gmra.mxu0 %v738
    %v1153 = vpop.f32.mrf.mxu0
    %v1154 = vadd.f32 %v273, %v1153
    %v1155 = vpop.f32.mrf.mxu0
    %1156 = vmatprep.mubr.f32.mxu0 0.0
    %1157 = vmatmul.mubr.f32.gmra.mxu0 %v741
    %v1158 = vpop.f32.mrf.mxu0
    %v1159 = vadd.f32 %v278, %v1158
    %v1160 = vpop.f32.mrf.mxu0
    %1161 = vmatprep.mubr.f32.mxu0 0.0
    %1162 = vmatmul.mubr.f32.gmra.mxu0 %v744
    %v1163 = vpop.f32.mrf.mxu0
    %v1164 = vadd.f32 %v283, %v1163
    %v1165 = vpop.f32.mrf.mxu0
    %1166 = vmatprep.mubr.f32.mxu0 0.0
    %1167 = vmatmul.mubr.f32.gmra.mxu0 %v747
    %v1168 = vpop.f32.mrf.mxu0
    %v1169 = vadd.f32 %v288, %v1168
    %v1170 = vpop.f32.mrf.mxu0
    %1171 = vmatprep.mubr.f32.mxu0 0.0
    %1172 = vmatmul.mubr.f32.gmra.mxu0 %v750
    %v1173 = vpop.f32.mrf.mxu0
    %v1174 = vadd.f32 %v293, %v1173
    %v1175 = vpop.f32.mrf.mxu0
    %1176 = vmatprep.mubr.f32.mxu0 0.0
    %1177 = vmatmul.mubr.f32.gmra.mxu0 %v753
    %v1178 = vpop.f32.mrf.mxu0
    %v1179 = vadd.f32 %v298, %v1178
    %v1180 = vpop.f32.mrf.mxu0
    %1181 = vmatprep.mubr.f32.mxu0 0.0
    %1182 = vmatmul.mubr.f32.gmra.mxu0 %v756
    %v1183 = vpop.f32.mrf.mxu0
    %v1184 = vadd.f32 %v303, %v1183
    %v1185 = vpop.f32.mrf.mxu0
    %1186 = vmatprep.mubr.f32.mxu0 0.0
    %1187 = vmatmul.mubr.f32.gmra.mxu0 %v759
    %v1188 = vpop.f32.mrf.mxu0
    %v1189 = vadd.f32 %v308, %v1188
    %v1190 = vpop.f32.mrf.mxu0
    %1191 = vmatprep.mubr.f32.mxu0 0.0
    %1192 = vmatmul.mubr.f32.gmra.mxu0 %v762
    %v1193 = vpop.f32.mrf.mxu0
    %v1194 = vadd.f32 %v313, %v1193
    %v1195 = vpop.f32.mrf.mxu0
    %1196 = vmatprep.mubr.f32.mxu0 0.0
    %1197 = vmatmul.mubr.f32.gmra.mxu0 %v765
    %v1198 = vpop.f32.mrf.mxu0
    %v1199 = vadd.f32 %v318, %v1198
    %v1200 = vpop.f32.mrf.mxu0
    %1201 = vmatprep.mubr.f32.mxu0 0.0
    %1202 = vmatmul.mubr.f32.gmra.mxu0 %v768
    %v1203 = vpop.f32.mrf.mxu0
    %v1204 = vadd.f32 %v323, %v1203
    %v1205 = vpop.f32.mrf.mxu0
    %1206 = vmatprep.mubr.f32.mxu0 0.0
    %1207 = vmatmul.mubr.f32.gmra.mxu0 %v771
    %v1208 = vpop.f32.mrf.mxu0
    %v1209 = vadd.f32 %v328, %v1208
    %v1210 = vpop.f32.mrf.mxu0
    %1211 = vmatprep.mubr.f32.mxu0 0.0
    %1212 = vmatmul.mubr.f32.gmra.mxu0 %v774
    %v1213 = vpop.f32.mrf.mxu0
    %v1214 = vadd.f32 %v333, %v1213
    %v1215 = vpop.f32.mrf.mxu0
    %1216 = vmatprep.mubr.f32.mxu0 0.0
    %1217 = vmatmul.mubr.f32.gmra.mxu0 %v777
    %v1218 = vpop.f32.mrf.mxu0
    %v1219 = vadd.f32 %v338, %v1218
    %v1220 = vpop.f32.mrf.mxu0
    %1221 = vmatprep.mubr.f32.mxu0 0.0
    %1222 = vmatmul.mubr.f32.gmra.mxu0 %v780
    %v1223 = vpop.f32.mrf.mxu0
    %v1224 = vadd.f32 %v343, %v1223
    %v1225 = vpop.f32.mrf.mxu0
    %1226 = vmatprep.mubr.f32.mxu0 0.0
    %1227 = vmatmul.mubr.f32.gmra.mxu0 %v783
    %v1228 = vpop.f32.mrf.mxu0
    %v1229 = vadd.f32 %v348, %v1228
    %v1230 = vpop.f32.mrf.mxu0
    %1231 = vmatprep.mubr.f32.mxu0 0.0
    %1232 = vmatmul.mubr.f32.gmra.mxu0 %v786
    %v1233 = vpop.f32.mrf.mxu0
    %v1234 = vadd.f32 %v353, %v1233
    %v1235 = vpop.f32.mrf.mxu0
    %1236 = vmatprep.mubr.f32.mxu0 0.0
    %1237 = vmatmul.mubr.f32.gmra.mxu0 %v789
    %v1238 = vpop.f32.mrf.mxu0
    %v1239 = vadd.f32 %v358, %v1238
    %v1240 = vpop.f32.mrf.mxu0
    %1241 = vmatprep.mubr.f32.mxu0 0.0
    %1242 = vmatmul.mubr.f32.gmra.mxu0 %v792
    %v1243 = vpop.f32.mrf.mxu0
    %v1244 = vadd.f32 %v363, %v1243
    %v1245 = vpop.f32.mrf.mxu0
    %1246 = vmatprep.mubr.f32.mxu0 0.0
    %1247 = vmatmul.mubr.f32.gmra.mxu0 %v795
    %v1248 = vpop.f32.mrf.mxu0
    %v1249 = vadd.f32 %v368, %v1248
    %v1250 = vpop.f32.mrf.mxu0
    %1251 = vmatprep.mubr.f32.mxu0 0.0
    %1252 = vmatmul.mubr.f32.gmra.mxu0 %v798
    %v1253 = vpop.f32.mrf.mxu0
    %v1254 = vadd.f32 %v373, %v1253
    %v1255 = vpop.f32.mrf.mxu0
    %1256 = vmatprep.mubr.f32.mxu0 0.0
    %1257 = vmatmul.mubr.f32.gmra.mxu0 %v801
    %v1258 = vpop.f32.mrf.mxu0
    %v1259 = vadd.f32 %v378, %v1258
    %v1260 = vpop.f32.mrf.mxu0
    %1261 = vmatprep.mubr.f32.mxu0 0.0
    %1262 = vmatmul.mubr.f32.gmra.mxu0 %v804
    %v1263 = vpop.f32.mrf.mxu0
    %v1264 = vadd.f32 %v383, %v1263
    %v1265 = vpop.f32.mrf.mxu0
    %1266 = vmatprep.mubr.f32.mxu0 0.0
    %1267 = vmatmul.mubr.f32.gmra.mxu0 %v807
    %v1268 = vpop.f32.mrf.mxu0
    %v1269 = vadd.f32 %v388, %v1268
    %v1270 = vpop.f32.mrf.mxu0
    %1271 = vmatprep.mubr.f32.mxu0 0.0
    %1272 = vmatmul.mubr.f32.gmra.mxu0 %v810
    %v1273 = vpop.f32.mrf.mxu0
    %v1274 = vadd.f32 %v393, %v1273
    %v1275 = vpop.f32.mrf.mxu0
    %1276 = vmatprep.mubr.f32.mxu0 0.0
    %1277 = vmatmul.mubr.f32.gmra.mxu0 %v813
    %v1278 = vpop.f32.mrf.mxu0
    %v1279 = vadd.f32 %v398, %v1278
    %v1280 = vpop.f32.mrf.mxu0
    %1281 = vmatprep.mubr.f32.mxu0 0.0
    %1282 = vmatmul.mubr.f32.gmra.mxu0 %v816
    %v1283 = vpop.f32.mrf.mxu0
    %v1284 = vadd.f32 %v403, %v1283
    %v1285 = vpop.f32.mrf.mxu0
    %1286 = vmatprep.mubr.f32.mxu0 0.0
    %1287 = vmatmul.mubr.f32.gmra.mxu0 %v819
    %v1288 = vpop.f32.mrf.mxu0
    %v1289 = vadd.f32 %v408, %v1288
    %v1290 = vpop.f32.mrf.mxu0
    %1291 = vmatprep.mubr.f32.mxu0 0.0
    %1292 = vmatmul.mubr.f32.gmra.mxu0 %v822
    %v1293 = vpop.f32.mrf.mxu0
    %v1294 = vadd.f32 %v413, %v1293
    %v1295 = vpop.f32.mrf.mxu0
    %1296 = vmatprep.mubr.f32.mxu0 0.0
    %1297 = vmatmul.mubr.f32.gmra.mxu0 %v825
    %v1298 = vpop.f32.mrf.mxu0
    %v1299 = vadd.f32 %v418, %v1298
    %v1300 = vpop.f32.mrf.mxu0
    %1301 = vmatprep.mubr.f32.mxu0 0.0
    %1302 = vmatmul.mubr.f32.gmra.mxu0 %v828
    %v1303 = vpop.f32.mrf.mxu0
    %v1304 = vadd.f32 %v423, %v1303
    %v1305 = vpop.f32.mrf.mxu0
    %1306 = vmatprep.mubr.f32.mxu0 0.0
    %1307 = vmatmul.mubr.f32.gmra.mxu0 %v831
    %v1308 = vpop.f32.mrf.mxu0
    %v1309 = vadd.f32 %v428, %v1308
    %v1310 = vpop.f32.mrf.mxu0
    %1311 = vmatprep.mubr.f32.mxu0 0.0
    %1312 = vmatmul.mubr.f32.gmra.mxu0 %v834
    %v1313 = vpop.f32.mrf.mxu0
    %v1314 = vadd.f32 %v433, %v1313
    %v1315 = vpop.f32.mrf.mxu0
    %1316 = vmatprep.mubr.f32.mxu0 0.0
    %1317 = vmatmul.mubr.f32.gmra.mxu0 %v837
    %v1318 = vpop.f32.mrf.mxu0
    %v1319 = vadd.f32 %v438, %v1318
    %v1320 = vpop.f32.mrf.mxu0
    %1321 = vmatprep.mubr.f32.mxu0 0.0
    %1322 = vmatmul.mubr.f32.gmra.mxu0 %v840
    %v1323 = vpop.f32.mrf.mxu0
    %v1324 = vadd.f32 %v443, %v1323
    %v1325 = vpop.f32.mrf.mxu0
    %1326 = vmatprep.mubr.f32.mxu0 0.0
    %1327 = vmatmul.mubr.f32.gmra.mxu0 %v843
    %v1328 = vpop.f32.mrf.mxu0
    %v1329 = vadd.f32 %v448, %v1328
    %v1330 = vpop.f32.mrf.mxu0
    %1331 = vmatprep.mubr.f32.mxu0 0.0
    %1332 = vmatmul.mubr.f32.gmra.mxu0 %v846
    %v1333 = vpop.f32.mrf.mxu0
    %v1334 = vadd.f32 %v453, %v1333
    %v1335 = vpop.f32.mrf.mxu0
    %1336 = vmatprep.mubr.f32.mxu0 0.0
    %1337 = vmatmul.mubr.f32.gmra.mxu0 %v849
    %v1338 = vpop.f32.mrf.mxu0
    %v1339 = vadd.f32 %v458, %v1338
    %v1340 = vpop.f32.mrf.mxu0
    %1341 = vmatprep.mubr.f32.mxu0 0.0
    %1342 = vmatmul.mubr.f32.gmra.mxu0 %v852
    %v1343 = vpop.f32.mrf.mxu0
    %v1344 = vadd.f32 %v463, %v1343
    %v1345 = vpop.f32.mrf.mxu0
    %1346 = vmatprep.mubr.f32.mxu0 0.0
    %1347 = vmatmul.mubr.f32.gmra.mxu0 %v855
    %v1348 = vpop.f32.mrf.mxu0
    %v1349 = vadd.f32 %v468, %v1348
    %v1350 = vpop.f32.mrf.mxu0
    %1351 = vmatprep.mubr.f32.mxu0 0.0
    %1352 = vmatmul.mubr.f32.gmra.mxu0 %v858
    %v1353 = vpop.f32.mrf.mxu0
    %v1354 = vadd.f32 %v473, %v1353
    %v1355 = vpop.f32.mrf.mxu0
    %1356 = vmatprep.mubr.f32.mxu0 0.0
    %1357 = vmatmul.mubr.f32.gmra.mxu0 %v861
    %v1358 = vpop.f32.mrf.mxu0
    %v1359 = vadd.f32 %v478, %v1358
    %v1360 = vpop.f32.mrf.mxu0
    %1361 = vmatprep.mubr.f32.mxu0 0.0
    %1362 = vmatmul.mubr.f32.gmra.mxu0 %v864
    %v1363 = vpop.f32.mrf.mxu0
    %v1364 = vadd.f32 %v483, %v1363
    %v1365 = vpop.f32.mrf.mxu0
    %1366 = vmatprep.mubr.f32.mxu0 0.0
    %1367 = vmatmul.mubr.f32.gmra.mxu0 %v867
    %v1368 = vpop.f32.mrf.mxu0
    %v1369 = vadd.f32 %v488, %v1368
    %v1370 = vpop.f32.mrf.mxu0
    %1371 = vmatprep.mubr.f32.mxu0 0.0
    %1372 = vmatmul.mubr.f32.gmra.mxu0 %v870
    %v1373 = vpop.f32.mrf.mxu0
    %v1374 = vadd.f32 %v493, %v1373
    %v1375 = vpop.f32.mrf.mxu0
    %1376 = vmatprep.mubr.f32.mxu0 0.0
    %1377 = vmatmul.mubr.f32.gmra.mxu0 %v873
    %v1378 = vpop.f32.mrf.mxu0
    %v1379 = vadd.f32 %v498, %v1378
    %v1380 = vpop.f32.mrf.mxu0
    %1381 = vmatprep.mubr.f32.mxu0 0.0
    %1382 = vmatmul.mubr.f32.gmra.mxu0 %v876
    %v1383 = vpop.f32.mrf.mxu0
    %v1384 = vadd.f32 %v503, %v1383
    %v1385 = vpop.f32.mrf.mxu0
    %1386 = vmatprep.mubr.f32.mxu0 0.0
    %1387 = vmatmul.mubr.f32.gmra.mxu0 %v879
    %v1388 = vpop.f32.mrf.mxu0
    %v1389 = vadd.f32 %v508, %v1388
    %v1390 = vpop.f32.mrf.mxu0
    %1391 = vmatprep.mubr.f32.mxu0 0.0
    %1392 = vmatmul.mubr.f32.gmra.mxu0 %v882
    %v1393 = vpop.f32.mrf.mxu0
    %v1394 = vadd.f32 %v513, %v1393
    %v1395 = vpop.f32.mrf.mxu0
    %1396 = vmatprep.mubr.f32.mxu0 0.0
    %1397 = vmatmul.mubr.f32.gmra.mxu0 %v885
    %v1398 = vpop.f32.mrf.mxu0
    %v1399 = vadd.f32 %v518, %v1398
    %v1400 = vpop.f32.mrf.mxu0
    %1401 = vmatprep.mubr.f32.mxu0 0.0
    %1402 = vmatmul.mubr.f32.gmra.mxu0 %v888
    %v1403 = vpop.f32.mrf.mxu0
    %v1404 = vadd.f32 %v523, %v1403
    %v1405 = vpop.f32.mrf.mxu0
    %1406 = vmatprep.mubr.f32.mxu0 0.0
    %1407 = vmatmul.mubr.f32.gmra.mxu0 %v891
    %v1408 = vpop.f32.mrf.mxu0
    %v1409 = vadd.f32 %v528, %v1408
    %v1410 = vpop.f32.mrf.mxu0
    %1411 = vmatprep.mubr.f32.mxu0 0.0
    %1412 = vmatmul.mubr.f32.gmra.mxu0 %v894
    %v1413 = vpop.f32.mrf.mxu0
    %v1414 = vadd.f32 %v533, %v1413
    %v1415 = vpop.f32.mrf.mxu0
    %1416 = vmatprep.mubr.f32.mxu0 0.0
    %1417 = vmatmul.mubr.f32.gmra.mxu0 %v897
    %v1418 = vpop.f32.mrf.mxu0
    %v1419 = vadd.f32 %v538, %v1418
    %v1420 = vpop.f32.mrf.mxu0
    %1421 = vmatprep.mubr.f32.mxu0 0.0
    %1422 = vmatmul.mubr.f32.gmra.mxu0 %v900
    %v1423 = vpop.f32.mrf.mxu0
    %v1424 = vadd.f32 %v543, %v1423
    %v1425 = vpop.f32.mrf.mxu0
    %1426 = vmatprep.mubr.f32.mxu0 0.0
    %1427 = vmatmul.mubr.f32.gmra.mxu0 %v903
    %v1428 = vpop.f32.mrf.mxu0
    %v1429 = vadd.f32 %v548, %v1428
    %v1430 = vpop.f32.mrf.mxu0
    %1431 = vmatprep.mubr.f32.mxu0 0.0
    %1432 = vmatmul.mubr.f32.gmra.mxu0 %v906
    %v1433 = vpop.f32.mrf.mxu0
    %v1434 = vadd.f32 %v553, %v1433
    %v1435 = vpop.f32.mrf.mxu0
    %1436 = vmatprep.mubr.f32.mxu0 0.0
    %1437 = vmatmul.mubr.f32.gmra.mxu0 %v909
    %v1438 = vpop.f32.mrf.mxu0
    %v1439 = vadd.f32 %v558, %v1438
    %v1440 = vpop.f32.mrf.mxu0
    %1441 = vmatprep.mubr.f32.mxu0 0.0
    %1442 = vmatmul.mubr.f32.gmra.mxu0 %v912
    %v1443 = vpop.f32.mrf.mxu0
    %v1444 = vadd.f32 %v563, %v1443
    %v1445 = vpop.f32.mrf.mxu0
    %1446 = vmatprep.mubr.f32.mxu0 0.0
    %1447 = vmatmul.mubr.f32.gmra.mxu0 %v915
    %v1448 = vpop.f32.mrf.mxu0
    %v1449 = vadd.f32 %v568, %v1448
    %v1450 = vpop.f32.mrf.mxu0
    %1451 = vmatprep.mubr.f32.mxu0 0.0
    %1452 = vmatmul.mubr.f32.gmra.mxu0 %v918
    %v1453 = vpop.f32.mrf.mxu0
    %v1454 = vadd.f32 %v573, %v1453
    %v1455 = vpop.f32.mrf.mxu0
    %1456 = vmatprep.mubr.f32.mxu0 0.0
    %1457 = vmatmul.mubr.f32.gmra.mxu0 %v921
    %v1458 = vpop.f32.mrf.mxu0
    %v1459 = vadd.f32 %v578, %v1458
    %v1460 = vpop.f32.mrf.mxu0
    %1461 = vmatprep.mubr.f32.mxu0 0.0
    %1462 = vmatmul.mubr.f32.gmra.mxu0 %v924
    %v1463 = vpop.f32.mrf.mxu0
    %v1464 = vadd.f32 %v583, %v1463
    %v1465 = vpop.f32.mrf.mxu0
    %1466 = vmatprep.mubr.f32.mxu0 0.0
    %1467 = vmatmul.mubr.f32.gmra.mxu0 %v927
    %v1468 = vpop.f32.mrf.mxu0
    %v1469 = vadd.f32 %v588, %v1468
    %v1470 = vpop.f32.mrf.mxu0
    %1471 = vmatprep.mubr.f32.mxu0 0.0
    %1472 = vmatmul.mubr.f32.gmra.mxu0 %v930
    %v1473 = vpop.f32.mrf.mxu0
    %v1474 = vadd.f32 %v593, %v1473
    %v1475 = vpop.f32.mrf.mxu0
    %1476 = vmatprep.mubr.f32.mxu0 0.0
    %1477 = vmatmul.mubr.f32.gmra.mxu0 %v933
    %v1478 = vpop.f32.mrf.mxu0
    %v1479 = vadd.f32 %v598, %v1478
    %v1480 = vpop.f32.mrf.mxu0
    %1481 = vmatprep.mubr.f32.mxu0 0.0
    %1482 = vmatmul.mubr.f32.gmra.mxu0 %v936
    %v1483 = vpop.f32.mrf.mxu0
    %v1484 = vadd.f32 %v603, %v1483
    %v1485 = vpop.f32.mrf.mxu0
    %1486 = vmatprep.mubr.f32.mxu0 0.0
    %1487 = vmatmul.mubr.f32.gmra.mxu0 %v939
    %v1488 = vpop.f32.mrf.mxu0
    %v1489 = vadd.f32 %v608, %v1488
    %v1490 = vpop.f32.mrf.mxu0
    %1491 = vmatprep.mubr.f32.mxu0 0.0
    %1492 = vmatmul.mubr.f32.gmra.mxu0 %v942
    %v1493 = vpop.f32.mrf.mxu0
    %v1494 = vadd.f32 %v613, %v1493
    %v1495 = vpop.f32.mrf.mxu0
    %1496 = vmatprep.mubr.f32.mxu0 0.0
    %1497 = vmatmul.mubr.f32.gmra.mxu0 %v945
    %v1498 = vpop.f32.mrf.mxu0
    %v1499 = vadd.f32 %v618, %v1498
    %v1500 = vpop.f32.mrf.mxu0
    %1501 = vmatprep.mubr.f32.mxu0 0.0
    %1502 = vmatmul.mubr.f32.gmra.mxu0 %v948
    %v1503 = vpop.f32.mrf.mxu0
    %v1504 = vadd.f32 %v623, %v1503
    %v1505 = vpop.f32.mrf.mxu0
    %1506 = vmatprep.mubr.f32.mxu0 0.0
    %1507 = vmatmul.mubr.f32.gmra.mxu0 %v951
    %v1508 = vpop.f32.mrf.mxu0
    %v1509 = vadd.f32 %v628, %v1508
    %v1510 = vpop.f32.mrf.mxu0
    %1511 = vmatprep.mubr.f32.mxu0 0.0
    %1512 = vmatmul.mubr.f32.gmra.mxu0 %v954
    %v1513 = vpop.f32.mrf.mxu0
    %v1514 = vadd.f32 %v633, %v1513
    %v1515 = vpop.f32.mrf.mxu0
    %1516 = vmatprep.mubr.f32.mxu0 0.0
    %1517 = vmatmul.mubr.f32.gmra.mxu0 %v957
    %v1518 = vpop.f32.mrf.mxu0
    %v1519 = vadd.f32 %v638, %v1518
    %v1520 = vpop.f32.mrf.mxu0
    %1521 = vmatprep.mubr.f32.mxu0 0.0
    %1522 = vmatmul.mubr.f32.gmra.mxu0 %v960
    %v1523 = vpop.f32.mrf.mxu0
    %v1524 = vadd.f32 %v643, %v1523
    %v1525 = vpop.f32.mrf.mxu0
    %1526 = vmatprep.mubr.f32.mxu0 0.0
    %1527 = vmatmul.mubr.f32.gmra.mxu0 %v963
    %v1528 = vpop.f32.mrf.mxu0
    %v1529 = vadd.f32 %v648, %v1528
    %v1530 = vpop.f32.mrf.mxu0
    %1531 = vmatprep.mubr.f32.mxu0 0.0
    %1532 = vmatmul.mubr.f32.gmra.mxu0 %v966
    %v1533 = vpop.f32.mrf.mxu0
    %v1534 = vadd.f32 %v653, %v1533
    %v1535 = vpop.f32.mrf.mxu0
    %1536 = vmatprep.mubr.f32.mxu0 0.0
    %1537 = vmatmul.mubr.f32.gmra.mxu0 %v969
    %v1538 = vpop.f32.mrf.mxu0
    %v1539 = vadd.f32 %v658, %v1538
    %v1540 = vpop.f32.mrf.mxu0
    %1541 = vmatprep.mubr.f32.mxu0 0.0
    %1542 = vmatmul.mubr.f32.gmra.mxu0 %v972
    %v1543 = vpop.f32.mrf.mxu0
    %v1544 = vadd.f32 %v663, %v1543
    %v1545 = vpop.f32.mrf.mxu0
    %1546 = vmatprep.mubr.f32.mxu0 0.0
    %1547 = vmatmul.mubr.f32.gmra.mxu0 %v975
    %v1548 = vpop.f32.mrf.mxu0
    %v1549 = vadd.f32 %v668, %v1548
    %v1550 = vpop.f32.mrf.mxu0
    %1551 = vmatprep.mubr.f32.mxu0 0.0
    %1552 = vmatmul.mubr.f32.gmra.mxu0 %v978
    %v1553 = vpop.f32.mrf.mxu0
    %v1554 = vadd.f32 %v673, %v1553
    %v1555 = vpop.f32.mrf.mxu0
    %1556 = vmatprep.mubr.f32.mxu0 0.0
    %1557 = vmatmul.mubr.f32.gmra.mxu0 %v981
    %v1558 = vpop.f32.mrf.mxu0
    %v1559 = vadd.f32 %v678, %v1558
    %v1560 = vpop.f32.mrf.mxu0
    %1561 = vmatprep.mubr.f32.mxu0 0.0
    %1562 = vmatmul.mubr.f32.gmra.mxu0 %v984
    %v1563 = vpop.f32.mrf.mxu0
    %v1564 = vadd.f32 %v683, %v1563
    %v1565 = vpop.f32.mrf.mxu0
    %1566 = vmatprep.mubr.f32.mxu0 0.0
    %1567 = vmatmul.mubr.f32.gmra.mxu0 %v987
    %v1568 = vpop.f32.mrf.mxu0
    %v1569 = vadd.f32 %v688, %v1568
    %v1570 = vpop.f32.mrf.mxu0
    %1571 = vmatprep.mubr.f32.mxu0 0.0
    %1572 = vmatmul.mubr.f32.gmra.mxu0 %v990
    %v1573 = vpop.f32.mrf.mxu0
    %v1574 = vadd.f32 %v693, %v1573
    %v1575 = vpop.f32.mrf.mxu0
    %1576 = vmatprep.mubr.f32.mxu0 0.0
    %1577 = vmatmul.mubr.f32.gmra.mxu0 %v993
    %v1578 = vpop.f32.mrf.mxu0
    %v1579 = vadd.f32 %v698, %v1578
    %v1580 = vpop.f32.mrf.mxu0
    %1581 = vmatprep.mubr.f32.mxu0 0.0
    %1582 = vmatmul.mubr.f32.gmra.mxu0 %v996
    %v1583 = vpop.f32.mrf.mxu0
    %v1584 = vadd.f32 %v703, %v1583
    %v1585 = vpop.f32.mrf.mxu0
    %1586 = vmatprep.mubr.f32.mxu0 0.0
    %1587 = vmatmul.mubr.f32.gmra.mxu0 %v999
    %v1588 = vpop.f32.mrf.mxu0
    %v1589 = vadd.f32 %v708, %v1588
    %v1590 = vpop.f32.mrf.mxu0
    %1591 = vmatprep.mubr.f32.mxu0 0.0
    %1592 = vmatmul.mubr.f32.gmra.mxu0 %v1002
    %v1593 = vpop.f32.mrf.mxu0
    %v1594 = vadd.f32 %v713, %v1593
    %v1595 = vpop.f32.mrf.mxu0
    %1596 = vdwg.mxu0
    %1597 = vst [vmem:[#allocation2] sm:$0xff] %v1119
    %1598 = vst [vmem:[#allocation2 + $0x8] sm:$0xff] %v1124
    %1599 = vst [vmem:[#allocation2 + $0x10] sm:$0xff] %v1129
    %1600 = vst [vmem:[#allocation2 + $0x18] sm:$0xff] %v1134
    %1601 = vst [vmem:[#allocation2 + $0x20] sm:$0xff] %v1139
    %1602 = vst [vmem:[#allocation2 + $0x28] sm:$0xff] %v1144
    %1603 = vst [vmem:[#allocation2 + $0x30] sm:$0xff] %v1149
    %1604 = vst [vmem:[#allocation2 + $0x38] sm:$0xff] %v1154
    %1605 = vst [vmem:[#allocation2 + $0x40] sm:$0xff] %v1159
    %1606 = vst [vmem:[#allocation2 + $0x48] sm:$0xff] %v1164
    %1607 = vst [vmem:[#allocation2 + $0x50] sm:$0xff] %v1169
    %1608 = vst [vmem:[#allocation2 + $0x58] sm:$0xff] %v1174
    %1609 = vst [vmem:[#allocation2 + $0x60] sm:$0xff] %v1179
    %1610 = vst [vmem:[#allocation2 + $0x68] sm:$0xff] %v1184
    %1611 = vst [vmem:[#allocation2 + $0x70] sm:$0xff] %v1189
    %1612 = vst [vmem:[#allocation2 + $0x78] sm:$0xff] %v1194
    %1613 = vst [vmem:[#allocation2 + $0x80] sm:$0xff] %v1199
    %1614 = vst [vmem:[#allocation2 + $0x88] sm:$0xff] %v1204
    %1615 = vst [vmem:[#allocation2 + $0x90] sm:$0xff] %v1209
    %1616 = vst [vmem:[#allocation2 + $0x98] sm:$0xff] %v1214
    %1617 = vst [vmem:[#allocation2 + $0xa0] sm:$0xff] %v1219
    %1618 = vst [vmem:[#allocation2 + $0xa8] sm:$0xff] %v1224
    %1619 = vst [vmem:[#allocation2 + $0xb0] sm:$0xff] %v1229
    %1620 = vst [vmem:[#allocation2 + $0xb8] sm:$0xff] %v1234
    %1621 = vst [vmem:[#allocation2 + $0xc0] sm:$0xff] %v1239
    %1622 = vst [vmem:[#allocation2 + $0xc8] sm:$0xff] %v1244
    %1623 = vst [vmem:[#allocation2 + $0xd0] sm:$0xff] %v1249
    %1624 = vst [vmem:[#allocation2 + $0xd8] sm:$0xff] %v1254
    %1625 = vst [vmem:[#allocation2 + $0xe0] sm:$0xff] %v1259
    %1626 = vst [vmem:[#allocation2 + $0xe8] sm:$0xff] %v1264
    %1627 = vst [vmem:[#allocation2 + $0xf0] sm:$0xff] %v1269
    %1628 = vst [vmem:[#allocation2 + $0xf8] sm:$0xff] %v1274
    %1629 = vst [vmem:[#allocation2 + $0x100] sm:$0xff] %v1279
    %1630 = vst [vmem:[#allocation2 + $0x108] sm:$0xff] %v1284
    %1631 = vst [vmem:[#allocation2 + $0x110] sm:$0xff] %v1289
    %1632 = vst [vmem:[#allocation2 + $0x118] sm:$0xff] %v1294
    %1633 = vst [vmem:[#allocation2 + $0x120] sm:$0xff] %v1299
    %1634 = vst [vmem:[#allocation2 + $0x128] sm:$0xff] %v1304
    %1635 = vst [vmem:[#allocation2 + $0x130] sm:$0xff] %v1309
    %1636 = vst [vmem:[#allocation2 + $0x138] sm:$0xff] %v1314
    %1637 = vst [vmem:[#allocation2 + $0x140] sm:$0xff] %v1319
    %1638 = vst [vmem:[#allocation2 + $0x148] sm:$0xff] %v1324
    %1639 = vst [vmem:[#allocation2 + $0x150] sm:$0xff] %v1329
    %1640 = vst [vmem:[#allocation2 + $0x158] sm:$0xff] %v1334
    %1641 = vst [vmem:[#allocation2 + $0x160] sm:$0xff] %v1339
    %1642 = vst [vmem:[#allocation2 + $0x168] sm:$0xff] %v1344
    %1643 = vst [vmem:[#allocation2 + $0x170] sm:$0xff] %v1349
    %1644 = vst [vmem:[#allocation2 + $0x178] sm:$0xff] %v1354
    %1645 = vst [vmem:[#allocation2 + $0x180] sm:$0xff] %v1359
    %1646 = vst [vmem:[#allocation2 + $0x188] sm:$0xff] %v1364
    %1647 = vst [vmem:[#allocation2 + $0x190] sm:$0xff] %v1369
    %1648 = vst [vmem:[#allocation2 + $0x198] sm:$0xff] %v1374
    %1649 = vst [vmem:[#allocation2 + $0x1a0] sm:$0xff] %v1379
    %1650 = vst [vmem:[#allocation2 + $0x1a8] sm:$0xff] %v1384
    %1651 = vst [vmem:[#allocation2 + $0x1b0] sm:$0xff] %v1389
    %1652 = vst [vmem:[#allocation2 + $0x1b8] sm:$0xff] %v1394
    %1653 = vst [vmem:[#allocation2 + $0x1c0] sm:$0xff] %v1399
    %1654 = vst [vmem:[#allocation2 + $0x1c8] sm:$0xff] %v1404
    %1655 = vst [vmem:[#allocation2 + $0x1d0] sm:$0xff] %v1409
    %1656 = vst [vmem:[#allocation2 + $0x1d8] sm:$0xff] %v1414
    %1657 = vst [vmem:[#allocation2 + $0x1e0] sm:$0xff] %v1419
    %1658 = vst [vmem:[#allocation2 + $0x1e8] sm:$0xff] %v1424
    %1659 = vst [vmem:[#allocation2 + $0x1f0] sm:$0xff] %v1429
    %1660 = vst [vmem:[#allocation2 + $0x1f8] sm:$0xff] %v1434
    %1661 = vst [vmem:[#allocation2 + $0x200] sm:$0xff] %v1439
    %1662 = vst [vmem:[#allocation2 + $0x208] sm:$0xff] %v1444
    %1663 = vst [vmem:[#allocation2 + $0x210] sm:$0xff] %v1449
    %1664 = vst [vmem:[#allocation2 + $0x218] sm:$0xff] %v1454
    %1665 = vst [vmem:[#allocation2 + $0x220] sm:$0xff] %v1459
    %1666 = vst [vmem:[#allocation2 + $0x228] sm:$0xff] %v1464
    %1667 = vst [vmem:[#allocation2 + $0x230] sm:$0xff] %v1469
    %1668 = vst [vmem:[#allocation2 + $0x238] sm:$0xff] %v1474
    %1669 = vst [vmem:[#allocation2 + $0x240] sm:$0xff] %v1479
    %1670 = vst [vmem:[#allocation2 + $0x248] sm:$0xff] %v1484
    %1671 = vst [vmem:[#allocation2 + $0x250] sm:$0xff] %v1489
    %1672 = vst [vmem:[#allocation2 + $0x258] sm:$0xff] %v1494
    %1673 = vst [vmem:[#allocation2 + $0x260] sm:$0xff] %v1499
    %1674 = vst [vmem:[#allocation2 + $0x268] sm:$0xff] %v1504
    %1675 = vst [vmem:[#allocation2 + $0x270] sm:$0xff] %v1509
    %1676 = vst [vmem:[#allocation2 + $0x278] sm:$0xff] %v1514
    %1677 = vst [vmem:[#allocation2 + $0x280] sm:$0xff] %v1519
    %1678 = vst [vmem:[#allocation2 + $0x288] sm:$0xff] %v1524
    %1679 = vst [vmem:[#allocation2 + $0x290] sm:$0xff] %v1529
    %1680 = vst [vmem:[#allocation2 + $0x298] sm:$0xff] %v1534
    %1681 = vst [vmem:[#allocation2 + $0x2a0] sm:$0xff] %v1539
    %1682 = vst [vmem:[#allocation2 + $0x2a8] sm:$0xff] %v1544
    %1683 = vst [vmem:[#allocation2 + $0x2b0] sm:$0xff] %v1549
    %1684 = vst [vmem:[#allocation2 + $0x2b8] sm:$0xff] %v1554
    %1685 = vst [vmem:[#allocation2 + $0x2c0] sm:$0xff] %v1559
    %1686 = vst [vmem:[#allocation2 + $0x2c8] sm:$0xff] %v1564
    %1687 = vst [vmem:[#allocation2 + $0x2d0] sm:$0xff] %v1569
    %1688 = vst [vmem:[#allocation2 + $0x2d8] sm:$0xff] %v1574
    %1689 = vst [vmem:[#allocation2 + $0x2e0] sm:$0xff] %v1579
    %1690 = vst [vmem:[#allocation2 + $0x2e8] sm:$0xff] %v1584
    %1691 = vst [vmem:[#allocation2 + $0x2f0] sm:$0xff] %v1589
    %1692 = vst [vmem:[#allocation2 + $0x2f8] sm:$0xff] %v1594
    %v1693 = vld [vmem:[%s4] sm:$0xff]
    %v1694 = vld [vmem:[%s4 + $0x8] sm:$0xff]
    %v1695 = vld [vmem:[%s4 + $0x10] sm:$0xff]
    %v1696 = vld [vmem:[%s4 + $0x18] sm:$0xff]
    %1698 = vset.pattern.permute.xlu0 0
    %1699 = vperm.xlu0 %1698, %v1693
    %v1700 = vpop.permute.xlu0 %1699
    %1703 = vset.pattern.permute.xlu0 0
    %1704 = vperm.xlu0 %1703, %v1694
    %v1705 = vpop.permute.xlu0 %1704
    %1708 = vset.pattern.permute.xlu0 0
    %1709 = vperm.xlu0 %1708, %v1695
    %v1710 = vpop.permute.xlu0 %1709
    %1713 = vset.pattern.permute.xlu0 0
    %1714 = vperm.xlu0 %1713, %v1696
    %v1715 = vpop.permute.xlu0 %1714
    %v1717 = vld [vmem:[#allocation2] sm:$0xff]
    %v1718 = vld [vmem:[#allocation2 + $0x8] sm:$0xff]
    %v1719 = vld [vmem:[#allocation2 + $0x10] sm:$0xff]
    %v1720 = vld [vmem:[#allocation2 + $0x18] sm:$0xff]
    %v1721 = vld [vmem:[#allocation2 + $0x20] sm:$0xff]
    %v1722 = vld [vmem:[#allocation2 + $0x28] sm:$0xff]
    %v1723 = vld [vmem:[#allocation2 + $0x30] sm:$0xff]
    %v1724 = vld [vmem:[#allocation2 + $0x38] sm:$0xff]
    %v1725 = vld [vmem:[#allocation2 + $0x40] sm:$0xff]
    %v1726 = vld [vmem:[#allocation2 + $0x48] sm:$0xff]
    %v1727 = vld [vmem:[#allocation2 + $0x50] sm:$0xff]
    %v1728 = vld [vmem:[#allocation2 + $0x58] sm:$0xff]
    %v1729 = vld [vmem:[%s3] sm:$0xff]
    %v1730 = vld [vmem:[%s3 + $0x8] sm:$0xff]
    %v1731 = vld [vmem:[%s3 + $0x10] sm:$0xff]
    %v1732 = vld [vmem:[%s3 + $0x18] sm:$0xff]
    %v1733 = vld [vmem:[%s3 + $0x20] sm:$0xff]
    %v1734 = vld [vmem:[%s3 + $0x28] sm:$0xff]
    %v1735 = vld [vmem:[%s3 + $0x30] sm:$0xff]
    %v1736 = vld [vmem:[%s3 + $0x38] sm:$0xff]
    %v1737 = vld [vmem:[%s3 + $0x40] sm:$0xff]
    %v1738 = vld [vmem:[%s3 + $0x48] sm:$0xff]
    %v1739 = vld [vmem:[%s3 + $0x50] sm:$0xff]
    %v1740 = vld [vmem:[%s3 + $0x58] sm:$0xff]
    %v1742 = vsel %vm715, %v1729, 0
    %v1745 = vsel %vm715, %v1730, 0
    %v1748 = vsel %vm715, %v1731, 0
    %v1751 = vsel %vm715, %v1732, 0
    %v1754 = vsel %vm715, %v1733, 0
    %v1757 = vsel %vm715, %v1734, 0
    %v1760 = vsel %vm715, %v1735, 0
    %v1763 = vsel %vm715, %v1736, 0
    %v1766 = vsel %vm715, %v1737, 0
    %v1769 = vsel %vm715, %v1738, 0
    %v1772 = vsel %vm715, %v1739, 0
    %v1775 = vsel %vm715, %v1740, 0
    %1777 = vmatprep.subr.mxu0 0.0
    %1778 = vmatpush1.msra.mxu0 0.0
    %1779 = vmatprep.subr.mxu0 0.0
    %1780 = vmatpush1.msra.mxu0 0.0
    %1781 = vmatprep.subr.mxu0 0.0
    %1782 = vmatpush1.msra.mxu0 0.0
    %1783 = vmatprep.subr.mxu0 0.0
    %1784 = vmatpush1.msra.mxu0 0.0
    %1785 = vmatprep.subr.mxu0 0.0
    %1786 = vmatpush1.msra.mxu0 0.0
    %1787 = vmatprep.subr.mxu0 0.0
    %1788 = vmatpush1.msra.mxu0 0.0
    %1789 = vmatprep.subr.mxu0 0.0
    %1790 = vmatpush1.msra.mxu0 0.0
    %1791 = vmatprep.subr.mxu0 0.0
    %1792 = vmatpush1.msra.mxu0 0.0
    %1793 = vmatprep.subr.mxu0 0.0
    %1794 = vmatpush1.msra.mxu0 0.0
    %1795 = vmatprep.subr.mxu0 0.0
    %1796 = vmatpush1.msra.mxu0 0.0
    %1797 = vmatprep.subr.mxu0 0.0
    %1798 = vmatpush1.msra.mxu0 0.0
    %1799 = vmatprep.subr.mxu0 0.0
    %1800 = vmatpush1.msra.mxu0 0.0
    %1801 = vmatprep.subr.mxu0 0.0
    %1802 = vmatpush1.msra.mxu0 0.0
    %1803 = vmatprep.subr.mxu0 0.0
    %1804 = vmatpush1.msra.mxu0 0.0
    %1805 = vmatprep.subr.mxu0 0.0
    %1806 = vmatpush1.msra.mxu0 0.0
    %1807 = vmatprep.subr.mxu0 0.0
    %1808 = vmatpush1.msra.mxu0 0.0
    %1809 = vmatprep.subr.mxu0 0.0
    %1810 = vmatpush2.msra.mxu0 0.0
    %1811 = vmatprep.subr.mxu0 0.0
    %1812 = vmatpush2.msra.mxu0 0.0
    %1813 = vmatprep.subr.mxu0 0.0
    %1814 = vmatpush2.msra.mxu0 0.0
    %1815 = vmatprep.subr.mxu0 0.0
    %1816 = vmatpush2.msra.mxu0 0.0
    %1817 = vmatprep.subr.mxu0 0.0
    %1818 = vmatpush2.msra.mxu0 0.0
    %1819 = vmatprep.subr.mxu0 0.0
    %1820 = vmatpush2.msra.mxu0 0.0
    %1821 = vmatprep.subr.mxu0 0.0
    %1822 = vmatpush2.msra.mxu0 0.0
    %1823 = vmatprep.subr.mxu0 0.0
    %1824 = vmatpush2.msra.mxu0 0.0
    %1825 = vmatprep.subr.mxu0 0.0
    %1826 = vmatpush2.msra.mxu0 0.0
    %1827 = vmatprep.subr.mxu0 0.0
    %1828 = vmatpush2.msra.mxu0 0.0
    %1829 = vmatprep.subr.mxu0 0.0
    %1830 = vmatpush2.msra.mxu0 0.0
    %1831 = vmatprep.subr.mxu0 0.0
    %1832 = vmatpush2.msra.mxu0 0.0
    %1833 = vmatprep.subr.mxu0 0.0
    %1834 = vmatpush2.msra.mxu0 0.0
    %1835 = vmatprep.subr.mxu0 0.0
    %1836 = vmatpush2.msra.mxu0 0.0
    %1837 = vmatprep.subr.mxu0 0.0
    %1838 = vmatpush2.msra.mxu0 0.0
    %1839 = vmatprep.subr.mxu0 0.0
    %1840 = vmatpush2.msra.mxu0 0.0
    %1841 = vmatprep.mubr.f32.mxu0 0.0
    %1842 = vmatmul.mubr.f32.gmra.mxu0 %v1742
    %v1843 = vpop.f32.mrf.mxu0
    %v1844 = vadd.f32 0.0, %v1843
    %v1845 = vpop.f32.mrf.mxu0
    %1846 = vmatprep.mubr.f32.mxu0 0.0
    %1847 = vmatmul.mubr.f32.gmra.mxu0 %v1745
    %v1848 = vpop.f32.mrf.mxu0
    %v1849 = vadd.f32 0.0, %v1848
    %v1850 = vpop.f32.mrf.mxu0
    %1851 = vmatprep.mubr.f32.mxu0 0.0
    %1852 = vmatmul.mubr.f32.gmra.mxu0 %v1748
    %v1853 = vpop.f32.mrf.mxu0
    %v1854 = vadd.f32 0.0, %v1853
    %v1855 = vpop.f32.mrf.mxu0
    %1856 = vmatprep.mubr.f32.mxu0 0.0
    %1857 = vmatmul.mubr.f32.gmra.mxu0 %v1751
    %v1858 = vpop.f32.mrf.mxu0
    %v1859 = vadd.f32 0.0, %v1858
    %v1860 = vpop.f32.mrf.mxu0
    %1861 = vmatprep.mubr.f32.mxu0 0.0
    %1862 = vmatmul.mubr.f32.gmra.mxu0 %v1754
    %v1863 = vpop.f32.mrf.mxu0
    %v1864 = vadd.f32 0.0, %v1863
    %v1865 = vpop.f32.mrf.mxu0
    %1866 = vmatprep.mubr.f32.mxu0 0.0
    %1867 = vmatmul.mubr.f32.gmra.mxu0 %v1757
    %v1868 = vpop.f32.mrf.mxu0
    %v1869 = vadd.f32 0.0, %v1868
    %v1870 = vpop.f32.mrf.mxu0
    %1871 = vmatprep.mubr.f32.mxu0 0.0
    %1872 = vmatmul.mubr.f32.gmra.mxu0 %v1760
    %v1873 = vpop.f32.mrf.mxu0
    %v1874 = vadd.f32 0.0, %v1873
    %v1875 = vpop.f32.mrf.mxu0
    %1876 = vmatprep.mubr.f32.mxu0 0.0
    %1877 = vmatmul.mubr.f32.gmra.mxu0 %v1763
    %v1878 = vpop.f32.mrf.mxu0
    %v1879 = vadd.f32 0.0, %v1878
    %v1880 = vpop.f32.mrf.mxu0
    %1881 = vmatprep.mubr.f32.mxu0 0.0
    %1882 = vmatmul.mubr.f32.gmra.mxu0 %v1766
    %v1883 = vpop.f32.mrf.mxu0
    %v1884 = vadd.f32 0.0, %v1883
    %v1885 = vpop.f32.mrf.mxu0
    %1886 = vmatprep.mubr.f32.mxu0 0.0
    %1887 = vmatmul.mubr.f32.gmra.mxu0 %v1769
    %v1888 = vpop.f32.mrf.mxu0
    %v1889 = vadd.f32 0.0, %v1888
    %v1890 = vpop.f32.mrf.mxu0
    %1891 = vmatprep.mubr.f32.mxu0 0.0
    %1892 = vmatmul.mubr.f32.gmra.mxu0 %v1772
    %v1893 = vpop.f32.mrf.mxu0
    %v1894 = vadd.f32 0.0, %v1893
    %v1895 = vpop.f32.mrf.mxu0
    %1896 = vmatprep.mubr.f32.mxu0 0.0
    %1897 = vmatmul.mubr.f32.gmra.mxu0 %v1775
    %v1898 = vpop.f32.mrf.mxu0
    %v1899 = vadd.f32 0.0, %v1898
    %v1900 = vpop.f32.mrf.mxu0
    %1901 = vdwg.mxu0
    %v1902 = vadd.f32 %v1717, %v1844
    %v1903 = vadd.f32 %v1718, %v1849
    %v1904 = vadd.f32 %v1719, %v1854
    %v1905 = vadd.f32 %v1720, %v1859
    %v1906 = vxor.u32 %v1902, 2147483648
    %v1907 = vxor.u32 %v1903, 2147483648
    %v1908 = vxor.u32 %v1904, 2147483648
    %v1909 = vxor.u32 %v1905, 2147483648
    %v1910 = vmul.f32 %v1906, 1.442695
    %v1911 = vpow.pop %v1910
    %v1912 = vmul.f32 %v1907, 1.442695
    %v1913 = vpow.pop %v1912
    %v1914 = vmul.f32 %v1908, 1.442695
    %v1915 = vpow.pop %v1914
    %v1916 = vmul.f32 %v1909, 1.442695
    %v1917 = vpow.pop %v1916
    %v1918 = vadd.f32 %v1911, 1.0
    %v1919 = vadd.f32 %v1913, 1.0
    %v1920 = vadd.f32 %v1915, 1.0
    %v1921 = vadd.f32 %v1917, 1.0
    %v1922 = vrcp.pop %v1918
    %v1923 = vmul.f32 1.0, %v1922
    %v1924 = vrcp.pop %v1919
    %v1925 = vmul.f32 1.0, %v1924
    %v1926 = vrcp.pop %v1920
    %v1927 = vmul.f32 1.0, %v1926
    %v1928 = vrcp.pop %v1921
    %v1929 = vmul.f32 1.0, %v1928
    %v1930 = vadd.f32 %v1721, %v1864
    %v1931 = vadd.f32 %v1722, %v1869
    %v1932 = vadd.f32 %v1723, %v1874
    %v1933 = vadd.f32 %v1724, %v1879
    %v1934 = vxor.u32 %v1930, 2147483648
    %v1935 = vxor.u32 %v1931, 2147483648
    %v1936 = vxor.u32 %v1932, 2147483648
    %v1937 = vxor.u32 %v1933, 2147483648
    %v1938 = vmul.f32 %v1934, 1.442695
    %v1939 = vpow.pop %v1938
    %v1940 = vmul.f32 %v1935, 1.442695
    %v1941 = vpow.pop %v1940
    %v1942 = vmul.f32 %v1936, 1.442695
    %v1943 = vpow.pop %v1942
    %v1944 = vmul.f32 %v1937, 1.442695
    %v1945 = vpow.pop %v1944
    %v1946 = vadd.f32 %v1939, 1.0
    %v1947 = vadd.f32 %v1941, 1.0
    %v1948 = vadd.f32 %v1943, 1.0
    %v1949 = vadd.f32 %v1945, 1.0
    %v1950 = vrcp.pop %v1946
    %v1951 = vmul.f32 1.0, %v1950
    %v1952 = vrcp.pop %v1947
    %v1953 = vmul.f32 1.0, %v1952
    %v1954 = vrcp.pop %v1948
    %v1955 = vmul.f32 1.0, %v1954
    %v1956 = vrcp.pop %v1949
    %v1957 = vmul.f32 1.0, %v1956
    %v1958 = vadd.f32 %v1884, %v1700
    %v1959 = vadd.f32 %v1889, %v1705
    %v1960 = vadd.f32 %v1894, %v1710
    %v1961 = vadd.f32 %v1899, %v1715
    %v1962 = vmul.f32 %v1923, %v1958
    %v1963 = vmul.f32 %v1925, %v1959
    %v1964 = vmul.f32 %v1927, %v1960
    %v1965 = vmul.f32 %v1929, %v1961
    %v1966 = vadd.f32 %v1725, %v1962
    %v1967 = vadd.f32 %v1726, %v1963
    %v1968 = vadd.f32 %v1727, %v1964
    %v1969 = vadd.f32 %v1728, %v1965
    %v1970 = vtanh.pop %v1966
    %v1971 = vtanh.pop %v1967
    %v1972 = vtanh.pop %v1968
    %v1973 = vtanh.pop %v1969
    %v1974 = vsub.f32 1.0, %v1951
    %v1975 = vsub.f32 1.0, %v1953
    %v1976 = vsub.f32 1.0, %v1955
    %v1977 = vsub.f32 1.0, %v1957
    %v1978 = vmul.f32 %v1974, %v1970
    %v1979 = vmul.f32 %v1975, %v1971
    %v1980 = vmul.f32 %v1976, %v1972
    %v1981 = vmul.f32 %v1977, %v1973
    %v1982 = vmul.f32 %v1951, 0.0
    %v1983 = vmul.f32 %v1953, 0.0
    %v1984 = vmul.f32 %v1955, 0.0
    %v1985 = vmul.f32 %v1957, 0.0
    %v1986 = vadd.f32 %v1978, %v1982
    %v1987 = vadd.f32 %v1979, %v1983
    %v1988 = vadd.f32 %v1980, %v1984
    %v1989 = vadd.f32 %v1981, %v1985
    %1990 = vst [vmem:[#allocation3] sm:$0xff] %v1986
    %1991 = vst [vmem:[#allocation3 + $0x8] sm:$0xff] %v1987
    %1992 = vst [vmem:[#allocation3 + $0x10] sm:$0xff] %v1988
    %1993 = vst [vmem:[#allocation3 + $0x18] sm:$0xff] %v1989
    %v1994 = vld [vmem:[#allocation2 + $0x60] sm:$0xff]
    %v1995 = vld [vmem:[#allocation2 + $0x68] sm:$0xff]
    %v1996 = vld [vmem:[#allocation2 + $0x70] sm:$0xff]
    %v1997 = vld [vmem:[#allocation2 + $0x78] sm:$0xff]
    %v1998 = vld [vmem:[#allocation2 + $0x80] sm:$0xff]
    %v1999 = vld [vmem:[#allocation2 + $0x88] sm:$0xff]
    %v2000 = vld [vmem:[#allocation2 + $0x90] sm:$0xff]
    %v2001 = vld [vmem:[#allocation2 + $0x98] sm:$0xff]
    %v2002 = vld [vmem:[#allocation2 + $0xa0] sm:$0xff]
    %v2003 = vld [vmem:[#allocation2 + $0xa8] sm:$0xff]
    %v2004 = vld [vmem:[#allocation2 + $0xb0] sm:$0xff]
    %v2005 = vld [vmem:[#allocation2 + $0xb8] sm:$0xff]
    %v2006 = vld [vmem:[%s3] sm:$0xff]
    %v2007 = vld [vmem:[%s3 + $0x8] sm:$0xff]
    %v2008 = vld [vmem:[%s3 + $0x10] sm:$0xff]
    %v2009 = vld [vmem:[%s3 + $0x18] sm:$0xff]
    %v2010 = vld [vmem:[%s3 + $0x20] sm:$0xff]
    %v2011 = vld [vmem:[%s3 + $0x28] sm:$0xff]
    %v2012 = vld [vmem:[%s3 + $0x30] sm:$0xff]
    %v2013 = vld [vmem:[%s3 + $0x38] sm:$0xff]
    %v2014 = vld [vmem:[%s3 + $0x40] sm:$0xff]
    %v2015 = vld [vmem:[%s3 + $0x48] sm:$0xff]
    %v2016 = vld [vmem:[%s3 + $0x50] sm:$0xff]
    %v2017 = vld [vmem:[%s3 + $0x58] sm:$0xff]
    %v2019 = vsel %vm715, %v2006, 0
    %v2022 = vsel %vm715, %v2007, 0
    %v2025 = vsel %vm715, %v2008, 0
    %v2028 = vsel %vm715, %v2009, 0
    %v2031 = vsel %vm715, %v2010, 0
    %v2034 = vsel %vm715, %v2011, 0
    %v2037 = vsel %vm715, %v2012, 0
    %v2040 = vsel %vm715, %v2013, 0
    %v2043 = vsel %vm715, %v2014, 0
    %v2046 = vsel %vm715, %v2015, 0
    %v2049 = vsel %vm715, %v2016, 0
    %v2052 = vsel %vm715, %v2017, 0
    %2054 = vmatprep.subr.mxu0 0.0
    %2055 = vmatpush1.msra.mxu0 0.0
    %2056 = vmatprep.subr.mxu0 0.0
    %2057 = vmatpush1.msra.mxu0 0.0
    %2058 = vmatprep.subr.mxu0 0.0
    %2059 = vmatpush1.msra.mxu0 0.0
    %2060 = vmatprep.subr.mxu0 0.0
    %2061 = vmatpush1.msra.mxu0 0.0
    %2062 = vmatprep.subr.mxu0 0.0
    %2063 = vmatpush1.msra.mxu0 0.0
    %2064 = vmatprep.subr.mxu0 0.0
    %2065 = vmatpush1.msra.mxu0 0.0
    %2066 = vmatprep.subr.mxu0 0.0
    %2067 = vmatpush1.msra.mxu0 0.0
    %2068 = vmatprep.subr.mxu0 0.0
    %2069 = vmatpush1.msra.mxu0 0.0
    %2070 = vmatprep.subr.mxu0 0.0
    %2071 = vmatpush1.msra.mxu0 0.0
    %2072 = vmatprep.subr.mxu0 0.0
    %2073 = vmatpush1.msra.mxu0 0.0
    %2074 = vmatprep.subr.mxu0 0.0
    %2075 = vmatpush1.msra.mxu0 0.0
    %2076 = vmatprep.subr.mxu0 0.0
    %2077 = vmatpush1.msra.mxu0 0.0
    %2078 = vmatprep.subr.mxu0 0.0
    %2079 = vmatpush1.msra.mxu0 %v1989
    %2080 = vmatprep.subr.mxu0 0.0
    %2081 = vmatpush1.msra.mxu0 %v1988
    %2082 = vmatprep.subr.mxu0 0.0
    %2083 = vmatpush1.msra.mxu0 %v1987
    %2084 = vmatprep.subr.mxu0 0.0
    %2085 = vmatpush1.msra.mxu0 %v1986
    %2086 = vmatprep.subr.mxu0 0.0
    %2087 = vmatpush2.msra.mxu0 0.0
    %2088 = vmatprep.subr.mxu0 0.0
    %2089 = vmatpush2.msra.mxu0 0.0
    %2090 = vmatprep.subr.mxu0 0.0
    %2091 = vmatpush2.msra.mxu0 0.0
    %2092 = vmatprep.subr.mxu0 0.0
    %2093 = vmatpush2.msra.mxu0 0.0
    %2094 = vmatprep.subr.mxu0 0.0
    %2095 = vmatpush2.msra.mxu0 0.0
    %2096 = vmatprep.subr.mxu0 0.0
    %2097 = vmatpush2.msra.mxu0 0.0
    %2098 = vmatprep.subr.mxu0 0.0
    %2099 = vmatpush2.msra.mxu0 0.0
    %2100 = vmatprep.subr.mxu0 0.0
    %2101 = vmatpush2.msra.mxu0 0.0
    %2102 = vmatprep.subr.mxu0 0.0
    %2103 = vmatpush2.msra.mxu0 0.0
    %2104 = vmatprep.subr.mxu0 0.0
    %2105 = vmatpush2.msra.mxu0 0.0
    %2106 = vmatprep.subr.mxu0 0.0
    %2107 = vmatpush2.msra.mxu0 0.0
    %2108 = vmatprep.subr.mxu0 0.0
    %2109 = vmatpush2.msra.mxu0 0.0
    %2110 = vmatprep.subr.mxu0 0.0
    %2111 = vmatpush2.msra.mxu0 0.0
    %2112 = vmatprep.subr.mxu0 0.0
    %2113 = vmatpush2.msra.mxu0 0.0
    %2114 = vmatprep.subr.mxu0 0.0
    %2115 = vmatpush2.msra.mxu0 0.0
    %2116 = vmatprep.subr.mxu0 0.0
    %2117 = vmatpush2.msra.mxu0 0.0
    %2118 = vmatprep.mubr.f32.mxu0 0.0
    %2119 = vmatmul.mubr.f32.gmra.mxu0 %v2019
    %v2120 = vpop.f32.mrf.mxu0
    %v2121 = vadd.f32 0.0, %v2120
    %v2122 = vpop.f32.mrf.mxu0
    %2123 = vmatprep.mubr.f32.mxu0 0.0
    %2124 = vmatmul.mubr.f32.gmra.mxu0 %v2022
    %v2125 = vpop.f32.mrf.mxu0
    %v2126 = vadd.f32 0.0, %v2125
    %v2127 = vpop.f32.mrf.mxu0
    %2128 = vmatprep.mubr.f32.mxu0 0.0
    %2129 = vmatmul.mubr.f32.gmra.mxu0 %v2025
    %v2130 = vpop.f32.mrf.mxu0
    %v2131 = vadd.f32 0.0, %v2130
    %v2132 = vpop.f32.mrf.mxu0
    %2133 = vmatprep.mubr.f32.mxu0 0.0
    %2134 = vmatmul.mubr.f32.gmra.mxu0 %v2028
    %v2135 = vpop.f32.mrf.mxu0
    %v2136 = vadd.f32 0.0, %v2135
    %v2137 = vpop.f32.mrf.mxu0
    %2138 = vmatprep.mubr.f32.mxu0 0.0
    %2139 = vmatmul.mubr.f32.gmra.mxu0 %v2031
    %v2140 = vpop.f32.mrf.mxu0
    %v2141 = vadd.f32 0.0, %v2140
    %v2142 = vpop.f32.mrf.mxu0
    %2143 = vmatprep.mubr.f32.mxu0 0.0
    %2144 = vmatmul.mubr.f32.gmra.mxu0 %v2034
    %v2145 = vpop.f32.mrf.mxu0
    %v2146 = vadd.f32 0.0, %v2145
    %v2147 = vpop.f32.mrf.mxu0
    %2148 = vmatprep.mubr.f32.mxu0 0.0
    %2149 = vmatmul.mubr.f32.gmra.mxu0 %v2037
    %v2150 = vpop.f32.mrf.mxu0
    %v2151 = vadd.f32 0.0, %v2150
    %v2152 = vpop.f32.mrf.mxu0
    %2153 = vmatprep.mubr.f32.mxu0 0.0
    %2154 = vmatmul.mubr.f32.gmra.mxu0 %v2040
    %v2155 = vpop.f32.mrf.mxu0
    %v2156 = vadd.f32 0.0, %v2155
    %v2157 = vpop.f32.mrf.mxu0
    %2158 = vmatprep.mubr.f32.mxu0 0.0
    %2159 = vmatmul.mubr.f32.gmra.mxu0 %v2043
    %v2160 = vpop.f32.mrf.mxu0
    %v2161 = vadd.f32 0.0, %v2160
    %v2162 = vpop.f32.mrf.mxu0
    %2163 = vmatprep.mubr.f32.mxu0 0.0
    %2164 = vmatmul.mubr.f32.gmra.mxu0 %v2046
    %v2165 = vpop.f32.mrf.mxu0
    %v2166 = vadd.f32 0.0, %v2165
    %v2167 = vpop.f32.mrf.mxu0
    %2168 = vmatprep.mubr.f32.mxu0 0.0
    %2169 = vmatmul.mubr.f32.gmra.mxu0 %v2049
    %v2170 = vpop.f32.mrf.mxu0
    %v2171 = vadd.f32 0.0, %v2170
    %v2172 = vpop.f32.mrf.mxu0
    %2173 = vmatprep.mubr.f32.mxu0 0.0
    %2174 = vmatmul.mubr.f32.gmra.mxu0 %v2052
    %v2175 = vpop.f32.mrf.mxu0
    %v2176 = vadd.f32 0.0, %v2175
    %v2177 = vpop.f32.mrf.mxu0
    %2178 = vdwg.mxu0
    %v2179 = vadd.f32 %v1994, %v2121
    %v2180 = vadd.f32 %v1995, %v2126
    %v2181 = vadd.f32 %v1996, %v2131
    %v2182 = vadd.f32 %v1997, %v2136
    %v2183 = vxor.u32 %v2179, 2147483648
    %v2184 = vxor.u32 %v2180, 2147483648
    %v2185 = vxor.u32 %v2181, 2147483648
    %v2186 = vxor.u32 %v2182, 2147483648
    %v2187 = vmul.f32 %v2183, 1.442695
    %v2188 = vpow.pop %v2187
    %v2189 = vmul.f32 %v2184, 1.442695
    %v2190 = vpow.pop %v2189
    %v2191 = vmul.f32 %v2185, 1.442695
    %v2192 = vpow.pop %v2191
    %v2193 = vmul.f32 %v2186, 1.442695
    %v2194 = vpow.pop %v2193
    %v2195 = vadd.f32 %v2188, 1.0
    %v2196 = vadd.f32 %v2190, 1.0
    %v2197 = vadd.f32 %v2192, 1.0
    %v2198 = vadd.f32 %v2194, 1.0
    %v2199 = vrcp.pop %v2195
    %v2200 = vmul.f32 1.0, %v2199
    %v2201 = vrcp.pop %v2196
    %v2202 = vmul.f32 1.0, %v2201
    %v2203 = vrcp.pop %v2197
    %v2204 = vmul.f32 1.0, %v2203
    %v2205 = vrcp.pop %v2198
    %v2206 = vmul.f32 1.0, %v2205
    %v2207 = vadd.f32 %v1998, %v2141
    %v2208 = vadd.f32 %v1999, %v2146
    %v2209 = vadd.f32 %v2000, %v2151
    %v2210 = vadd.f32 %v2001, %v2156
    %v2211 = vxor.u32 %v2207, 2147483648
    %v2212 = vxor.u32 %v2208, 2147483648
    %v2213 = vxor.u32 %v2209, 2147483648
    %v2214 = vxor.u32 %v2210, 2147483648
    %v2215 = vmul.f32 %v2211, 1.442695
    %v2216 = vpow.pop %v2215
    %v2217 = vmul.f32 %v2212, 1.442695
    %v2218 = vpow.pop %v2217
    %v2219 = vmul.f32 %v2213, 1.442695
    %v2220 = vpow.pop %v2219
    %v2221 = vmul.f32 %v2214, 1.442695
    %v2222 = vpow.pop %v2221
    %v2223 = vadd.f32 %v2216, 1.0
    %v2224 = vadd.f32 %v2218, 1.0
    %v2225 = vadd.f32 %v2220, 1.0
    %v2226 = vadd.f32 %v2222, 1.0
    %v2227 = vrcp.pop %v2223
    %v2228 = vmul.f32 1.0, %v2227
    %v2229 = vrcp.pop %v2224
    %v2230 = vmul.f32 1.0, %v2229
    %v2231 = vrcp.pop %v2225
    %v2232 = vmul.f32 1.0, %v2231
    %v2233 = vrcp.pop %v2226
    %v2234 = vmul.f32 1.0, %v2233
    %v2235 = vadd.f32 %v2161, %v1700
    %v2236 = vadd.f32 %v2166, %v1705
    %v2237 = vadd.f32 %v2171, %v1710
    %v2238 = vadd.f32 %v2176, %v1715
    %v2239 = vmul.f32 %v2200, %v2235
    %v2240 = vmul.f32 %v2202, %v2236
    %v2241 = vmul.f32 %v2204, %v2237
    %v2242 = vmul.f32 %v2206, %v2238
    %v2243 = vadd.f32 %v2002, %v2239
    %v2244 = vadd.f32 %v2003, %v2240
    %v2245 = vadd.f32 %v2004, %v2241
    %v2246 = vadd.f32 %v2005, %v2242
    %v2247 = vtanh.pop %v2243
    %v2248 = vtanh.pop %v2244
    %v2249 = vtanh.pop %v2245
    %v2250 = vtanh.pop %v2246
    %v2251 = vsub.f32 1.0, %v2228
    %v2252 = vsub.f32 1.0, %v2230
    %v2253 = vsub.f32 1.0, %v2232
    %v2254 = vsub.f32 1.0, %v2234
    %v2255 = vmul.f32 %v2251, %v2247
    %v2256 = vmul.f32 %v2252, %v2248
    %v2257 = vmul.f32 %v2253, %v2249
    %v2258 = vmul.f32 %v2254, %v2250
    %v2259 = vmul.f32 %v2228, %v1986
    %v2260 = vmul.f32 %v2230, %v1987
    %v2261 = vmul.f32 %v2232, %v1988
    %v2262 = vmul.f32 %v2234, %v1989
    %v2263 = vadd.f32 %v2255, %v2259
    %v2264 = vadd.f32 %v2256, %v2260
    %v2265 = vadd.f32 %v2257, %v2261
    %v2266 = vadd.f32 %v2258, %v2262
    %2267 = vst [vmem:[#allocation3 + $0x20] sm:$0xff] %v2263
    %2268 = vst [vmem:[#allocation3 + $0x28] sm:$0xff] %v2264
    %2269 = vst [vmem:[#allocation3 + $0x30] sm:$0xff] %v2265
    %2270 = vst [vmem:[#allocation3 + $0x38] sm:$0xff] %v2266
    %v2271 = vld [vmem:[#allocation2 + $0xc0] sm:$0xff]
    %v2272 = vld [vmem:[#allocation2 + $0xc8] sm:$0xff]
    %v2273 = vld [vmem:[#allocation2 + $0xd0] sm:$0xff]
    %v2274 = vld [vmem:[#allocation2 + $0xd8] sm:$0xff]
    %v2275 = vld [vmem:[#allocation2 + $0xe0] sm:$0xff]
    %v2276 = vld [vmem:[#allocation2 + $0xe8] sm:$0xff]
    %v2277 = vld [vmem:[#allocation2 + $0xf0] sm:$0xff]
    %v2278 = vld [vmem:[#allocation2 + $0xf8] sm:$0xff]
    %v2279 = vld [vmem:[#allocation2 + $0x100] sm:$0xff]
    %v2280 = vld [vmem:[#allocation2 + $0x108] sm:$0xff]
    %v2281 = vld [vmem:[#allocation2 + $0x110] sm:$0xff]
    %v2282 = vld [vmem:[#allocation2 + $0x118] sm:$0xff]
    %v2283 = vld [vmem:[%s3] sm:$0xff]
    %v2284 = vld [vmem:[%s3 + $0x8] sm:$0xff]
    %v2285 = vld [vmem:[%s3 + $0x10] sm:$0xff]
    %v2286 = vld [vmem:[%s3 + $0x18] sm:$0xff]
    %v2287 = vld [vmem:[%s3 + $0x20] sm:$0xff]
    %v2288 = vld [vmem:[%s3 + $0x28] sm:$0xff]
    %v2289 = vld [vmem:[%s3 + $0x30] sm:$0xff]
    %v2290 = vld [vmem:[%s3 + $0x38] sm:$0xff]
    %v2291 = vld [vmem:[%s3 + $0x40] sm:$0xff]
    %v2292 = vld [vmem:[%s3 + $0x48] sm:$0xff]
    %v2293 = vld [vmem:[%s3 + $0x50] sm:$0xff]
    %v2294 = vld [vmem:[%s3 + $0x58] sm:$0xff]
    %v2296 = vsel %vm715, %v2283, 0
    %v2299 = vsel %vm715, %v2284, 0
    %v2302 = vsel %vm715, %v2285, 0
    %v2305 = vsel %vm715, %v2286, 0
    %v2308 = vsel %vm715, %v2287, 0
    %v2311 = vsel %vm715, %v2288, 0
    %v2314 = vsel %vm715, %v2289, 0
    %v2317 = vsel %vm715, %v2290, 0
    %v2320 = vsel %vm715, %v2291, 0
    %v2323 = vsel %vm715, %v2292, 0
    %v2326 = vsel %vm715, %v2293, 0
    %v2329 = vsel %vm715, %v2294, 0
    %2331 = vmatprep.subr.mxu0 0.0
    %2332 = vmatpush1.msra.mxu0 0.0
    %2333 = vmatprep.subr.mxu0 0.0
    %2334 = vmatpush1.msra.mxu0 0.0
    %2335 = vmatprep.subr.mxu0 0.0
    %2336 = vmatpush1.msra.mxu0 0.0
    %2337 = vmatprep.subr.mxu0 0.0
    %2338 = vmatpush1.msra.mxu0 0.0
    %2339 = vmatprep.subr.mxu0 0.0
    %2340 = vmatpush1.msra.mxu0 0.0
    %2341 = vmatprep.subr.mxu0 0.0
    %2342 = vmatpush1.msra.mxu0 0.0
    %2343 = vmatprep.subr.mxu0 0.0
    %2344 = vmatpush1.msra.mxu0 0.0
    %2345 = vmatprep.subr.mxu0 0.0
    %2346 = vmatpush1.msra.mxu0 0.0
    %2347 = vmatprep.subr.mxu0 0.0
    %2348 = vmatpush1.msra.mxu0 0.0
    %2349 = vmatprep.subr.mxu0 0.0
    %2350 = vmatpush1.msra.mxu0 0.0
    %2351 = vmatprep.subr.mxu0 0.0
    %2352 = vmatpush1.msra.mxu0 0.0
    %2353 = vmatprep.subr.mxu0 0.0
    %2354 = vmatpush1.msra.mxu0 0.0
    %2355 = vmatprep.subr.mxu0 0.0
    %2356 = vmatpush1.msra.mxu0 %v2266
    %2357 = vmatprep.subr.mxu0 0.0
    %2358 = vmatpush1.msra.mxu0 %v2265
    %2359 = vmatprep.subr.mxu0 0.0
    %2360 = vmatpush1.msra.mxu0 %v2264
    %2361 = vmatprep.subr.mxu0 0.0
    %2362 = vmatpush1.msra.mxu0 %v2263
    %2363 = vmatprep.subr.mxu0 0.0
    %2364 = vmatpush2.msra.mxu0 0.0
    %2365 = vmatprep.subr.mxu0 0.0
    %2366 = vmatpush2.msra.mxu0 0.0
    %2367 = vmatprep.subr.mxu0 0.0
    %2368 = vmatpush2.msra.mxu0 0.0
    %2369 = vmatprep.subr.mxu0 0.0
    %2370 = vmatpush2.msra.mxu0 0.0
    %2371 = vmatprep.subr.mxu0 0.0
    %2372 = vmatpush2.msra.mxu0 0.0
    %2373 = vmatprep.subr.mxu0 0.0
    %2374 = vmatpush2.msra.mxu0 0.0
    %2375 = vmatprep.subr.mxu0 0.0
    %2376 = vmatpush2.msra.mxu0 0.0
    %2377 = vmatprep.subr.mxu0 0.0
    %2378 = vmatpush2.msra.mxu0 0.0
    %2379 = vmatprep.subr.mxu0 0.0
    %2380 = vmatpush2.msra.mxu0 0.0
    %2381 = vmatprep.subr.mxu0 0.0
    %2382 = vmatpush2.msra.mxu0 0.0
    %2383 = vmatprep.subr.mxu0 0.0
    %2384 = vmatpush2.msra.mxu0 0.0
    %2385 = vmatprep.subr.mxu0 0.0
    %2386 = vmatpush2.msra.mxu0 0.0
    %2387 = vmatprep.subr.mxu0 0.0
    %2388 = vmatpush2.msra.mxu0 0.0
    %2389 = vmatprep.subr.mxu0 0.0
    %2390 = vmatpush2.msra.mxu0 0.0
    %2391 = vmatprep.subr.mxu0 0.0
    %2392 = vmatpush2.msra.mxu0 0.0
    %2393 = vmatprep.subr.mxu0 0.0
    %2394 = vmatpush2.msra.mxu0 0.0
    %2395 = vmatprep.mubr.f32.mxu0 0.0
    %2396 = vmatmul.mubr.f32.gmra.mxu0 %v2296
    %v2397 = vpop.f32.mrf.mxu0
    %v2398 = vadd.f32 0.0, %v2397
    %v2399 = vpop.f32.mrf.mxu0
    %2400 = vmatprep.mubr.f32.mxu0 0.0
    %2401 = vmatmul.mubr.f32.gmra.mxu0 %v2299
    %v2402 = vpop.f32.mrf.mxu0
    %v2403 = vadd.f32 0.0, %v2402
    %v2404 = vpop.f32.mrf.mxu0
    %2405 = vmatprep.mubr.f32.mxu0 0.0
    %2406 = vmatmul.mubr.f32.gmra.mxu0 %v2302
    %v2407 = vpop.f32.mrf.mxu0
    %v2408 = vadd.f32 0.0, %v2407
    %v2409 = vpop.f32.mrf.mxu0
    %2410 = vmatprep.mubr.f32.mxu0 0.0
    %2411 = vmatmul.mubr.f32.gmra.mxu0 %v2305
    %v2412 = vpop.f32.mrf.mxu0
    %v2413 = vadd.f32 0.0, %v2412
    %v2414 = vpop.f32.mrf.mxu0
    %2415 = vmatprep.mubr.f32.mxu0 0.0
    %2416 = vmatmul.mubr.f32.gmra.mxu0 %v2308
    %v2417 = vpop.f32.mrf.mxu0
    %v2418 = vadd.f32 0.0, %v2417
    %v2419 = vpop.f32.mrf.mxu0
    %2420 = vmatprep.mubr.f32.mxu0 0.0
    %2421 = vmatmul.mubr.f32.gmra.mxu0 %v2311
    %v2422 = vpop.f32.mrf.mxu0
    %v2423 = vadd.f32 0.0, %v2422
    %v2424 = vpop.f32.mrf.mxu0
    %2425 = vmatprep.mubr.f32.mxu0 0.0
    %2426 = vmatmul.mubr.f32.gmra.mxu0 %v2314
    %v2427 = vpop.f32.mrf.mxu0
    %v2428 = vadd.f32 0.0, %v2427
    %v2429 = vpop.f32.mrf.mxu0
    %2430 = vmatprep.mubr.f32.mxu0 0.0
    %2431 = vmatmul.mubr.f32.gmra.mxu0 %v2317
    %v2432 = vpop.f32.mrf.mxu0
    %v2433 = vadd.f32 0.0, %v2432
    %v2434 = vpop.f32.mrf.mxu0
    %2435 = vmatprep.mubr.f32.mxu0 0.0
    %2436 = vmatmul.mubr.f32.gmra.mxu0 %v2320
    %v2437 = vpop.f32.mrf.mxu0
    %v2438 = vadd.f32 0.0, %v2437
    %v2439 = vpop.f32.mrf.mxu0
    %2440 = vmatprep.mubr.f32.mxu0 0.0
    %2441 = vmatmul.mubr.f32.gmra.mxu0 %v2323
    %v2442 = vpop.f32.mrf.mxu0
    %v2443 = vadd.f32 0.0, %v2442
    %v2444 = vpop.f32.mrf.mxu0
    %2445 = vmatprep.mubr.f32.mxu0 0.0
    %2446 = vmatmul.mubr.f32.gmra.mxu0 %v2326
    %v2447 = vpop.f32.mrf.mxu0
    %v2448 = vadd.f32 0.0, %v2447
    %v2449 = vpop.f32.mrf.mxu0
    %2450 = vmatprep.mubr.f32.mxu0 0.0
    %2451 = vmatmul.mubr.f32.gmra.mxu0 %v2329
    %v2452 = vpop.f32.mrf.mxu0
    %v2453 = vadd.f32 0.0, %v2452
    %v2454 = vpop.f32.mrf.mxu0
    %2455 = vdwg.mxu0
    %v2456 = vadd.f32 %v2271, %v2398
    %v2457 = vadd.f32 %v2272, %v2403
    %v2458 = vadd.f32 %v2273, %v2408
    %v2459 = vadd.f32 %v2274, %v2413
    %v2460 = vxor.u32 %v2456, 2147483648
    %v2461 = vxor.u32 %v2457, 2147483648
    %v2462 = vxor.u32 %v2458, 2147483648
    %v2463 = vxor.u32 %v2459, 2147483648
    %v2464 = vmul.f32 %v2460, 1.442695
    %v2465 = vpow.pop %v2464
    %v2466 = vmul.f32 %v2461, 1.442695
    %v2467 = vpow.pop %v2466
    %v2468 = vmul.f32 %v2462, 1.442695
    %v2469 = vpow.pop %v2468
    %v2470 = vmul.f32 %v2463, 1.442695
    %v2471 = vpow.pop %v2470
    %v2472 = vadd.f32 %v2465, 1.0
    %v2473 = vadd.f32 %v2467, 1.0
    %v2474 = vadd.f32 %v2469, 1.0
    %v2475 = vadd.f32 %v2471, 1.0
    %v2476 = vrcp.pop %v2472
    %v2477 = vmul.f32 1.0, %v2476
    %v2478 = vrcp.pop %v2473
    %v2479 = vmul.f32 1.0, %v2478
    %v2480 = vrcp.pop %v2474
    %v2481 = vmul.f32 1.0, %v2480
    %v2482 = vrcp.pop %v2475
    %v2483 = vmul.f32 1.0, %v2482
    %v2484 = vadd.f32 %v2275, %v2418
    %v2485 = vadd.f32 %v2276, %v2423
    %v2486 = vadd.f32 %v2277, %v2428
    %v2487 = vadd.f32 %v2278, %v2433
    %v2488 = vxor.u32 %v2484, 2147483648
    %v2489 = vxor.u32 %v2485, 2147483648
    %v2490 = vxor.u32 %v2486, 2147483648
    %v2491 = vxor.u32 %v2487, 2147483648
    %v2492 = vmul.f32 %v2488, 1.442695
    %v2493 = vpow.pop %v2492
    %v2494 = vmul.f32 %v2489, 1.442695
    %v2495 = vpow.pop %v2494
    %v2496 = vmul.f32 %v2490, 1.442695
    %v2497 = vpow.pop %v2496
    %v2498 = vmul.f32 %v2491, 1.442695
    %v2499 = vpow.pop %v2498
    %v2500 = vadd.f32 %v2493, 1.0
    %v2501 = vadd.f32 %v2495, 1.0
    %v2502 = vadd.f32 %v2497, 1.0
    %v2503 = vadd.f32 %v2499, 1.0
    %v2504 = vrcp.pop %v2500
    %v2505 = vmul.f32 1.0, %v2504
    %v2506 = vrcp.pop %v2501
    %v2507 = vmul.f32 1.0, %v2506
    %v2508 = vrcp.pop %v2502
    %v2509 = vmul.f32 1.0, %v2508
    %v2510 = vrcp.pop %v2503
    %v2511 = vmul.f32 1.0, %v2510
    %v2512 = vadd.f32 %v2438, %v1700
    %v2513 = vadd.f32 %v2443, %v1705
    %v2514 = vadd.f32 %v2448, %v1710
    %v2515 = vadd.f32 %v2453, %v1715
    %v2516 = vmul.f32 %v2477, %v2512
    %v2517 = vmul.f32 %v2479, %v2513
    %v2518 = vmul.f32 %v2481, %v2514
    %v2519 = vmul.f32 %v2483, %v2515
    %v2520 = vadd.f32 %v2279, %v2516
    %v2521 = vadd.f32 %v2280, %v2517
    %v2522 = vadd.f32 %v2281, %v2518
    %v2523 = vadd.f32 %v2282, %v2519
    %v2524 = vtanh.pop %v2520
    %v2525 = vtanh.pop %v2521
    %v2526 = vtanh.pop %v2522
    %v2527 = vtanh.pop %v2523
    %v2528 = vsub.f32 1.0, %v2505
    %v2529 = vsub.f32 1.0, %v2507
    %v2530 = vsub.f32 1.0, %v2509
    %v2531 = vsub.f32 1.0, %v2511
    %v2532 = vmul.f32 %v2528, %v2524
    %v2533 = vmul.f32 %v2529, %v2525
    %v2534 = vmul.f32 %v2530, %v2526
    %v2535 = vmul.f32 %v2531, %v2527
    %v2536 = vmul.f32 %v2505, %v2263
    %v2537 = vmul.f32 %v2507, %v2264
    %v2538 = vmul.f32 %v2509, %v2265
    %v2539 = vmul.f32 %v2511, %v2266
    %v2540 = vadd.f32 %v2532, %v2536
    %v2541 = vadd.f32 %v2533, %v2537
    %v2542 = vadd.f32 %v2534, %v2538
    %v2543 = vadd.f32 %v2535, %v2539
    %2544 = vst [vmem:[#allocation3 + $0x40] sm:$0xff] %v2540
    %2545 = vst [vmem:[#allocation3 + $0x48] sm:$0xff] %v2541
    %2546 = vst [vmem:[#allocation3 + $0x50] sm:$0xff] %v2542
    %2547 = vst [vmem:[#allocation3 + $0x58] sm:$0xff] %v2543
    %v2548 = vld [vmem:[#allocation2 + $0x120] sm:$0xff]
    %v2549 = vld [vmem:[#allocation2 + $0x128] sm:$0xff]
    %v2550 = vld [vmem:[#allocation2 + $0x130] sm:$0xff]
    %v2551 = vld [vmem:[#allocation2 + $0x138] sm:$0xff]
    %v2552 = vld [vmem:[#allocation2 + $0x140] sm:$0xff]
    %v2553 = vld [vmem:[#allocation2 + $0x148] sm:$0xff]
    %v2554 = vld [vmem:[#allocation2 + $0x150] sm:$0xff]
    %v2555 = vld [vmem:[#allocation2 + $0x158] sm:$0xff]
    %v2556 = vld [vmem:[#allocation2 + $0x160] sm:$0xff]
    %v2557 = vld [vmem:[#allocation2 + $0x168] sm:$0xff]
    %v2558 = vld [vmem:[#allocation2 + $0x170] sm:$0xff]
    %v2559 = vld [vmem:[#allocation2 + $0x178] sm:$0xff]
    %v2560 = vld [vmem:[%s3] sm:$0xff]
    %v2561 = vld [vmem:[%s3 + $0x8] sm:$0xff]
    %v2562 = vld [vmem:[%s3 + $0x10] sm:$0xff]
    %v2563 = vld [vmem:[%s3 + $0x18] sm:$0xff]
    %v2564 = vld [vmem:[%s3 + $0x20] sm:$0xff]
    %v2565 = vld [vmem:[%s3 + $0x28] sm:$0xff]
    %v2566 = vld [vmem:[%s3 + $0x30] sm:$0xff]
    %v2567 = vld [vmem:[%s3 + $0x38] sm:$0xff]
    %v2568 = vld [vmem:[%s3 + $0x40] sm:$0xff]
    %v2569 = vld [vmem:[%s3 + $0x48] sm:$0xff]
    %v2570 = vld [vmem:[%s3 + $0x50] sm:$0xff]
    %v2571 = vld [vmem:[%s3 + $0x58] sm:$0xff]
    %v2573 = vsel %vm715, %v2560, 0
    %v2576 = vsel %vm715, %v2561, 0
    %v2579 = vsel %vm715, %v2562, 0
    %v2582 = vsel %vm715, %v2563, 0
    %v2585 = vsel %vm715, %v2564, 0
    %v2588 = vsel %vm715, %v2565, 0
    %v2591 = vsel %vm715, %v2566, 0
    %v2594 = vsel %vm715, %v2567, 0
    %v2597 = vsel %vm715, %v2568, 0
    %v2600 = vsel %vm715, %v2569, 0
    %v2603 = vsel %vm715, %v2570, 0
    %v2606 = vsel %vm715, %v2571, 0
    %2608 = vmatprep.subr.mxu0 0.0
    %2609 = vmatpush1.msra.mxu0 0.0
    %2610 = vmatprep.subr.mxu0 0.0
    %2611 = vmatpush1.msra.mxu0 0.0
    %2612 = vmatprep.subr.mxu0 0.0
    %2613 = vmatpush1.msra.mxu0 0.0
    %2614 = vmatprep.subr.mxu0 0.0
    %2615 = vmatpush1.msra.mxu0 0.0
    %2616 = vmatprep.subr.mxu0 0.0
    %2617 = vmatpush1.msra.mxu0 0.0
    %2618 = vmatprep.subr.mxu0 0.0
    %2619 = vmatpush1.msra.mxu0 0.0
    %2620 = vmatprep.subr.mxu0 0.0
    %2621 = vmatpush1.msra.mxu0 0.0
    %2622 = vmatprep.subr.mxu0 0.0
    %2623 = vmatpush1.msra.mxu0 0.0
    %2624 = vmatprep.subr.mxu0 0.0
    %2625 = vmatpush1.msra.mxu0 0.0
    %2626 = vmatprep.subr.mxu0 0.0
    %2627 = vmatpush1.msra.mxu0 0.0
    %2628 = vmatprep.subr.mxu0 0.0
    %2629 = vmatpush1.msra.mxu0 0.0
    %2630 = vmatprep.subr.mxu0 0.0
    %2631 = vmatpush1.msra.mxu0 0.0
    %2632 = vmatprep.subr.mxu0 0.0
    %2633 = vmatpush1.msra.mxu0 %v2543
    %2634 = vmatprep.subr.mxu0 0.0
    %2635 = vmatpush1.msra.mxu0 %v2542
    %2636 = vmatprep.subr.mxu0 0.0
    %2637 = vmatpush1.msra.mxu0 %v2541
    %2638 = vmatprep.subr.mxu0 0.0
    %2639 = vmatpush1.msra.mxu0 %v2540
    %2640 = vmatprep.subr.mxu0 0.0
    %2641 = vmatpush2.msra.mxu0 0.0
    %2642 = vmatprep.subr.mxu0 0.0
    %2643 = vmatpush2.msra.mxu0 0.0
    %2644 = vmatprep.subr.mxu0 0.0
    %2645 = vmatpush2.msra.mxu0 0.0
    %2646 = vmatprep.subr.mxu0 0.0
    %2647 = vmatpush2.msra.mxu0 0.0
    %2648 = vmatprep.subr.mxu0 0.0
    %2649 = vmatpush2.msra.mxu0 0.0
    %2650 = vmatprep.subr.mxu0 0.0
    %2651 = vmatpush2.msra.mxu0 0.0
    %2652 = vmatprep.subr.mxu0 0.0
    %2653 = vmatpush2.msra.mxu0 0.0
    %2654 = vmatprep.subr.mxu0 0.0
    %2655 = vmatpush2.msra.mxu0 0.0
    %2656 = vmatprep.subr.mxu0 0.0
    %2657 = vmatpush2.msra.mxu0 0.0
    %2658 = vmatprep.subr.mxu0 0.0
    %2659 = vmatpush2.msra.mxu0 0.0
    %2660 = vmatprep.subr.mxu0 0.0
    %2661 = vmatpush2.msra.mxu0 0.0
    %2662 = vmatprep.subr.mxu0 0.0
    %2663 = vmatpush2.msra.mxu0 0.0
    %2664 = vmatprep.subr.mxu0 0.0
    %2665 = vmatpush2.msra.mxu0 0.0
    %2666 = vmatprep.subr.mxu0 0.0
    %2667 = vmatpush2.msra.mxu0 0.0
    %2668 = vmatprep.subr.mxu0 0.0
    %2669 = vmatpush2.msra.mxu0 0.0
    %2670 = vmatprep.subr.mxu0 0.0
    %2671 = vmatpush2.msra.mxu0 0.0
    %2672 = vmatprep.mubr.f32.mxu0 0.0
    %2673 = vmatmul.mubr.f32.gmra.mxu0 %v2573
    %v2674 = vpop.f32.mrf.mxu0
    %v2675 = vadd.f32 0.0, %v2674
    %v2676 = vpop.f32.mrf.mxu0
    %2677 = vmatprep.mubr.f32.mxu0 0.0
    %2678 = vmatmul.mubr.f32.gmra.mxu0 %v2576
    %v2679 = vpop.f32.mrf.mxu0
    %v2680 = vadd.f32 0.0, %v2679
    %v2681 = vpop.f32.mrf.mxu0
    %2682 = vmatprep.mubr.f32.mxu0 0.0
    %2683 = vmatmul.mubr.f32.gmra.mxu0 %v2579
    %v2684 = vpop.f32.mrf.mxu0
    %v2685 = vadd.f32 0.0, %v2684
    %v2686 = vpop.f32.mrf.mxu0
    %2687 = vmatprep.mubr.f32.mxu0 0.0
    %2688 = vmatmul.mubr.f32.gmra.mxu0 %v2582
    %v2689 = vpop.f32.mrf.mxu0
    %v2690 = vadd.f32 0.0, %v2689
    %v2691 = vpop.f32.mrf.mxu0
    %2692 = vmatprep.mubr.f32.mxu0 0.0
    %2693 = vmatmul.mubr.f32.gmra.mxu0 %v2585
    %v2694 = vpop.f32.mrf.mxu0
    %v2695 = vadd.f32 0.0, %v2694
    %v2696 = vpop.f32.mrf.mxu0
    %2697 = vmatprep.mubr.f32.mxu0 0.0
    %2698 = vmatmul.mubr.f32.gmra.mxu0 %v2588
    %v2699 = vpop.f32.mrf.mxu0
    %v2700 = vadd.f32 0.0, %v2699
    %v2701 = vpop.f32.mrf.mxu0
    %2702 = vmatprep.mubr.f32.mxu0 0.0
    %2703 = vmatmul.mubr.f32.gmra.mxu0 %v2591
    %v2704 = vpop.f32.mrf.mxu0
    %v2705 = vadd.f32 0.0, %v2704
    %v2706 = vpop.f32.mrf.mxu0
    %2707 = vmatprep.mubr.f32.mxu0 0.0
    %2708 = vmatmul.mubr.f32.gmra.mxu0 %v2594
    %v2709 = vpop.f32.mrf.mxu0
    %v2710 = vadd.f32 0.0, %v2709
    %v2711 = vpop.f32.mrf.mxu0
    %2712 = vmatprep.mubr.f32.mxu0 0.0
    %2713 = vmatmul.mubr.f32.gmra.mxu0 %v2597
    %v2714 = vpop.f32.mrf.mxu0
    %v2715 = vadd.f32 0.0, %v2714
    %v2716 = vpop.f32.mrf.mxu0
    %2717 = vmatprep.mubr.f32.mxu0 0.0
    %2718 = vmatmul.mubr.f32.gmra.mxu0 %v2600
    %v2719 = vpop.f32.mrf.mxu0
    %v2720 = vadd.f32 0.0, %v2719
    %v2721 = vpop.f32.mrf.mxu0
    %2722 = vmatprep.mubr.f32.mxu0 0.0
    %2723 = vmatmul.mubr.f32.gmra.mxu0 %v2603
    %v2724 = vpop.f32.mrf.mxu0
    %v2725 = vadd.f32 0.0, %v2724
    %v2726 = vpop.f32.mrf.mxu0
    %2727 = vmatprep.mubr.f32.mxu0 0.0
    %2728 = vmatmul.mubr.f32.gmra.mxu0 %v2606
    %v2729 = vpop.f32.mrf.mxu0
    %v2730 = vadd.f32 0.0, %v2729
    %v2731 = vpop.f32.mrf.mxu0
    %2732 = vdwg.mxu0
    %v2733 = vadd.f32 %v2548, %v2675
    %v2734 = vadd.f32 %v2549, %v2680
    %v2735 = vadd.f32 %v2550, %v2685
    %v2736 = vadd.f32 %v2551, %v2690
    %v2737 = vxor.u32 %v2733, 2147483648
    %v2738 = vxor.u32 %v2734, 2147483648
    %v2739 = vxor.u32 %v2735, 2147483648
    %v2740 = vxor.u32 %v2736, 2147483648
    %v2741 = vmul.f32 %v2737, 1.442695
    %v2742 = vpow.pop %v2741
    %v2743 = vmul.f32 %v2738, 1.442695
    %v2744 = vpow.pop %v2743
    %v2745 = vmul.f32 %v2739, 1.442695
    %v2746 = vpow.pop %v2745
    %v2747 = vmul.f32 %v2740, 1.442695
    %v2748 = vpow.pop %v2747
    %v2749 = vadd.f32 %v2742, 1.0
    %v2750 = vadd.f32 %v2744, 1.0
    %v2751 = vadd.f32 %v2746, 1.0
    %v2752 = vadd.f32 %v2748, 1.0
    %v2753 = vrcp.pop %v2749
    %v2754 = vmul.f32 1.0, %v2753
    %v2755 = vrcp.pop %v2750
    %v2756 = vmul.f32 1.0, %v2755
    %v2757 = vrcp.pop %v2751
    %v2758 = vmul.f32 1.0, %v2757
    %v2759 = vrcp.pop %v2752
    %v2760 = vmul.f32 1.0, %v2759
    %v2761 = vadd.f32 %v2552, %v2695
    %v2762 = vadd.f32 %v2553, %v2700
    %v2763 = vadd.f32 %v2554, %v2705
    %v2764 = vadd.f32 %v2555, %v2710
    %v2765 = vxor.u32 %v2761, 2147483648
    %v2766 = vxor.u32 %v2762, 2147483648
    %v2767 = vxor.u32 %v2763, 2147483648
    %v2768 = vxor.u32 %v2764, 2147483648
    %v2769 = vmul.f32 %v2765, 1.442695
    %v2770 = vpow.pop %v2769
    %v2771 = vmul.f32 %v2766, 1.442695
    %v2772 = vpow.pop %v2771
    %v2773 = vmul.f32 %v2767, 1.442695
    %v2774 = vpow.pop %v2773
    %v2775 = vmul.f32 %v2768, 1.442695
    %v2776 = vpow.pop %v2775
    %v2777 = vadd.f32 %v2770, 1.0
    %v2778 = vadd.f32 %v2772, 1.0
    %v2779 = vadd.f32 %v2774, 1.0
    %v2780 = vadd.f32 %v2776, 1.0
    %v2781 = vrcp.pop %v2777
    %v2782 = vmul.f32 1.0, %v2781
    %v2783 = vrcp.pop %v2778
    %v2784 = vmul.f32 1.0, %v2783
    %v2785 = vrcp.pop %v2779
    %v2786 = vmul.f32 1.0, %v2785
    %v2787 = vrcp.pop %v2780
    %v2788 = vmul.f32 1.0, %v2787
    %v2789 = vadd.f32 %v2715, %v1700
    %v2790 = vadd.f32 %v2720, %v1705
    %v2791 = vadd.f32 %v2725, %v1710
    %v2792 = vadd.f32 %v2730, %v1715
    %v2793 = vmul.f32 %v2754, %v2789
    %v2794 = vmul.f32 %v2756, %v2790
    %v2795 = vmul.f32 %v2758, %v2791
    %v2796 = vmul.f32 %v2760, %v2792
    %v2797 = vadd.f32 %v2556, %v2793
    %v2798 = vadd.f32 %v2557, %v2794
    %v2799 = vadd.f32 %v2558, %v2795
    %v2800 = vadd.f32 %v2559, %v2796
    %v2801 = vtanh.pop %v2797
    %v2802 = vtanh.pop %v2798
    %v2803 = vtanh.pop %v2799
    %v2804 = vtanh.pop %v2800
    %v2805 = vsub.f32 1.0, %v2782
    %v2806 = vsub.f32 1.0, %v2784
    %v2807 = vsub.f32 1.0, %v2786
    %v2808 = vsub.f32 1.0, %v2788
    %v2809 = vmul.f32 %v2805, %v2801
    %v2810 = vmul.f32 %v2806, %v2802
    %v2811 = vmul.f32 %v2807, %v2803
    %v2812 = vmul.f32 %v2808, %v2804
    %v2813 = vmul.f32 %v2782, %v2540
    %v2814 = vmul.f32 %v2784, %v2541
    %v2815 = vmul.f32 %v2786, %v2542
    %v2816 = vmul.f32 %v2788, %v2543
    %v2817 = vadd.f32 %v2809, %v2813
    %v2818 = vadd.f32 %v2810, %v2814
    %v2819 = vadd.f32 %v2811, %v2815
    %v2820 = vadd.f32 %v2812, %v2816
    %2821 = vst [vmem:[#allocation3 + $0x60] sm:$0xff] %v2817
    %2822 = vst [vmem:[#allocation3 + $0x68] sm:$0xff] %v2818
    %2823 = vst [vmem:[#allocation3 + $0x70] sm:$0xff] %v2819
    %2824 = vst [vmem:[#allocation3 + $0x78] sm:$0xff] %v2820
    %v2825 = vld [vmem:[#allocation2 + $0x180] sm:$0xff]
    %v2826 = vld [vmem:[#allocation2 + $0x188] sm:$0xff]
    %v2827 = vld [vmem:[#allocation2 + $0x190] sm:$0xff]
    %v2828 = vld [vmem:[#allocation2 + $0x198] sm:$0xff]
    %v2829 = vld [vmem:[#allocation2 + $0x1a0] sm:$0xff]
    %v2830 = vld [vmem:[#allocation2 + $0x1a8] sm:$0xff]
    %v2831 = vld [vmem:[#allocation2 + $0x1b0] sm:$0xff]
    %v2832 = vld [vmem:[#allocation2 + $0x1b8] sm:$0xff]
    %v2833 = vld [vmem:[#allocation2 + $0x1c0] sm:$0xff]
    %v2834 = vld [vmem:[#allocation2 + $0x1c8] sm:$0xff]
    %v2835 = vld [vmem:[#allocation2 + $0x1d0] sm:$0xff]
    %v2836 = vld [vmem:[#allocation2 + $0x1d8] sm:$0xff]
    %v2837 = vld [vmem:[%s3] sm:$0xff]
    %v2838 = vld [vmem:[%s3 + $0x8] sm:$0xff]
    %v2839 = vld [vmem:[%s3 + $0x10] sm:$0xff]
    %v2840 = vld [vmem:[%s3 + $0x18] sm:$0xff]
    %v2841 = vld [vmem:[%s3 + $0x20] sm:$0xff]
    %v2842 = vld [vmem:[%s3 + $0x28] sm:$0xff]
    %v2843 = vld [vmem:[%s3 + $0x30] sm:$0xff]
    %v2844 = vld [vmem:[%s3 + $0x38] sm:$0xff]
    %v2845 = vld [vmem:[%s3 + $0x40] sm:$0xff]
    %v2846 = vld [vmem:[%s3 + $0x48] sm:$0xff]
    %v2847 = vld [vmem:[%s3 + $0x50] sm:$0xff]
    %v2848 = vld [vmem:[%s3 + $0x58] sm:$0xff]
    %v2850 = vsel %vm715, %v2837, 0
    %v2853 = vsel %vm715, %v2838, 0
    %v2856 = vsel %vm715, %v2839, 0
    %v2859 = vsel %vm715, %v2840, 0
    %v2862 = vsel %vm715, %v2841, 0
    %v2865 = vsel %vm715, %v2842, 0
    %v2868 = vsel %vm715, %v2843, 0
    %v2871 = vsel %vm715, %v2844, 0
    %v2874 = vsel %vm715, %v2845, 0
    %v2877 = vsel %vm715, %v2846, 0
    %v2880 = vsel %vm715, %v2847, 0
    %v2883 = vsel %vm715, %v2848, 0
    %2885 = vmatprep.subr.mxu0 0.0
    %2886 = vmatpush1.msra.mxu0 0.0
    %2887 = vmatprep.subr.mxu0 0.0
    %2888 = vmatpush1.msra.mxu0 0.0
    %2889 = vmatprep.subr.mxu0 0.0
    %2890 = vmatpush1.msra.mxu0 0.0
    %2891 = vmatprep.subr.mxu0 0.0
    %2892 = vmatpush1.msra.mxu0 0.0
    %2893 = vmatprep.subr.mxu0 0.0
    %2894 = vmatpush1.msra.mxu0 0.0
    %2895 = vmatprep.subr.mxu0 0.0
    %2896 = vmatpush1.msra.mxu0 0.0
    %2897 = vmatprep.subr.mxu0 0.0
    %2898 = vmatpush1.msra.mxu0 0.0
    %2899 = vmatprep.subr.mxu0 0.0
    %2900 = vmatpush1.msra.mxu0 0.0
    %2901 = vmatprep.subr.mxu0 0.0
    %2902 = vmatpush1.msra.mxu0 0.0
    %2903 = vmatprep.subr.mxu0 0.0
    %2904 = vmatpush1.msra.mxu0 0.0
    %2905 = vmatprep.subr.mxu0 0.0
    %2906 = vmatpush1.msra.mxu0 0.0
    %2907 = vmatprep.subr.mxu0 0.0
    %2908 = vmatpush1.msra.mxu0 0.0
    %2909 = vmatprep.subr.mxu0 0.0
    %2910 = vmatpush1.msra.mxu0 %v2820
    %2911 = vmatprep.subr.mxu0 0.0
    %2912 = vmatpush1.msra.mxu0 %v2819
    %2913 = vmatprep.subr.mxu0 0.0
    %2914 = vmatpush1.msra.mxu0 %v2818
    %2915 = vmatprep.subr.mxu0 0.0
    %2916 = vmatpush1.msra.mxu0 %v2817
    %2917 = vmatprep.subr.mxu0 0.0
    %2918 = vmatpush2.msra.mxu0 0.0
    %2919 = vmatprep.subr.mxu0 0.0
    %2920 = vmatpush2.msra.mxu0 0.0
    %2921 = vmatprep.subr.mxu0 0.0
    %2922 = vmatpush2.msra.mxu0 0.0
    %2923 = vmatprep.subr.mxu0 0.0
    %2924 = vmatpush2.msra.mxu0 0.0
    %2925 = vmatprep.subr.mxu0 0.0
    %2926 = vmatpush2.msra.mxu0 0.0
    %2927 = vmatprep.subr.mxu0 0.0
    %2928 = vmatpush2.msra.mxu0 0.0
    %2929 = vmatprep.subr.mxu0 0.0
    %2930 = vmatpush2.msra.mxu0 0.0
    %2931 = vmatprep.subr.mxu0 0.0
    %2932 = vmatpush2.msra.mxu0 0.0
    %2933 = vmatprep.subr.mxu0 0.0
    %2934 = vmatpush2.msra.mxu0 0.0
    %2935 = vmatprep.subr.mxu0 0.0
    %2936 = vmatpush2.msra.mxu0 0.0
    %2937 = vmatprep.subr.mxu0 0.0
    %2938 = vmatpush2.msra.mxu0 0.0
    %2939 = vmatprep.subr.mxu0 0.0
    %2940 = vmatpush2.msra.mxu0 0.0
    %2941 = vmatprep.subr.mxu0 0.0
    %2942 = vmatpush2.msra.mxu0 0.0
    %2943 = vmatprep.subr.mxu0 0.0
    %2944 = vmatpush2.msra.mxu0 0.0
    %2945 = vmatprep.subr.mxu0 0.0
    %2946 = vmatpush2.msra.mxu0 0.0
    %2947 = vmatprep.subr.mxu0 0.0
    %2948 = vmatpush2.msra.mxu0 0.0
    %2949 = vmatprep.mubr.f32.mxu0 0.0
    %2950 = vmatmul.mubr.f32.gmra.mxu0 %v2850
    %v2951 = vpop.f32.mrf.mxu0
    %v2952 = vadd.f32 0.0, %v2951
    %v2953 = vpop.f32.mrf.mxu0
    %2954 = vmatprep.mubr.f32.mxu0 0.0
    %2955 = vmatmul.mubr.f32.gmra.mxu0 %v2853
    %v2956 = vpop.f32.mrf.mxu0
    %v2957 = vadd.f32 0.0, %v2956
    %v2958 = vpop.f32.mrf.mxu0
    %2959 = vmatprep.mubr.f32.mxu0 0.0
    %2960 = vmatmul.mubr.f32.gmra.mxu0 %v2856
    %v2961 = vpop.f32.mrf.mxu0
    %v2962 = vadd.f32 0.0, %v2961
    %v2963 = vpop.f32.mrf.mxu0
    %2964 = vmatprep.mubr.f32.mxu0 0.0
    %2965 = vmatmul.mubr.f32.gmra.mxu0 %v2859
    %v2966 = vpop.f32.mrf.mxu0
    %v2967 = vadd.f32 0.0, %v2966
    %v2968 = vpop.f32.mrf.mxu0
    %2969 = vmatprep.mubr.f32.mxu0 0.0
    %2970 = vmatmul.mubr.f32.gmra.mxu0 %v2862
    %v2971 = vpop.f32.mrf.mxu0
    %v2972 = vadd.f32 0.0, %v2971
    %v2973 = vpop.f32.mrf.mxu0
    %2974 = vmatprep.mubr.f32.mxu0 0.0
    %2975 = vmatmul.mubr.f32.gmra.mxu0 %v2865
    %v2976 = vpop.f32.mrf.mxu0
    %v2977 = vadd.f32 0.0, %v2976
    %v2978 = vpop.f32.mrf.mxu0
    %2979 = vmatprep.mubr.f32.mxu0 0.0
    %2980 = vmatmul.mubr.f32.gmra.mxu0 %v2868
    %v2981 = vpop.f32.mrf.mxu0
    %v2982 = vadd.f32 0.0, %v2981
    %v2983 = vpop.f32.mrf.mxu0
    %2984 = vmatprep.mubr.f32.mxu0 0.0
    %2985 = vmatmul.mubr.f32.gmra.mxu0 %v2871
    %v2986 = vpop.f32.mrf.mxu0
    %v2987 = vadd.f32 0.0, %v2986
    %v2988 = vpop.f32.mrf.mxu0
    %2989 = vmatprep.mubr.f32.mxu0 0.0
    %2990 = vmatmul.mubr.f32.gmra.mxu0 %v2874
    %v2991 = vpop.f32.mrf.mxu0
    %v2992 = vadd.f32 0.0, %v2991
    %v2993 = vpop.f32.mrf.mxu0
    %2994 = vmatprep.mubr.f32.mxu0 0.0
    %2995 = vmatmul.mubr.f32.gmra.mxu0 %v2877
    %v2996 = vpop.f32.mrf.mxu0
    %v2997 = vadd.f32 0.0, %v2996
    %v2998 = vpop.f32.mrf.mxu0
    %2999 = vmatprep.mubr.f32.mxu0 0.0
    %3000 = vmatmul.mubr.f32.gmra.mxu0 %v2880
    %v3001 = vpop.f32.mrf.mxu0
    %v3002 = vadd.f32 0.0, %v3001
    %v3003 = vpop.f32.mrf.mxu0
    %3004 = vmatprep.mubr.f32.mxu0 0.0
    %3005 = vmatmul.mubr.f32.gmra.mxu0 %v2883
    %v3006 = vpop.f32.mrf.mxu0
    %v3007 = vadd.f32 0.0, %v3006
    %v3008 = vpop.f32.mrf.mxu0
    %3009 = vdwg.mxu0
    %v3010 = vadd.f32 %v2825, %v2952
    %v3011 = vadd.f32 %v2826, %v2957
    %v3012 = vadd.f32 %v2827, %v2962
    %v3013 = vadd.f32 %v2828, %v2967
    %v3014 = vxor.u32 %v3010, 2147483648
    %v3015 = vxor.u32 %v3011, 2147483648
    %v3016 = vxor.u32 %v3012, 2147483648
    %v3017 = vxor.u32 %v3013, 2147483648
    %v3018 = vmul.f32 %v3014, 1.442695
    %v3019 = vpow.pop %v3018
    %v3020 = vmul.f32 %v3015, 1.442695
    %v3021 = vpow.pop %v3020
    %v3022 = vmul.f32 %v3016, 1.442695
    %v3023 = vpow.pop %v3022
    %v3024 = vmul.f32 %v3017, 1.442695
    %v3025 = vpow.pop %v3024
    %v3026 = vadd.f32 %v3019, 1.0
    %v3027 = vadd.f32 %v3021, 1.0
    %v3028 = vadd.f32 %v3023, 1.0
    %v3029 = vadd.f32 %v3025, 1.0
    %v3030 = vrcp.pop %v3026
    %v3031 = vmul.f32 1.0, %v3030
    %v3032 = vrcp.pop %v3027
    %v3033 = vmul.f32 1.0, %v3032
    %v3034 = vrcp.pop %v3028
    %v3035 = vmul.f32 1.0, %v3034
    %v3036 = vrcp.pop %v3029
    %v3037 = vmul.f32 1.0, %v3036
    %v3038 = vadd.f32 %v2829, %v2972
    %v3039 = vadd.f32 %v2830, %v2977
    %v3040 = vadd.f32 %v2831, %v2982
    %v3041 = vadd.f32 %v2832, %v2987
    %v3042 = vxor.u32 %v3038, 2147483648
    %v3043 = vxor.u32 %v3039, 2147483648
    %v3044 = vxor.u32 %v3040, 2147483648
    %v3045 = vxor.u32 %v3041, 2147483648
    %v3046 = vmul.f32 %v3042, 1.442695
    %v3047 = vpow.pop %v3046
    %v3048 = vmul.f32 %v3043, 1.442695
    %v3049 = vpow.pop %v3048
    %v3050 = vmul.f32 %v3044, 1.442695
    %v3051 = vpow.pop %v3050
    %v3052 = vmul.f32 %v3045, 1.442695
    %v3053 = vpow.pop %v3052
    %v3054 = vadd.f32 %v3047, 1.0
    %v3055 = vadd.f32 %v3049, 1.0
    %v3056 = vadd.f32 %v3051, 1.0
    %v3057 = vadd.f32 %v3053, 1.0
    %v3058 = vrcp.pop %v3054
    %v3059 = vmul.f32 1.0, %v3058
    %v3060 = vrcp.pop %v3055
    %v3061 = vmul.f32 1.0, %v3060
    %v3062 = vrcp.pop %v3056
    %v3063 = vmul.f32 1.0, %v3062
    %v3064 = vrcp.pop %v3057
    %v3065 = vmul.f32 1.0, %v3064
    %v3066 = vadd.f32 %v2992, %v1700
    %v3067 = vadd.f32 %v2997, %v1705
    %v3068 = vadd.f32 %v3002, %v1710
    %v3069 = vadd.f32 %v3007, %v1715
    %v3070 = vmul.f32 %v3031, %v3066
    %v3071 = vmul.f32 %v3033, %v3067
    %v3072 = vmul.f32 %v3035, %v3068
    %v3073 = vmul.f32 %v3037, %v3069
    %v3074 = vadd.f32 %v2833, %v3070
    %v3075 = vadd.f32 %v2834, %v3071
    %v3076 = vadd.f32 %v2835, %v3072
    %v3077 = vadd.f32 %v2836, %v3073
    %v3078 = vtanh.pop %v3074
    %v3079 = vtanh.pop %v3075
    %v3080 = vtanh.pop %v3076
    %v3081 = vtanh.pop %v3077
    %v3082 = vsub.f32 1.0, %v3059
    %v3083 = vsub.f32 1.0, %v3061
    %v3084 = vsub.f32 1.0, %v3063
    %v3085 = vsub.f32 1.0, %v3065
    %v3086 = vmul.f32 %v3082, %v3078
    %v3087 = vmul.f32 %v3083, %v3079
    %v3088 = vmul.f32 %v3084, %v3080
    %v3089 = vmul.f32 %v3085, %v3081
    %v3090 = vmul.f32 %v3059, %v2817
    %v3091 = vmul.f32 %v3061, %v2818
    %v3092 = vmul.f32 %v3063, %v2819
    %v3093 = vmul.f32 %v3065, %v2820
    %v3094 = vadd.f32 %v3086, %v3090
    %v3095 = vadd.f32 %v3087, %v3091
    %v3096 = vadd.f32 %v3088, %v3092
    %v3097 = vadd.f32 %v3089, %v3093
    %3098 = vst [vmem:[#allocation3 + $0x80] sm:$0xff] %v3094
    %3099 = vst [vmem:[#allocation3 + $0x88] sm:$0xff] %v3095
    %3100 = vst [vmem:[#allocation3 + $0x90] sm:$0xff] %v3096
    %3101 = vst [vmem:[#allocation3 + $0x98] sm:$0xff] %v3097
    %v3102 = vld [vmem:[#allocation2 + $0x1e0] sm:$0xff]
    %v3103 = vld [vmem:[#allocation2 + $0x1e8] sm:$0xff]
    %v3104 = vld [vmem:[#allocation2 + $0x1f0] sm:$0xff]
    %v3105 = vld [vmem:[#allocation2 + $0x1f8] sm:$0xff]
    %v3106 = vld [vmem:[#allocation2 + $0x200] sm:$0xff]
    %v3107 = vld [vmem:[#allocation2 + $0x208] sm:$0xff]
    %v3108 = vld [vmem:[#allocation2 + $0x210] sm:$0xff]
    %v3109 = vld [vmem:[#allocation2 + $0x218] sm:$0xff]
    %v3110 = vld [vmem:[#allocation2 + $0x220] sm:$0xff]
    %v3111 = vld [vmem:[#allocation2 + $0x228] sm:$0xff]
    %v3112 = vld [vmem:[#allocation2 + $0x230] sm:$0xff]
    %v3113 = vld [vmem:[#allocation2 + $0x238] sm:$0xff]
    %v3114 = vld [vmem:[%s3] sm:$0xff]
    %v3115 = vld [vmem:[%s3 + $0x8] sm:$0xff]
    %v3116 = vld [vmem:[%s3 + $0x10] sm:$0xff]
    %v3117 = vld [vmem:[%s3 + $0x18] sm:$0xff]
    %v3118 = vld [vmem:[%s3 + $0x20] sm:$0xff]
    %v3119 = vld [vmem:[%s3 + $0x28] sm:$0xff]
    %v3120 = vld [vmem:[%s3 + $0x30] sm:$0xff]
    %v3121 = vld [vmem:[%s3 + $0x38] sm:$0xff]
    %v3122 = vld [vmem:[%s3 + $0x40] sm:$0xff]
    %v3123 = vld [vmem:[%s3 + $0x48] sm:$0xff]
    %v3124 = vld [vmem:[%s3 + $0x50] sm:$0xff]
    %v3125 = vld [vmem:[%s3 + $0x58] sm:$0xff]
    %v3127 = vsel %vm715, %v3114, 0
    %v3130 = vsel %vm715, %v3115, 0
    %v3133 = vsel %vm715, %v3116, 0
    %v3136 = vsel %vm715, %v3117, 0
    %v3139 = vsel %vm715, %v3118, 0
    %v3142 = vsel %vm715, %v3119, 0
    %v3145 = vsel %vm715, %v3120, 0
    %v3148 = vsel %vm715, %v3121, 0
    %v3151 = vsel %vm715, %v3122, 0
    %v3154 = vsel %vm715, %v3123, 0
    %v3157 = vsel %vm715, %v3124, 0
    %v3160 = vsel %vm715, %v3125, 0
    %3162 = vmatprep.subr.mxu0 0.0
    %3163 = vmatpush1.msra.mxu0 0.0
    %3164 = vmatprep.subr.mxu0 0.0
    %3165 = vmatpush1.msra.mxu0 0.0
    %3166 = vmatprep.subr.mxu0 0.0
    %3167 = vmatpush1.msra.mxu0 0.0
    %3168 = vmatprep.subr.mxu0 0.0
    %3169 = vmatpush1.msra.mxu0 0.0
    %3170 = vmatprep.subr.mxu0 0.0
    %3171 = vmatpush1.msra.mxu0 0.0
    %3172 = vmatprep.subr.mxu0 0.0
    %3173 = vmatpush1.msra.mxu0 0.0
    %3174 = vmatprep.subr.mxu0 0.0
    %3175 = vmatpush1.msra.mxu0 0.0
    %3176 = vmatprep.subr.mxu0 0.0
    %3177 = vmatpush1.msra.mxu0 0.0
    %3178 = vmatprep.subr.mxu0 0.0
    %3179 = vmatpush1.msra.mxu0 0.0
    %3180 = vmatprep.subr.mxu0 0.0
    %3181 = vmatpush1.msra.mxu0 0.0
    %3182 = vmatprep.subr.mxu0 0.0
    %3183 = vmatpush1.msra.mxu0 0.0
    %3184 = vmatprep.subr.mxu0 0.0
    %3185 = vmatpush1.msra.mxu0 0.0
    %3186 = vmatprep.subr.mxu0 0.0
    %3187 = vmatpush1.msra.mxu0 %v3097
    %3188 = vmatprep.subr.mxu0 0.0
    %3189 = vmatpush1.msra.mxu0 %v3096
    %3190 = vmatprep.subr.mxu0 0.0
    %3191 = vmatpush1.msra.mxu0 %v3095
    %3192 = vmatprep.subr.mxu0 0.0
    %3193 = vmatpush1.msra.mxu0 %v3094
    %3194 = vmatprep.subr.mxu0 0.0
    %3195 = vmatpush2.msra.mxu0 0.0
    %3196 = vmatprep.subr.mxu0 0.0
    %3197 = vmatpush2.msra.mxu0 0.0
    %3198 = vmatprep.subr.mxu0 0.0
    %3199 = vmatpush2.msra.mxu0 0.0
    %3200 = vmatprep.subr.mxu0 0.0
    %3201 = vmatpush2.msra.mxu0 0.0
    %3202 = vmatprep.subr.mxu0 0.0
    %3203 = vmatpush2.msra.mxu0 0.0
    %3204 = vmatprep.subr.mxu0 0.0
    %3205 = vmatpush2.msra.mxu0 0.0
    %3206 = vmatprep.subr.mxu0 0.0
    %3207 = vmatpush2.msra.mxu0 0.0
    %3208 = vmatprep.subr.mxu0 0.0
    %3209 = vmatpush2.msra.mxu0 0.0
    %3210 = vmatprep.subr.mxu0 0.0
    %3211 = vmatpush2.msra.mxu0 0.0
    %3212 = vmatprep.subr.mxu0 0.0
    %3213 = vmatpush2.msra.mxu0 0.0
    %3214 = vmatprep.subr.mxu0 0.0
    %3215 = vmatpush2.msra.mxu0 0.0
    %3216 = vmatprep.subr.mxu0 0.0
    %3217 = vmatpush2.msra.mxu0 0.0
    %3218 = vmatprep.subr.mxu0 0.0
    %3219 = vmatpush2.msra.mxu0 0.0
    %3220 = vmatprep.subr.mxu0 0.0
    %3221 = vmatpush2.msra.mxu0 0.0
    %3222 = vmatprep.subr.mxu0 0.0
    %3223 = vmatpush2.msra.mxu0 0.0
    %3224 = vmatprep.subr.mxu0 0.0
    %3225 = vmatpush2.msra.mxu0 0.0
    %3226 = vmatprep.mubr.f32.mxu0 0.0
    %3227 = vmatmul.mubr.f32.gmra.mxu0 %v3127
    %v3228 = vpop.f32.mrf.mxu0
    %v3229 = vadd.f32 0.0, %v3228
    %v3230 = vpop.f32.mrf.mxu0
    %3231 = vmatprep.mubr.f32.mxu0 0.0
    %3232 = vmatmul.mubr.f32.gmra.mxu0 %v3130
    %v3233 = vpop.f32.mrf.mxu0
    %v3234 = vadd.f32 0.0, %v3233
    %v3235 = vpop.f32.mrf.mxu0
    %3236 = vmatprep.mubr.f32.mxu0 0.0
    %3237 = vmatmul.mubr.f32.gmra.mxu0 %v3133
    %v3238 = vpop.f32.mrf.mxu0
    %v3239 = vadd.f32 0.0, %v3238
    %v3240 = vpop.f32.mrf.mxu0
    %3241 = vmatprep.mubr.f32.mxu0 0.0
    %3242 = vmatmul.mubr.f32.gmra.mxu0 %v3136
    %v3243 = vpop.f32.mrf.mxu0
    %v3244 = vadd.f32 0.0, %v3243
    %v3245 = vpop.f32.mrf.mxu0
    %3246 = vmatprep.mubr.f32.mxu0 0.0
    %3247 = vmatmul.mubr.f32.gmra.mxu0 %v3139
    %v3248 = vpop.f32.mrf.mxu0
    %v3249 = vadd.f32 0.0, %v3248
    %v3250 = vpop.f32.mrf.mxu0
    %3251 = vmatprep.mubr.f32.mxu0 0.0
    %3252 = vmatmul.mubr.f32.gmra.mxu0 %v3142
    %v3253 = vpop.f32.mrf.mxu0
    %v3254 = vadd.f32 0.0, %v3253
    %v3255 = vpop.f32.mrf.mxu0
    %3256 = vmatprep.mubr.f32.mxu0 0.0
    %3257 = vmatmul.mubr.f32.gmra.mxu0 %v3145
    %v3258 = vpop.f32.mrf.mxu0
    %v3259 = vadd.f32 0.0, %v3258
    %v3260 = vpop.f32.mrf.mxu0
    %3261 = vmatprep.mubr.f32.mxu0 0.0
    %3262 = vmatmul.mubr.f32.gmra.mxu0 %v3148
    %v3263 = vpop.f32.mrf.mxu0
    %v3264 = vadd.f32 0.0, %v3263
    %v3265 = vpop.f32.mrf.mxu0
    %3266 = vmatprep.mubr.f32.mxu0 0.0
    %3267 = vmatmul.mubr.f32.gmra.mxu0 %v3151
    %v3268 = vpop.f32.mrf.mxu0
    %v3269 = vadd.f32 0.0, %v3268
    %v3270 = vpop.f32.mrf.mxu0
    %3271 = vmatprep.mubr.f32.mxu0 0.0
    %3272 = vmatmul.mubr.f32.gmra.mxu0 %v3154
    %v3273 = vpop.f32.mrf.mxu0
    %v3274 = vadd.f32 0.0, %v3273
    %v3275 = vpop.f32.mrf.mxu0
    %3276 = vmatprep.mubr.f32.mxu0 0.0
    %3277 = vmatmul.mubr.f32.gmra.mxu0 %v3157
    %v3278 = vpop.f32.mrf.mxu0
    %v3279 = vadd.f32 0.0, %v3278
    %v3280 = vpop.f32.mrf.mxu0
    %3281 = vmatprep.mubr.f32.mxu0 0.0
    %3282 = vmatmul.mubr.f32.gmra.mxu0 %v3160
    %v3283 = vpop.f32.mrf.mxu0
    %v3284 = vadd.f32 0.0, %v3283
    %v3285 = vpop.f32.mrf.mxu0
    %3286 = vdwg.mxu0
    %v3287 = vadd.f32 %v3102, %v3229
    %v3288 = vadd.f32 %v3103, %v3234
    %v3289 = vadd.f32 %v3104, %v3239
    %v3290 = vadd.f32 %v3105, %v3244
    %v3291 = vxor.u32 %v3287, 2147483648
    %v3292 = vxor.u32 %v3288, 2147483648
    %v3293 = vxor.u32 %v3289, 2147483648
    %v3294 = vxor.u32 %v3290, 2147483648
    %v3295 = vmul.f32 %v3291, 1.442695
    %v3296 = vpow.pop %v3295
    %v3297 = vmul.f32 %v3292, 1.442695
    %v3298 = vpow.pop %v3297
    %v3299 = vmul.f32 %v3293, 1.442695
    %v3300 = vpow.pop %v3299
    %v3301 = vmul.f32 %v3294, 1.442695
    %v3302 = vpow.pop %v3301
    %v3303 = vadd.f32 %v3296, 1.0
    %v3304 = vadd.f32 %v3298, 1.0
    %v3305 = vadd.f32 %v3300, 1.0
    %v3306 = vadd.f32 %v3302, 1.0
    %v3307 = vrcp.pop %v3303
    %v3308 = vmul.f32 1.0, %v3307
    %v3309 = vrcp.pop %v3304
    %v3310 = vmul.f32 1.0, %v3309
    %v3311 = vrcp.pop %v3305
    %v3312 = vmul.f32 1.0, %v3311
    %v3313 = vrcp.pop %v3306
    %v3314 = vmul.f32 1.0, %v3313
    %v3315 = vadd.f32 %v3106, %v3249
    %v3316 = vadd.f32 %v3107, %v3254
    %v3317 = vadd.f32 %v3108, %v3259
    %v3318 = vadd.f32 %v3109, %v3264
    %v3319 = vxor.u32 %v3315, 2147483648
    %v3320 = vxor.u32 %v3316, 2147483648
    %v3321 = vxor.u32 %v3317, 2147483648
    %v3322 = vxor.u32 %v3318, 2147483648
    %v3323 = vmul.f32 %v3319, 1.442695
    %v3324 = vpow.pop %v3323
    %v3325 = vmul.f32 %v3320, 1.442695
    %v3326 = vpow.pop %v3325
    %v3327 = vmul.f32 %v3321, 1.442695
    %v3328 = vpow.pop %v3327
    %v3329 = vmul.f32 %v3322, 1.442695
    %v3330 = vpow.pop %v3329
    %v3331 = vadd.f32 %v3324, 1.0
    %v3332 = vadd.f32 %v3326, 1.0
    %v3333 = vadd.f32 %v3328, 1.0
    %v3334 = vadd.f32 %v3330, 1.0
    %v3335 = vrcp.pop %v3331
    %v3336 = vmul.f32 1.0, %v3335
    %v3337 = vrcp.pop %v3332
    %v3338 = vmul.f32 1.0, %v3337
    %v3339 = vrcp.pop %v3333
    %v3340 = vmul.f32 1.0, %v3339
    %v3341 = vrcp.pop %v3334
    %v3342 = vmul.f32 1.0, %v3341
    %v3343 = vadd.f32 %v3269, %v1700
    %v3344 = vadd.f32 %v3274, %v1705
    %v3345 = vadd.f32 %v3279, %v1710
    %v3346 = vadd.f32 %v3284, %v1715
    %v3347 = vmul.f32 %v3308, %v3343
    %v3348 = vmul.f32 %v3310, %v3344
    %v3349 = vmul.f32 %v3312, %v3345
    %v3350 = vmul.f32 %v3314, %v3346
    %v3351 = vadd.f32 %v3110, %v3347
    %v3352 = vadd.f32 %v3111, %v3348
    %v3353 = vadd.f32 %v3112, %v3349
    %v3354 = vadd.f32 %v3113, %v3350
    %v3355 = vtanh.pop %v3351
    %v3356 = vtanh.pop %v3352
    %v3357 = vtanh.pop %v3353
    %v3358 = vtanh.pop %v3354
    %v3359 = vsub.f32 1.0, %v3336
    %v3360 = vsub.f32 1.0, %v3338
    %v3361 = vsub.f32 1.0, %v3340
    %v3362 = vsub.f32 1.0, %v3342
    %v3363 = vmul.f32 %v3359, %v3355
    %v3364 = vmul.f32 %v3360, %v3356
    %v3365 = vmul.f32 %v3361, %v3357
    %v3366 = vmul.f32 %v3362, %v3358
    %v3367 = vmul.f32 %v3336, %v3094
    %v3368 = vmul.f32 %v3338, %v3095
    %v3369 = vmul.f32 %v3340, %v3096
    %v3370 = vmul.f32 %v3342, %v3097
    %v3371 = vadd.f32 %v3363, %v3367
    %v3372 = vadd.f32 %v3364, %v3368
    %v3373 = vadd.f32 %v3365, %v3369
    %v3374 = vadd.f32 %v3366, %v3370
    %3375 = vst [vmem:[#allocation3 + $0xa0] sm:$0xff] %v3371
    %3376 = vst [vmem:[#allocation3 + $0xa8] sm:$0xff] %v3372
    %3377 = vst [vmem:[#allocation3 + $0xb0] sm:$0xff] %v3373
    %3378 = vst [vmem:[#allocation3 + $0xb8] sm:$0xff] %v3374
    %v3379 = vld [vmem:[#allocation2 + $0x240] sm:$0xff]
    %v3380 = vld [vmem:[#allocation2 + $0x248] sm:$0xff]
    %v3381 = vld [vmem:[#allocation2 + $0x250] sm:$0xff]
    %v3382 = vld [vmem:[#allocation2 + $0x258] sm:$0xff]
    %v3383 = vld [vmem:[#allocation2 + $0x260] sm:$0xff]
    %v3384 = vld [vmem:[#allocation2 + $0x268] sm:$0xff]
    %v3385 = vld [vmem:[#allocation2 + $0x270] sm:$0xff]
    %v3386 = vld [vmem:[#allocation2 + $0x278] sm:$0xff]
    %v3387 = vld [vmem:[#allocation2 + $0x280] sm:$0xff]
    %v3388 = vld [vmem:[#allocation2 + $0x288] sm:$0xff]
    %v3389 = vld [vmem:[#allocation2 + $0x290] sm:$0xff]
    %v3390 = vld [vmem:[#allocation2 + $0x298] sm:$0xff]
    %v3391 = vld [vmem:[%s3] sm:$0xff]
    %v3392 = vld [vmem:[%s3 + $0x8] sm:$0xff]
    %v3393 = vld [vmem:[%s3 + $0x10] sm:$0xff]
    %v3394 = vld [vmem:[%s3 + $0x18] sm:$0xff]
    %v3395 = vld [vmem:[%s3 + $0x20] sm:$0xff]
    %v3396 = vld [vmem:[%s3 + $0x28] sm:$0xff]
    %v3397 = vld [vmem:[%s3 + $0x30] sm:$0xff]
    %v3398 = vld [vmem:[%s3 + $0x38] sm:$0xff]
    %v3399 = vld [vmem:[%s3 + $0x40] sm:$0xff]
    %v3400 = vld [vmem:[%s3 + $0x48] sm:$0xff]
    %v3401 = vld [vmem:[%s3 + $0x50] sm:$0xff]
    %v3402 = vld [vmem:[%s3 + $0x58] sm:$0xff]
    %v3404 = vsel %vm715, %v3391, 0
    %v3407 = vsel %vm715, %v3392, 0
    %v3410 = vsel %vm715, %v3393, 0
    %v3413 = vsel %vm715, %v3394, 0
    %v3416 = vsel %vm715, %v3395, 0
    %v3419 = vsel %vm715, %v3396, 0
    %v3422 = vsel %vm715, %v3397, 0
    %v3425 = vsel %vm715, %v3398, 0
    %v3428 = vsel %vm715, %v3399, 0
    %v3431 = vsel %vm715, %v3400, 0
    %v3434 = vsel %vm715, %v3401, 0
    %v3437 = vsel %vm715, %v3402, 0
    %3439 = vmatprep.subr.mxu0 0.0
    %3440 = vmatpush1.msra.mxu0 0.0
    %3441 = vmatprep.subr.mxu0 0.0
    %3442 = vmatpush1.msra.mxu0 0.0
    %3443 = vmatprep.subr.mxu0 0.0
    %3444 = vmatpush1.msra.mxu0 0.0
    %3445 = vmatprep.subr.mxu0 0.0
    %3446 = vmatpush1.msra.mxu0 0.0
    %3447 = vmatprep.subr.mxu0 0.0
    %3448 = vmatpush1.msra.mxu0 0.0
    %3449 = vmatprep.subr.mxu0 0.0
    %3450 = vmatpush1.msra.mxu0 0.0
    %3451 = vmatprep.subr.mxu0 0.0
    %3452 = vmatpush1.msra.mxu0 0.0
    %3453 = vmatprep.subr.mxu0 0.0
    %3454 = vmatpush1.msra.mxu0 0.0
    %3455 = vmatprep.subr.mxu0 0.0
    %3456 = vmatpush1.msra.mxu0 0.0
    %3457 = vmatprep.subr.mxu0 0.0
    %3458 = vmatpush1.msra.mxu0 0.0
    %3459 = vmatprep.subr.mxu0 0.0
    %3460 = vmatpush1.msra.mxu0 0.0
    %3461 = vmatprep.subr.mxu0 0.0
    %3462 = vmatpush1.msra.mxu0 0.0
    %3463 = vmatprep.subr.mxu0 0.0
    %3464 = vmatpush1.msra.mxu0 %v3374
    %3465 = vmatprep.subr.mxu0 0.0
    %3466 = vmatpush1.msra.mxu0 %v3373
    %3467 = vmatprep.subr.mxu0 0.0
    %3468 = vmatpush1.msra.mxu0 %v3372
    %3469 = vmatprep.subr.mxu0 0.0
    %3470 = vmatpush1.msra.mxu0 %v3371
    %3471 = vmatprep.subr.mxu0 0.0
    %3472 = vmatpush2.msra.mxu0 0.0
    %3473 = vmatprep.subr.mxu0 0.0
    %3474 = vmatpush2.msra.mxu0 0.0
    %3475 = vmatprep.subr.mxu0 0.0
    %3476 = vmatpush2.msra.mxu0 0.0
    %3477 = vmatprep.subr.mxu0 0.0
    %3478 = vmatpush2.msra.mxu0 0.0
    %3479 = vmatprep.subr.mxu0 0.0
    %3480 = vmatpush2.msra.mxu0 0.0
    %3481 = vmatprep.subr.mxu0 0.0
    %3482 = vmatpush2.msra.mxu0 0.0
    %3483 = vmatprep.subr.mxu0 0.0
    %3484 = vmatpush2.msra.mxu0 0.0
    %3485 = vmatprep.subr.mxu0 0.0
    %3486 = vmatpush2.msra.mxu0 0.0
    %3487 = vmatprep.subr.mxu0 0.0
    %3488 = vmatpush2.msra.mxu0 0.0
    %3489 = vmatprep.subr.mxu0 0.0
    %3490 = vmatpush2.msra.mxu0 0.0
    %3491 = vmatprep.subr.mxu0 0.0
    %3492 = vmatpush2.msra.mxu0 0.0
    %3493 = vmatprep.subr.mxu0 0.0
    %3494 = vmatpush2.msra.mxu0 0.0
    %3495 = vmatprep.subr.mxu0 0.0
    %3496 = vmatpush2.msra.mxu0 0.0
    %3497 = vmatprep.subr.mxu0 0.0
    %3498 = vmatpush2.msra.mxu0 0.0
    %3499 = vmatprep.subr.mxu0 0.0
    %3500 = vmatpush2.msra.mxu0 0.0
    %3501 = vmatprep.subr.mxu0 0.0
    %3502 = vmatpush2.msra.mxu0 0.0
    %3503 = vmatprep.mubr.f32.mxu0 0.0
    %3504 = vmatmul.mubr.f32.gmra.mxu0 %v3404
    %v3505 = vpop.f32.mrf.mxu0
    %v3506 = vadd.f32 0.0, %v3505
    %v3507 = vpop.f32.mrf.mxu0
    %3508 = vmatprep.mubr.f32.mxu0 0.0
    %3509 = vmatmul.mubr.f32.gmra.mxu0 %v3407
    %v3510 = vpop.f32.mrf.mxu0
    %v3511 = vadd.f32 0.0, %v3510
    %v3512 = vpop.f32.mrf.mxu0
    %3513 = vmatprep.mubr.f32.mxu0 0.0
    %3514 = vmatmul.mubr.f32.gmra.mxu0 %v3410
    %v3515 = vpop.f32.mrf.mxu0
    %v3516 = vadd.f32 0.0, %v3515
    %v3517 = vpop.f32.mrf.mxu0
    %3518 = vmatprep.mubr.f32.mxu0 0.0
    %3519 = vmatmul.mubr.f32.gmra.mxu0 %v3413
    %v3520 = vpop.f32.mrf.mxu0
    %v3521 = vadd.f32 0.0, %v3520
    %v3522 = vpop.f32.mrf.mxu0
    %3523 = vmatprep.mubr.f32.mxu0 0.0
    %3524 = vmatmul.mubr.f32.gmra.mxu0 %v3416
    %v3525 = vpop.f32.mrf.mxu0
    %v3526 = vadd.f32 0.0, %v3525
    %v3527 = vpop.f32.mrf.mxu0
    %3528 = vmatprep.mubr.f32.mxu0 0.0
    %3529 = vmatmul.mubr.f32.gmra.mxu0 %v3419
    %v3530 = vpop.f32.mrf.mxu0
    %v3531 = vadd.f32 0.0, %v3530
    %v3532 = vpop.f32.mrf.mxu0
    %3533 = vmatprep.mubr.f32.mxu0 0.0
    %3534 = vmatmul.mubr.f32.gmra.mxu0 %v3422
    %v3535 = vpop.f32.mrf.mxu0
    %v3536 = vadd.f32 0.0, %v3535
    %v3537 = vpop.f32.mrf.mxu0
    %3538 = vmatprep.mubr.f32.mxu0 0.0
    %3539 = vmatmul.mubr.f32.gmra.mxu0 %v3425
    %v3540 = vpop.f32.mrf.mxu0
    %v3541 = vadd.f32 0.0, %v3540
    %v3542 = vpop.f32.mrf.mxu0
    %3543 = vmatprep.mubr.f32.mxu0 0.0
    %3544 = vmatmul.mubr.f32.gmra.mxu0 %v3428
    %v3545 = vpop.f32.mrf.mxu0
    %v3546 = vadd.f32 0.0, %v3545
    %v3547 = vpop.f32.mrf.mxu0
    %3548 = vmatprep.mubr.f32.mxu0 0.0
    %3549 = vmatmul.mubr.f32.gmra.mxu0 %v3431
    %v3550 = vpop.f32.mrf.mxu0
    %v3551 = vadd.f32 0.0, %v3550
    %v3552 = vpop.f32.mrf.mxu0
    %3553 = vmatprep.mubr.f32.mxu0 0.0
    %3554 = vmatmul.mubr.f32.gmra.mxu0 %v3434
    %v3555 = vpop.f32.mrf.mxu0
    %v3556 = vadd.f32 0.0, %v3555
    %v3557 = vpop.f32.mrf.mxu0
    %3558 = vmatprep.mubr.f32.mxu0 0.0
    %3559 = vmatmul.mubr.f32.gmra.mxu0 %v3437
    %v3560 = vpop.f32.mrf.mxu0
    %v3561 = vadd.f32 0.0, %v3560
    %v3562 = vpop.f32.mrf.mxu0
    %3563 = vdwg.mxu0
    %v3564 = vadd.f32 %v3379, %v3506
    %v3565 = vadd.f32 %v3380, %v3511
    %v3566 = vadd.f32 %v3381, %v3516
    %v3567 = vadd.f32 %v3382, %v3521
    %v3568 = vxor.u32 %v3564, 2147483648
    %v3569 = vxor.u32 %v3565, 2147483648
    %v3570 = vxor.u32 %v3566, 2147483648
    %v3571 = vxor.u32 %v3567, 2147483648
    %v3572 = vmul.f32 %v3568, 1.442695
    %v3573 = vpow.pop %v3572
    %v3574 = vmul.f32 %v3569, 1.442695
    %v3575 = vpow.pop %v3574
    %v3576 = vmul.f32 %v3570, 1.442695
    %v3577 = vpow.pop %v3576
    %v3578 = vmul.f32 %v3571, 1.442695
    %v3579 = vpow.pop %v3578
    %v3580 = vadd.f32 %v3573, 1.0
    %v3581 = vadd.f32 %v3575, 1.0
    %v3582 = vadd.f32 %v3577, 1.0
    %v3583 = vadd.f32 %v3579, 1.0
    %v3584 = vrcp.pop %v3580
    %v3585 = vmul.f32 1.0, %v3584
    %v3586 = vrcp.pop %v3581
    %v3587 = vmul.f32 1.0, %v3586
    %v3588 = vrcp.pop %v3582
    %v3589 = vmul.f32 1.0, %v3588
    %v3590 = vrcp.pop %v3583
    %v3591 = vmul.f32 1.0, %v3590
    %v3592 = vadd.f32 %v3383, %v3526
    %v3593 = vadd.f32 %v3384, %v3531
    %v3594 = vadd.f32 %v3385, %v3536
    %v3595 = vadd.f32 %v3386, %v3541
    %v3596 = vxor.u32 %v3592, 2147483648
    %v3597 = vxor.u32 %v3593, 2147483648
    %v3598 = vxor.u32 %v3594, 2147483648
    %v3599 = vxor.u32 %v3595, 2147483648
    %v3600 = vmul.f32 %v3596, 1.442695
    %v3601 = vpow.pop %v3600
    %v3602 = vmul.f32 %v3597, 1.442695
    %v3603 = vpow.pop %v3602
    %v3604 = vmul.f32 %v3598, 1.442695
    %v3605 = vpow.pop %v3604
    %v3606 = vmul.f32 %v3599, 1.442695
    %v3607 = vpow.pop %v3606
    %v3608 = vadd.f32 %v3601, 1.0
    %v3609 = vadd.f32 %v3603, 1.0
    %v3610 = vadd.f32 %v3605, 1.0
    %v3611 = vadd.f32 %v3607, 1.0
    %v3612 = vrcp.pop %v3608
    %v3613 = vmul.f32 1.0, %v3612
    %v3614 = vrcp.pop %v3609
    %v3615 = vmul.f32 1.0, %v3614
    %v3616 = vrcp.pop %v3610
    %v3617 = vmul.f32 1.0, %v3616
    %v3618 = vrcp.pop %v3611
    %v3619 = vmul.f32 1.0, %v3618
    %v3620 = vadd.f32 %v3546, %v1700
    %v3621 = vadd.f32 %v3551, %v1705
    %v3622 = vadd.f32 %v3556, %v1710
    %v3623 = vadd.f32 %v3561, %v1715
    %v3624 = vmul.f32 %v3585, %v3620
    %v3625 = vmul.f32 %v3587, %v3621
    %v3626 = vmul.f32 %v3589, %v3622
    %v3627 = vmul.f32 %v3591, %v3623
    %v3628 = vadd.f32 %v3387, %v3624
    %v3629 = vadd.f32 %v3388, %v3625
    %v3630 = vadd.f32 %v3389, %v3626
    %v3631 = vadd.f32 %v3390, %v3627
    %v3632 = vtanh.pop %v3628
    %v3633 = vtanh.pop %v3629
    %v3634 = vtanh.pop %v3630
    %v3635 = vtanh.pop %v3631
    %v3636 = vsub.f32 1.0, %v3613
    %v3637 = vsub.f32 1.0, %v3615
    %v3638 = vsub.f32 1.0, %v3617
    %v3639 = vsub.f32 1.0, %v3619
    %v3640 = vmul.f32 %v3636, %v3632
    %v3641 = vmul.f32 %v3637, %v3633
    %v3642 = vmul.f32 %v3638, %v3634
    %v3643 = vmul.f32 %v3639, %v3635
    %v3644 = vmul.f32 %v3613, %v3371
    %v3645 = vmul.f32 %v3615, %v3372
    %v3646 = vmul.f32 %v3617, %v3373
    %v3647 = vmul.f32 %v3619, %v3374
    %v3648 = vadd.f32 %v3640, %v3644
    %v3649 = vadd.f32 %v3641, %v3645
    %v3650 = vadd.f32 %v3642, %v3646
    %v3651 = vadd.f32 %v3643, %v3647
    %3652 = vst [vmem:[#allocation3 + $0xc0] sm:$0xff] %v3648
    %3653 = vst [vmem:[#allocation3 + $0xc8] sm:$0xff] %v3649
    %3654 = vst [vmem:[#allocation3 + $0xd0] sm:$0xff] %v3650
    %3655 = vst [vmem:[#allocation3 + $0xd8] sm:$0xff] %v3651
    %v3656 = vld [vmem:[#allocation2 + $0x2a0] sm:$0xff]
    %v3657 = vld [vmem:[#allocation2 + $0x2a8] sm:$0xff]
    %v3658 = vld [vmem:[#allocation2 + $0x2b0] sm:$0xff]
    %v3659 = vld [vmem:[#allocation2 + $0x2b8] sm:$0xff]
    %v3660 = vld [vmem:[#allocation2 + $0x2c0] sm:$0xff]
    %v3661 = vld [vmem:[#allocation2 + $0x2c8] sm:$0xff]
    %v3662 = vld [vmem:[#allocation2 + $0x2d0] sm:$0xff]
    %v3663 = vld [vmem:[#allocation2 + $0x2d8] sm:$0xff]
    %v3664 = vld [vmem:[#allocation2 + $0x2e0] sm:$0xff]
    %v3665 = vld [vmem:[#allocation2 + $0x2e8] sm:$0xff]
    %v3666 = vld [vmem:[#allocation2 + $0x2f0] sm:$0xff]
    %v3667 = vld [vmem:[#allocation2 + $0x2f8] sm:$0xff]
    %v3668 = vld [vmem:[%s3] sm:$0xff]
    %v3669 = vld [vmem:[%s3 + $0x8] sm:$0xff]
    %v3670 = vld [vmem:[%s3 + $0x10] sm:$0xff]
    %v3671 = vld [vmem:[%s3 + $0x18] sm:$0xff]
    %v3672 = vld [vmem:[%s3 + $0x20] sm:$0xff]
    %v3673 = vld [vmem:[%s3 + $0x28] sm:$0xff]
    %v3674 = vld [vmem:[%s3 + $0x30] sm:$0xff]
    %v3675 = vld [vmem:[%s3 + $0x38] sm:$0xff]
    %v3676 = vld [vmem:[%s3 + $0x40] sm:$0xff]
    %v3677 = vld [vmem:[%s3 + $0x48] sm:$0xff]
    %v3678 = vld [vmem:[%s3 + $0x50] sm:$0xff]
    %v3679 = vld [vmem:[%s3 + $0x58] sm:$0xff]
    %v3681 = vsel %vm715, %v3668, 0
    %v3684 = vsel %vm715, %v3669, 0
    %v3687 = vsel %vm715, %v3670, 0
    %v3690 = vsel %vm715, %v3671, 0
    %v3693 = vsel %vm715, %v3672, 0
    %v3696 = vsel %vm715, %v3673, 0
    %v3699 = vsel %vm715, %v3674, 0
    %v3702 = vsel %vm715, %v3675, 0
    %v3705 = vsel %vm715, %v3676, 0
    %v3708 = vsel %vm715, %v3677, 0
    %v3711 = vsel %vm715, %v3678, 0
    %v3714 = vsel %vm715, %v3679, 0
    %3716 = vmatprep.subr.mxu0 0.0
    %3717 = vmatpush1.msra.mxu0 0.0
    %3718 = vmatprep.subr.mxu0 0.0
    %3719 = vmatpush1.msra.mxu0 0.0
    %3720 = vmatprep.subr.mxu0 0.0
    %3721 = vmatpush1.msra.mxu0 0.0
    %3722 = vmatprep.subr.mxu0 0.0
    %3723 = vmatpush1.msra.mxu0 0.0
    %3724 = vmatprep.subr.mxu0 0.0
    %3725 = vmatpush1.msra.mxu0 0.0
    %3726 = vmatprep.subr.mxu0 0.0
    %3727 = vmatpush1.msra.mxu0 0.0
    %3728 = vmatprep.subr.mxu0 0.0
    %3729 = vmatpush1.msra.mxu0 0.0
    %3730 = vmatprep.subr.mxu0 0.0
    %3731 = vmatpush1.msra.mxu0 0.0
    %3732 = vmatprep.subr.mxu0 0.0
    %3733 = vmatpush1.msra.mxu0 0.0
    %3734 = vmatprep.subr.mxu0 0.0
    %3735 = vmatpush1.msra.mxu0 0.0
    %3736 = vmatprep.subr.mxu0 0.0
    %3737 = vmatpush1.msra.mxu0 0.0
    %3738 = vmatprep.subr.mxu0 0.0
    %3739 = vmatpush1.msra.mxu0 0.0
    %3740 = vmatprep.subr.mxu0 0.0
    %3741 = vmatpush1.msra.mxu0 %v3651
    %3742 = vmatprep.subr.mxu0 0.0
    %3743 = vmatpush1.msra.mxu0 %v3650
    %3744 = vmatprep.subr.mxu0 0.0
    %3745 = vmatpush1.msra.mxu0 %v3649
    %3746 = vmatprep.subr.mxu0 0.0
    %3747 = vmatpush1.msra.mxu0 %v3648
    %3748 = vmatprep.subr.mxu0 0.0
    %3749 = vmatpush2.msra.mxu0 0.0
    %3750 = vmatprep.subr.mxu0 0.0
    %3751 = vmatpush2.msra.mxu0 0.0
    %3752 = vmatprep.subr.mxu0 0.0
    %3753 = vmatpush2.msra.mxu0 0.0
    %3754 = vmatprep.subr.mxu0 0.0
    %3755 = vmatpush2.msra.mxu0 0.0
    %3756 = vmatprep.subr.mxu0 0.0
    %3757 = vmatpush2.msra.mxu0 0.0
    %3758 = vmatprep.subr.mxu0 0.0
    %3759 = vmatpush2.msra.mxu0 0.0
    %3760 = vmatprep.subr.mxu0 0.0
    %3761 = vmatpush2.msra.mxu0 0.0
    %3762 = vmatprep.subr.mxu0 0.0
    %3763 = vmatpush2.msra.mxu0 0.0
    %3764 = vmatprep.subr.mxu0 0.0
    %3765 = vmatpush2.msra.mxu0 0.0
    %3766 = vmatprep.subr.mxu0 0.0
    %3767 = vmatpush2.msra.mxu0 0.0
    %3768 = vmatprep.subr.mxu0 0.0
    %3769 = vmatpush2.msra.mxu0 0.0
    %3770 = vmatprep.subr.mxu0 0.0
    %3771 = vmatpush2.msra.mxu0 0.0
    %3772 = vmatprep.subr.mxu0 0.0
    %3773 = vmatpush2.msra.mxu0 0.0
    %3774 = vmatprep.subr.mxu0 0.0
    %3775 = vmatpush2.msra.mxu0 0.0
    %3776 = vmatprep.subr.mxu0 0.0
    %3777 = vmatpush2.msra.mxu0 0.0
    %3778 = vmatprep.subr.mxu0 0.0
    %3779 = vmatpush2.msra.mxu0 0.0
    %3780 = vmatprep.mubr.f32.mxu0 0.0
    %3781 = vmatmul.mubr.f32.gmra.mxu0 %v3681
    %v3782 = vpop.f32.mrf.mxu0
    %v3783 = vadd.f32 0.0, %v3782
    %v3784 = vpop.f32.mrf.mxu0
    %3785 = vmatprep.mubr.f32.mxu0 0.0
    %3786 = vmatmul.mubr.f32.gmra.mxu0 %v3684
    %v3787 = vpop.f32.mrf.mxu0
    %v3788 = vadd.f32 0.0, %v3787
    %v3789 = vpop.f32.mrf.mxu0
    %3790 = vmatprep.mubr.f32.mxu0 0.0
    %3791 = vmatmul.mubr.f32.gmra.mxu0 %v3687
    %v3792 = vpop.f32.mrf.mxu0
    %v3793 = vadd.f32 0.0, %v3792
    %v3794 = vpop.f32.mrf.mxu0
    %3795 = vmatprep.mubr.f32.mxu0 0.0
    %3796 = vmatmul.mubr.f32.gmra.mxu0 %v3690
    %v3797 = vpop.f32.mrf.mxu0
    %v3798 = vadd.f32 0.0, %v3797
    %v3799 = vpop.f32.mrf.mxu0
    %3800 = vmatprep.mubr.f32.mxu0 0.0
    %3801 = vmatmul.mubr.f32.gmra.mxu0 %v3693
    %v3802 = vpop.f32.mrf.mxu0
    %v3803 = vadd.f32 0.0, %v3802
    %v3804 = vpop.f32.mrf.mxu0
    %3805 = vmatprep.mubr.f32.mxu0 0.0
    %3806 = vmatmul.mubr.f32.gmra.mxu0 %v3696
    %v3807 = vpop.f32.mrf.mxu0
    %v3808 = vadd.f32 0.0, %v3807
    %v3809 = vpop.f32.mrf.mxu0
    %3810 = vmatprep.mubr.f32.mxu0 0.0
    %3811 = vmatmul.mubr.f32.gmra.mxu0 %v3699
    %v3812 = vpop.f32.mrf.mxu0
    %v3813 = vadd.f32 0.0, %v3812
    %v3814 = vpop.f32.mrf.mxu0
    %3815 = vmatprep.mubr.f32.mxu0 0.0
    %3816 = vmatmul.mubr.f32.gmra.mxu0 %v3702
    %v3817 = vpop.f32.mrf.mxu0
    %v3818 = vadd.f32 0.0, %v3817
    %v3819 = vpop.f32.mrf.mxu0
    %3820 = vmatprep.mubr.f32.mxu0 0.0
    %3821 = vmatmul.mubr.f32.gmra.mxu0 %v3705
    %v3822 = vpop.f32.mrf.mxu0
    %v3823 = vadd.f32 0.0, %v3822
    %v3824 = vpop.f32.mrf.mxu0
    %3825 = vmatprep.mubr.f32.mxu0 0.0
    %3826 = vmatmul.mubr.f32.gmra.mxu0 %v3708
    %v3827 = vpop.f32.mrf.mxu0
    %v3828 = vadd.f32 0.0, %v3827
    %v3829 = vpop.f32.mrf.mxu0
    %3830 = vmatprep.mubr.f32.mxu0 0.0
    %3831 = vmatmul.mubr.f32.gmra.mxu0 %v3711
    %v3832 = vpop.f32.mrf.mxu0
    %v3833 = vadd.f32 0.0, %v3832
    %v3834 = vpop.f32.mrf.mxu0
    %3835 = vmatprep.mubr.f32.mxu0 0.0
    %3836 = vmatmul.mubr.f32.gmra.mxu0 %v3714
    %v3837 = vpop.f32.mrf.mxu0
    %v3838 = vadd.f32 0.0, %v3837
    %v3839 = vpop.f32.mrf.mxu0
    %3840 = vdwg.mxu0
    %v3841 = vadd.f32 %v3656, %v3783
    %v3842 = vadd.f32 %v3657, %v3788
    %v3843 = vadd.f32 %v3658, %v3793
    %v3844 = vadd.f32 %v3659, %v3798
    %v3845 = vxor.u32 %v3841, 2147483648
    %v3846 = vxor.u32 %v3842, 2147483648
    %v3847 = vxor.u32 %v3843, 2147483648
    %v3848 = vxor.u32 %v3844, 2147483648
    %v3849 = vmul.f32 %v3845, 1.442695
    %v3850 = vpow.pop %v3849
    %v3851 = vmul.f32 %v3846, 1.442695
    %v3852 = vpow.pop %v3851
    %v3853 = vmul.f32 %v3847, 1.442695
    %v3854 = vpow.pop %v3853
    %v3855 = vmul.f32 %v3848, 1.442695
    %v3856 = vpow.pop %v3855
    %v3857 = vadd.f32 %v3850, 1.0
    %v3858 = vadd.f32 %v3852, 1.0
    %v3859 = vadd.f32 %v3854, 1.0
    %v3860 = vadd.f32 %v3856, 1.0
    %v3861 = vrcp.pop %v3857
    %v3862 = vmul.f32 1.0, %v3861
    %v3863 = vrcp.pop %v3858
    %v3864 = vmul.f32 1.0, %v3863
    %v3865 = vrcp.pop %v3859
    %v3866 = vmul.f32 1.0, %v3865
    %v3867 = vrcp.pop %v3860
    %v3868 = vmul.f32 1.0, %v3867
    %v3869 = vadd.f32 %v3660, %v3803
    %v3870 = vadd.f32 %v3661, %v3808
    %v3871 = vadd.f32 %v3662, %v3813
    %v3872 = vadd.f32 %v3663, %v3818
    %v3873 = vxor.u32 %v3869, 2147483648
    %v3874 = vxor.u32 %v3870, 2147483648
    %v3875 = vxor.u32 %v3871, 2147483648
    %v3876 = vxor.u32 %v3872, 2147483648
    %v3877 = vmul.f32 %v3873, 1.442695
    %v3878 = vpow.pop %v3877
    %v3879 = vmul.f32 %v3874, 1.442695
    %v3880 = vpow.pop %v3879
    %v3881 = vmul.f32 %v3875, 1.442695
    %v3882 = vpow.pop %v3881
    %v3883 = vmul.f32 %v3876, 1.442695
    %v3884 = vpow.pop %v3883
    %v3885 = vadd.f32 %v3878, 1.0
    %v3886 = vadd.f32 %v3880, 1.0
    %v3887 = vadd.f32 %v3882, 1.0
    %v3888 = vadd.f32 %v3884, 1.0
    %v3889 = vrcp.pop %v3885
    %v3890 = vmul.f32 1.0, %v3889
    %v3891 = vrcp.pop %v3886
    %v3892 = vmul.f32 1.0, %v3891
    %v3893 = vrcp.pop %v3887
    %v3894 = vmul.f32 1.0, %v3893
    %v3895 = vrcp.pop %v3888
    %v3896 = vmul.f32 1.0, %v3895
    %v3897 = vadd.f32 %v3823, %v1700
    %v3898 = vadd.f32 %v3828, %v1705
    %v3899 = vadd.f32 %v3833, %v1710
    %v3900 = vadd.f32 %v3838, %v1715
    %v3901 = vmul.f32 %v3862, %v3897
    %v3902 = vmul.f32 %v3864, %v3898
    %v3903 = vmul.f32 %v3866, %v3899
    %v3904 = vmul.f32 %v3868, %v3900
    %v3905 = vadd.f32 %v3664, %v3901
    %v3906 = vadd.f32 %v3665, %v3902
    %v3907 = vadd.f32 %v3666, %v3903
    %v3908 = vadd.f32 %v3667, %v3904
    %v3909 = vtanh.pop %v3905
    %v3910 = vtanh.pop %v3906
    %v3911 = vtanh.pop %v3907
    %v3912 = vtanh.pop %v3908
    %v3913 = vsub.f32 1.0, %v3890
    %v3914 = vsub.f32 1.0, %v3892
    %v3915 = vsub.f32 1.0, %v3894
    %v3916 = vsub.f32 1.0, %v3896
    %v3917 = vmul.f32 %v3913, %v3909
    %v3918 = vmul.f32 %v3914, %v3910
    %v3919 = vmul.f32 %v3915, %v3911
    %v3920 = vmul.f32 %v3916, %v3912
    %v3921 = vmul.f32 %v3890, %v3648
    %v3922 = vmul.f32 %v3892, %v3649
    %v3923 = vmul.f32 %v3894, %v3650
    %v3924 = vmul.f32 %v3896, %v3651
    %v3925 = vadd.f32 %v3917, %v3921
    %v3926 = vadd.f32 %v3918, %v3922
    %v3927 = vadd.f32 %v3919, %v3923
    %v3928 = vadd.f32 %v3920, %v3924
    %3929 = vst [vmem:[#allocation3 + $0xe0] sm:$0xff] %v3925
    %3930 = vst [vmem:[#allocation3 + $0xe8] sm:$0xff] %v3926
    %3931 = vst [vmem:[#allocation3 + $0xf0] sm:$0xff] %v3927
    %3932 = vst [vmem:[#allocation3 + $0xf8] sm:$0xff] %v3928
    %v3933 = vld [vmem:[%s5] sm:$0xff]
    %v3934 = vld [vmem:[%s5 + $0x8] sm:$0xff]
    %v3935 = vld [vmem:[#allocation3] sm:$0xff]
    %v3936 = vld [vmem:[#allocation3 + $0x8] sm:$0xff]
    %v3937 = vld [vmem:[#allocation3 + $0x10] sm:$0xff]
    %v3938 = vld [vmem:[#allocation3 + $0x18] sm:$0xff]
    %v3939 = vld [vmem:[#allocation3 + $0x20] sm:$0xff]
    %v3940 = vld [vmem:[#allocation3 + $0x28] sm:$0xff]
    %v3941 = vld [vmem:[#allocation3 + $0x30] sm:$0xff]
    %v3942 = vld [vmem:[#allocation3 + $0x38] sm:$0xff]
    %v3943 = vld [vmem:[#allocation3 + $0x40] sm:$0xff]
    %v3944 = vld [vmem:[#allocation3 + $0x48] sm:$0xff]
    %v3945 = vld [vmem:[#allocation3 + $0x50] sm:$0xff]
    %v3946 = vld [vmem:[#allocation3 + $0x58] sm:$0xff]
    %v3947 = vld [vmem:[#allocation3 + $0x60] sm:$0xff]
    %v3948 = vld [vmem:[#allocation3 + $0x68] sm:$0xff]
    %v3949 = vld [vmem:[#allocation3 + $0x70] sm:$0xff]
    %v3950 = vld [vmem:[#allocation3 + $0x78] sm:$0xff]
    %v3951 = vld [vmem:[#allocation3 + $0x80] sm:$0xff]
    %v3952 = vld [vmem:[#allocation3 + $0x88] sm:$0xff]
    %v3953 = vld [vmem:[#allocation3 + $0x90] sm:$0xff]
    %v3954 = vld [vmem:[#allocation3 + $0x98] sm:$0xff]
    %v3955 = vld [vmem:[#allocation3 + $0xa0] sm:$0xff]
    %v3956 = vld [vmem:[#allocation3 + $0xa8] sm:$0xff]
    %v3957 = vld [vmem:[#allocation3 + $0xb0] sm:$0xff]
    %v3958 = vld [vmem:[#allocation3 + $0xb8] sm:$0xff]
    %v3959 = vld [vmem:[#allocation3 + $0xc0] sm:$0xff]
    %v3960 = vld [vmem:[#allocation3 + $0xc8] sm:$0xff]
    %v3961 = vld [vmem:[#allocation3 + $0xd0] sm:$0xff]
    %v3962 = vld [vmem:[#allocation3 + $0xd8] sm:$0xff]
    %v3963 = vld [vmem:[#allocation3 + $0xe0] sm:$0xff]
    %v3964 = vld [vmem:[#allocation3 + $0xe8] sm:$0xff]
    %v3965 = vld [vmem:[#allocation3 + $0xf0] sm:$0xff]
    %v3966 = vld [vmem:[#allocation3 + $0xf8] sm:$0xff]
    %v3967 = vld [vmem:[%s6] sm:$0xff]
    %3969 = vset.pattern.permute.xlu0 0
    %3970 = vperm.xlu0 %3969, %v3967
    %v3971 = vpop.permute.xlu0 %3970
    %3973 = vmatprep.subr.mxu0 0.0
    %3974 = vmatpush1.msra.mxu0 %v3950
    %3975 = vmatprep.subr.mxu0 0.0
    %3976 = vmatpush1.msra.mxu0 %v3949
    %3977 = vmatprep.subr.mxu0 0.0
    %3978 = vmatpush1.msra.mxu0 %v3948
    %3979 = vmatprep.subr.mxu0 0.0
    %3980 = vmatpush1.msra.mxu0 %v3947
    %3981 = vmatprep.subr.mxu0 0.0
    %3982 = vmatpush1.msra.mxu0 %v3946
    %3983 = vmatprep.subr.mxu0 0.0
    %3984 = vmatpush1.msra.mxu0 %v3945
    %3985 = vmatprep.subr.mxu0 0.0
    %3986 = vmatpush1.msra.mxu0 %v3944
    %3987 = vmatprep.subr.mxu0 0.0
    %3988 = vmatpush1.msra.mxu0 %v3943
    %3989 = vmatprep.subr.mxu0 0.0
    %3990 = vmatpush1.msra.mxu0 %v3942
    %3991 = vmatprep.subr.mxu0 0.0
    %3992 = vmatpush1.msra.mxu0 %v3941
    %3993 = vmatprep.subr.mxu0 0.0
    %3994 = vmatpush1.msra.mxu0 %v3940
    %3995 = vmatprep.subr.mxu0 0.0
    %3996 = vmatpush1.msra.mxu0 %v3939
    %3997 = vmatprep.subr.mxu0 0.0
    %3998 = vmatpush1.msra.mxu0 %v3938
    %3999 = vmatprep.subr.mxu0 0.0
    %4000 = vmatpush1.msra.mxu0 %v3937
    %4001 = vmatprep.subr.mxu0 0.0
    %4002 = vmatpush1.msra.mxu0 %v3936
    %4003 = vmatprep.subr.mxu0 0.0
    %4004 = vmatpush1.msra.mxu0 %v3935
    %4005 = vmatprep.subr.mxu0 0.0
    %4006 = vmatpush2.msra.mxu0 %v3966
    %4007 = vmatprep.subr.mxu0 0.0
    %4008 = vmatpush2.msra.mxu0 %v3965
    %4009 = vmatprep.subr.mxu0 0.0
    %4010 = vmatpush2.msra.mxu0 %v3964
    %4011 = vmatprep.subr.mxu0 0.0
    %4012 = vmatpush2.msra.mxu0 %v3963
    %4013 = vmatprep.subr.mxu0 0.0
    %4014 = vmatpush2.msra.mxu0 %v3962
    %4015 = vmatprep.subr.mxu0 0.0
    %4016 = vmatpush2.msra.mxu0 %v3961
    %4017 = vmatprep.subr.mxu0 0.0
    %4018 = vmatpush2.msra.mxu0 %v3960
    %4019 = vmatprep.subr.mxu0 0.0
    %4020 = vmatpush2.msra.mxu0 %v3959
    %4021 = vmatprep.subr.mxu0 0.0
    %4022 = vmatpush2.msra.mxu0 %v3958
    %4023 = vmatprep.subr.mxu0 0.0
    %4024 = vmatpush2.msra.mxu0 %v3957
    %4025 = vmatprep.subr.mxu0 0.0
    %4026 = vmatpush2.msra.mxu0 %v3956
    %4027 = vmatprep.subr.mxu0 0.0
    %4028 = vmatpush2.msra.mxu0 %v3955
    %4029 = vmatprep.subr.mxu0 0.0
    %4030 = vmatpush2.msra.mxu0 %v3954
    %4031 = vmatprep.subr.mxu0 0.0
    %4032 = vmatpush2.msra.mxu0 %v3953
    %4033 = vmatprep.subr.mxu0 0.0
    %4034 = vmatpush2.msra.mxu0 %v3952
    %4035 = vmatprep.subr.mxu0 0.0
    %4036 = vmatpush2.msra.mxu0 %v3951
    %4037 = vmatprep.mubr.f32.mxu0 %v3934
    %4038 = vmatmul.mubr.f32.gmra.mxu0 %v3933
    %v4039 = vpop.f32.mrf.mxu0
    %v4040 = vadd.f32 %v3971, %v4039
    %v4041 = vpop.f32.mrf.mxu0
    %4042 = vdwg.mxu0
    %4043 = vst [vmem:[#allocation4] sm:$0xff] %v4040
    // Predicated region
    $region30: #{tpu_custom_call.1} parent=1 // pred_check
      _
    $region31: #{tpu_custom_call.1} parent=1 // pred_check_branch
      %4045 = sbr.rel (0) target = $region33
    $region32: #{tpu_custom_call.1} parent=1 // pred_region
      %s4047 = ssub.s32 128, 128
      %4048 = vsyncadd [#allocation5], %s4047
      %s4050 = sshll.u32 [#allocation4], 4
      %s4051 = int_to_ptr.vmem [resolvable:$true] %s4050
      %4053 = dma.vmem_to_hbm [thread:$0]  %s4051, 128, %s7, [#allocation5]
    $region33: #{tpu_custom_call.1} parent=1 // pred_fallthru
      _
    // Predicated region
    $region34: #{tpu_custom_call.1} parent=1 // pred_check
      _
    $region35: #{tpu_custom_call.1} parent=1 // pred_check_branch
      %4055 = sbr.rel (0) target = $region37
    $region36: #{tpu_custom_call.1} parent=1 // pred_region
      %4056 = dma.done [#allocation5], 128
    $region37: #{tpu_custom_call.1} parent=1 // pred_fallthru
      _
    %4057 = vsyncpa [#allocation5], 1

</llo_original>
